<compile_context>
chip_gen: v5e
topology: v5e:2x2
jax: 0.10.0
libtpu: 0.0.40
codegen_flags: <defaults>
</compile_context>

<pallas_src>
import functools
import math

import jax
import jax.numpy as jnp
from jax import lax
from jax.experimental import pallas as pl
from jax.experimental.pallas import tpu as pltpu


# ------------------------- in-kernel math helpers ---------------------------

def _gelu(y):
    # TODO(synk): tanh-approximate GELU; PyTorch nn.GELU default is exact erf
    # (differences ~1e-3).  The original MLPMixer source was not provided.
    c = math.sqrt(2.0 / math.pi)
    return 0.5 * y * (1.0 + jnp.tanh(c * (y + 0.044715 * y * y * y)))


def _layernorm(x, g, b):
    # Row-wise LayerNorm over the last dim (eps = 1e-5, like nn.LayerNorm).
    mean = jnp.mean(x, axis=-1, keepdims=True)
    cent = x - mean
    var = jnp.mean(cent * cent, axis=-1, keepdims=True)
    return cent * lax.rsqrt(var + 1e-5) * g + b


# ------------------------- fused mixer + projection -------------------------

def _fused_mixer_proj_kernel(
    x_ref,                              # (1, N, C_in)
    patch_w_ref, patch_b_ref,           # (C_in, H), (1, H)
    ln_tok_g_ref, ln_tok_b_ref,         # (1, H), (1, H)
    tok1_w_ref, tok1_b_ref,             # (N, T), (1, T)
    tok2_w_ref, tok2_b_ref,             # (T, N), (N, 1)
    ln_ch_g_ref, ln_ch_b_ref,           # (1, H), (1, H)
    ch1_w_ref, ch1_b_ref,               # (H, Dc), (1, Dc)
    ch2_w_ref, ch2_b_ref,               # (Dc, H), (1, H)
    ln_out_g_ref, ln_out_b_ref,         # (1, H), (1, H)
    proj_w_ref, proj_b_ref,             # (H, P), (1, P)
    o_ref,                              # (1, N, P)
):
    """One batch element: patch-embed -> token-mix -> channel-mix -> LN -> proj."""
    x_in = x_ref[0]                                               # (N, C_in)

    # Patch embed (1x1 "conv" == linear over channels).
    x = jnp.dot(x_in, patch_w_ref[...],
                preferred_element_type=jnp.float32) + patch_b_ref[...]  # (N, H)

    # ---- token mixing (transpose-free: contract over the token axis) ----
    y = _layernorm(x, ln_tok_g_ref[...], ln_tok_b_ref[...])       # (N, H)
    # (H, T) = y^T @ tok1_w, without materializing the transpose.
    z = lax.dot_general(y, tok1_w_ref[...], (((0,), (0,)), ((), ())),
                        preferred_element_type=jnp.float32)
    z = _gelu(z + tok1_b_ref[...])                                # (H, T)
    # (N, H) = (z @ tok2_w)^T, again without an explicit transpose.
    zt = lax.dot_general(tok2_w_ref[...], z, (((0,), (1,)), ((), ())),
                         preferred_element_type=jnp.float32)
    x = x + zt + tok2_b_ref[...]            # tok2 bias is per-token -> (N, 1)

    # ---- channel mixing ----
    y = _layernorm(x, ln_ch_g_ref[...], ln_ch_b_ref[...])
    h = _gelu(jnp.dot(y, ch1_w_ref[...],
                      preferred_element_type=jnp.float32) + ch1_b_ref[...])
    h = jnp.dot(h, ch2_w_ref[...],
                preferred_element_type=jnp.float32) + ch2_b_ref[...]
    x = x + h

    # ---- output LN + projection (W_enc / W_dec) ----
    x = _layernorm(x, ln_out_g_ref[...], ln_out_b_ref[...])
    out = jnp.dot(x, proj_w_ref[...],
                  preferred_element_type=jnp.float32) + proj_b_ref[...]
    o_ref[0] = out.astype(o_ref.dtype)


def _const_spec(shape):
    """Full-array block that is identical for every grid step (weights)."""
    zeros = (0,) * len(shape)
    return pl.BlockSpec(shape, lambda b, _z=zeros: _z)


def fused_mixer_proj(x_bnc, mixer_params, proj_params):
    """x_bnc: (B, N, C_in) -> (B, N, P) through mixer block + projection."""
    B, N, C = x_bnc.shape
    P = proj_params["w"].shape[1]

    tok2_b_col = jnp.reshape(mixer_params["tok2"]["b"], (N, 1))   # per-token bias

    args = [
        x_bnc,
        mixer_params["patch"]["w"], mixer_params["patch"]["b"],
        mixer_params["ln_tok_g"], mixer_params["ln_tok_b"],
        mixer_params["tok1"]["w"], mixer_params["tok1"]["b"],
        mixer_params["tok2"]["w"], tok2_b_col,
        mixer_params["ln_ch_g"], mixer_params["ln_ch_b"],
        mixer_params["ch1"]["w"], mixer_params["ch1"]["b"],
        mixer_params["ch2"]["w"], mixer_params["ch2"]["b"],
        mixer_params["ln_out_g"], mixer_params["ln_out_b"],
        proj_params["w"], proj_params["b"],
    ]
    in_specs = ([pl.BlockSpec((1, N, C), lambda b: (b, 0, 0))] +
                [_const_spec(a.shape) for a in args[1:]])

    return pl.pallas_call(
        _fused_mixer_proj_kernel,
        out_shape=jax.ShapeDtypeStruct((B, N, P), x_bnc.dtype),
        grid_spec=pltpu.PrefetchScalarGridSpec(
            num_scalar_prefetch=0,
            grid=(B,),
            in_specs=in_specs,
            out_specs=pl.BlockSpec((1, N, P), lambda b: (b, 0, 0)),
        ),
        compiler_params=pltpu.CompilerParams(
            dimension_semantics=("parallel",),   # v7x: shard batch over 2 TCs
        ),
    )(*args)


# ------------------------------ parameter init ------------------------------

def init_linear(key, k_in, k_out):
    kw, kb = jax.random.split(key)
    bound = 1.0 / math.sqrt(k_in)
    w = jax.random.uniform(kw, (k_in, k_out), jnp.float32, -bound, bound)
    b = jax.random.uniform(kb, (1, k_out), jnp.float32, -bound, bound)
    return {"w": w, "b": b}


def init_mixer(key, in_channels, num_tokens, hidden_size, tokens_mlp_dim,
               channels_mlp_dim):
    ks = jax.random.split(key, 5)
    return {
        "patch": init_linear(ks[0], in_channels, hidden_size),
        "ln_tok_g": jnp.ones((1, hidden_size), jnp.float32),
        "ln_tok_b": jnp.zeros((1, hidden_size), jnp.float32),
        "tok1": init_linear(ks[1], num_tokens, tokens_mlp_dim),
        "tok2": init_linear(ks[2], tokens_mlp_dim, num_tokens),
        "ln_ch_g": jnp.ones((1, hidden_size), jnp.float32),
        "ln_ch_b": jnp.zeros((1, hidden_size), jnp.float32),
        "ch1": init_linear(ks[3], hidden_size, channels_mlp_dim),
        "ch2": init_linear(ks[4], channels_mlp_dim, hidden_size),
        "ln_out_g": jnp.ones((1, hidden_size), jnp.float32),
        "ln_out_b": jnp.zeros((1, hidden_size), jnp.float32),
    }


# --------------------------- Fourier pos features ---------------------------
# TODO(synk): the original generate_fourier_features source was not provided;
# a deterministic Perceiver-style 2D Fourier feature generator is used instead.
def generate_fourier_features(bs, dim, num_bands, max_freq):
    coords = jnp.linspace(-1.0, 1.0, dim)
    yy, xx = jnp.meshgrid(coords, coords, indexing="ij")
    pos = jnp.stack([yy.ravel(), xx.ravel()], axis=-1)            # (dim^2, 2)
    freqs = jnp.linspace(1.0, max_freq / 2.0, num_bands)          # (nb,)
    ang = pos[:, :, None] * freqs[None, None, :] * jnp.pi         # (dim^2, 2, nb)
    feats = jnp.concatenate(
        [pos,
         jnp.sin(ang).reshape(dim * dim, -1),
         jnp.cos(ang).reshape(dim * dim, -1)], axis=-1)           # (dim^2, 2 + 4*nb)
    return jnp.broadcast_to(feats[None], (bs, dim * dim, feats.shape[-1]))


# --------------------------------- MLP ---------------------------------------

def cnn_dim_out(in_size, ker, stride, padding):
    return math.floor((in_size - ker + 2 * padding) / stride) + 1


def init_mlp(key, cfg):
    ks_ = cfg["kernel_size"]
    img_dim, out_dim = cfg["img_dim"], cfg["out_dim"]
    channels = cfg["channels"]
    in_ch, out_ch = cfg["in_ch"], cfg["out_ch"]
    n_tokens = img_dim ** 2 + ks_ ** 2 + out_dim ** 2
    keys = jax.random.split(key, 7)
    return {
        "mixer1": init_mixer(keys[0], channels, n_tokens, cfg["hidden_size"],
                             cfg["tokens_mlp_dim"], cfg["channels_mlp_dim"]),
        "W_enc": init_linear(keys[1], cfg["hidden_size"], in_ch),
        "mixer2": init_mixer(keys[2], in_ch + channels, n_tokens,
                             cfg["hidden_size"], cfg["tokens_mlp_dim"],
                             cfg["channels_mlp_dim"]),
        "W_dec": init_linear(keys[3], cfg["hidden_size"], out_ch),
        "context_hidden_state": jax.random.normal(
            keys[4], (out_dim ** 2, channels), jnp.float32),
        "query_hidden_state": jax.random.normal(
            keys[5], (img_dim ** 2 + ks_ ** 2, channels), jnp.float32),
        "k_embed": init_linear(keys[6], in_ch * out_ch, channels),
        "ipos_emb": generate_fourier_features(cfg["bs"], img_dim,
                                              cfg["num_bands"], cfg["max_freq"]),
        "qpos_emb": generate_fourier_features(cfg["bs"], out_dim,
                                              cfg["num_bands"], cfg["max_freq"]),
    }


# TODO(synk): the original MLPMixer class was not provided; a standard 1-block
# MLP-Mixer (1x1 patch embed, token-mixing MLP, channel-mixing MLP, final LN)
# is implemented (fused with W_enc/W_dec inside the Pallas kernel above).
def mlp_forward(params, cfg, flat_img, flat_cout, flat_k, bs=None):
    if bs is None:
        bs = cfg["bs"]
    ks_ = cfg["kernel_size"]
    img_dim, out_dim, channels = cfg["img_dim"], cfg["out_dim"], cfg["channels"]

    ipos = params["ipos_emb"] if bs == cfg["bs"] else generate_fourier_features(
        bs, img_dim, cfg["num_bands"], cfg["max_freq"])
    qpos = params["qpos_emb"] if bs == cfg["bs"] else generate_fourier_features(
        bs, out_dim, cfg["num_bands"], cfg["max_freq"])

    # x = cat(flat_img, ipos_emb) ; append k_embed(flat_k) and context state.
    x = jnp.concatenate([flat_img, ipos], axis=-1)                    # (B, D^2, ch)
    # k_embed: 9x24 @ 24x16 is sub-vreg work; plain XLA dot is cheaper than a launch.
    k_emb = jnp.dot(flat_k, params["k_embed"]["w"]) + params["k_embed"]["b"]
    x = jnp.concatenate(
        [x, jnp.broadcast_to(k_emb[None], (bs, ks_ ** 2, channels))], axis=1)
    x = jnp.concatenate(
        [x, jnp.broadcast_to(params["context_hidden_state"][None],
                             (bs, out_dim ** 2, channels))], axis=1)  # (B, N, ch)

    query = jnp.concatenate(
        [jnp.broadcast_to(params["query_hidden_state"][None],
                          (bs, img_dim ** 2 + ks_ ** 2, channels)),
         jnp.concatenate([jnp.ones_like(flat_cout), qpos], axis=-1)], axis=1)

    # The PyTorch (B,C,N,1)-NCHW permute + 1x1 patch embed is folded into the
    # fused kernel operating directly on (B, N, C).
    x = fused_mixer_proj(x, params["mixer1"], params["W_enc"])       # (B, N, in_ch)
    x = jnp.concatenate([x, query], axis=-1)                          # (B, N, in_ch+ch)
    x = fused_mixer_proj(x, params["mixer2"], params["W_dec"])       # (B, N, out_ch)

    return x[:, -out_dim ** 2:]                                       # (B, out_dim^2, out_ch)


# ---------------------------------- main -------------------------------------

if __name__ == "__main__":
    ks_ = 3
    img_dim = 8
    out_dim = cnn_dim_out(img_dim, ks_, 1, 0)          # 6
    in_ch, out_ch = 2, 2
    num_bands = 3
    fdim = 2 + 4 * num_bands                           # 14
    channels = in_ch + fdim                            # 16 (== out_ch + fdim)
    cfg = dict(bs=2, in_ch=in_ch, out_ch=out_ch, kernel_size=ks_,
               img_dim=img_dim, out_dim=out_dim, channels=channels,
               hidden_size=32, tokens_mlp_dim=32, channels_mlp_dim=32,
               num_bands=num_bands, max_freq=8.0, f_size=fdim)

    root = jax.random.PRNGKey(0)
    kp, ki, kc, kk = jax.random.split(root, 4)
    params = init_mlp(kp, cfg)

    flat_img = jax.random.normal(ki, (cfg["bs"], img_dim ** 2, in_ch), jnp.float32)
    flat_cout = jax.random.normal(kc, (cfg["bs"], out_dim ** 2, out_ch), jnp.float32)
    flat_k = jax.random.normal(kk, (ks_ ** 2, in_ch * out_ch), jnp.float32)

    fwd = jax.jit(functools.partial(mlp_forward, params, cfg))
    out = fwd(flat_img, flat_cout, flat_k)
    out = jax.block_until_ready(out)
    assert out.shape == (cfg["bs"], out_dim ** 2, out_ch), out.shape
    print("KERNEL_OK")
</pallas_src>

<mosaic_0001>
module attributes {stable_mosaic.version = 11 : i64} {
  func.func @_fused_mixer_proj_kernel(%arg0: i32, %arg1: memref<1x109x16xf32, #tpu.memory_space<vmem>>, %arg2: memref<16x32xf32, #tpu.memory_space<vmem>>, %arg3: memref<1x32xf32, #tpu.memory_space<vmem>>, %arg4: memref<1x32xf32, #tpu.memory_space<vmem>>, %arg5: memref<1x32xf32, #tpu.memory_space<vmem>>, %arg6: memref<109x32xf32, #tpu.memory_space<vmem>>, %arg7: memref<1x32xf32, #tpu.memory_space<vmem>>, %arg8: memref<32x109xf32, #tpu.memory_space<vmem>>, %arg9: memref<109x1xf32, #tpu.memory_space<vmem>>, %arg10: memref<1x32xf32, #tpu.memory_space<vmem>>, %arg11: memref<1x32xf32, #tpu.memory_space<vmem>>, %arg12: memref<32x32xf32, #tpu.memory_space<vmem>>, %arg13: memref<1x32xf32, #tpu.memory_space<vmem>>, %arg14: memref<32x32xf32, #tpu.memory_space<vmem>>, %arg15: memref<1x32xf32, #tpu.memory_space<vmem>>, %arg16: memref<1x32xf32, #tpu.memory_space<vmem>>, %arg17: memref<1x32xf32, #tpu.memory_space<vmem>>, %arg18: memref<32x2xf32, #tpu.memory_space<vmem>>, %arg19: memref<1x2xf32, #tpu.memory_space<vmem>>, %arg20: memref<1x109x2xf32, #tpu.memory_space<vmem>>) attributes {dimension_semantics = [#tpu.dimension_semantics<parallel>], iteration_bounds = array<i64: 2>, scalar_prefetch = 0 : i64, scratch_operands = 0 : i64, tpu.core_type = #tpu.core_type<tc>, window_params = [{transform_indices = @transform_0, window_bounds = array<i64: 1, 109, 16>}, {pipeline_mode = #tpu.pipeline_mode<synchronous>, transform_indices = @transform_1, window_bounds = array<i64: 16, 32>}, {pipeline_mode = #tpu.pipeline_mode<synchronous>, transform_indices = @transform_2, window_bounds = array<i64: 1, 32>}, {pipeline_mode = #tpu.pipeline_mode<synchronous>, transform_indices = @transform_3, window_bounds = array<i64: 1, 32>}, {pipeline_mode = #tpu.pipeline_mode<synchronous>, transform_indices = @transform_4, window_bounds = array<i64: 1, 32>}, {pipeline_mode = #tpu.pipeline_mode<synchronous>, transform_indices = @transform_5, window_bounds = array<i64: 109, 32>}, {pipeline_mode = #tpu.pipeline_mode<synchronous>, transform_indices = @transform_6, window_bounds = array<i64: 1, 32>}, {pipeline_mode = #tpu.pipeline_mode<synchronous>, transform_indices = @transform_7, window_bounds = array<i64: 32, 109>}, {pipeline_mode = #tpu.pipeline_mode<synchronous>, transform_indices = @transform_8, window_bounds = array<i64: 109, 1>}, {pipeline_mode = #tpu.pipeline_mode<synchronous>, transform_indices = @transform_9, window_bounds = array<i64: 1, 32>}, {pipeline_mode = #tpu.pipeline_mode<synchronous>, transform_indices = @transform_10, window_bounds = array<i64: 1, 32>}, {pipeline_mode = #tpu.pipeline_mode<synchronous>, transform_indices = @transform_11, window_bounds = array<i64: 32, 32>}, {pipeline_mode = #tpu.pipeline_mode<synchronous>, transform_indices = @transform_12, window_bounds = array<i64: 1, 32>}, {pipeline_mode = #tpu.pipeline_mode<synchronous>, transform_indices = @transform_13, window_bounds = array<i64: 32, 32>}, {pipeline_mode = #tpu.pipeline_mode<synchronous>, transform_indices = @transform_14, window_bounds = array<i64: 1, 32>}, {pipeline_mode = #tpu.pipeline_mode<synchronous>, transform_indices = @transform_15, window_bounds = array<i64: 1, 32>}, {pipeline_mode = #tpu.pipeline_mode<synchronous>, transform_indices = @transform_16, window_bounds = array<i64: 1, 32>}, {pipeline_mode = #tpu.pipeline_mode<synchronous>, transform_indices = @transform_17, window_bounds = array<i64: 32, 2>}, {pipeline_mode = #tpu.pipeline_mode<synchronous>, transform_indices = @transform_18, window_bounds = array<i64: 1, 2>}, {transform_indices = @transform_19, window_bounds = array<i64: 1, 109, 2>}]} {
    %c0 = arith.constant 0 : index
    %c0_0 = arith.constant 0 : index
    %c0_1 = arith.constant 0 : index
    %0 = vector.load %arg1[%c0, %c0_0, %c0_1] : memref<1x109x16xf32, #tpu.memory_space<vmem>>, vector<1x109x16xf32>
    %1 = vector.shape_cast %0 : vector<1x109x16xf32> to vector<109x16xf32>
    %c0_2 = arith.constant 0 : index
    %c0_3 = arith.constant 0 : index
    %2 = vector.load %arg2[%c0_2, %c0_3] : memref<16x32xf32, #tpu.memory_space<vmem>>, vector<16x32xf32>
    %cst = arith.constant dense<0.000000e+00> : vector<109x32xf32>
    %3 = tpu.matmul %1, %2, %cst {dimension_numbers = #tpu.dot_dimension_numbers<[1], [0], [0], [1], [0, 0, 1, 1], [], []>} : vector<109x16xf32>, vector<16x32xf32>, vector<109x32xf32> -> vector<109x32xf32>
    %c0_4 = arith.constant 0 : index
    %c0_5 = arith.constant 0 : index
    %4 = vector.load %arg3[%c0_4, %c0_5] : memref<1x32xf32, #tpu.memory_space<vmem>>, vector<1x32xf32>
    %5 = vector.broadcast %4 : vector<1x32xf32> to vector<109x32xf32>
    %6 = arith.addf %3, %5 : vector<109x32xf32>
    %c0_6 = arith.constant 0 : index
    %c0_7 = arith.constant 0 : index
    %7 = vector.load %arg4[%c0_6, %c0_7] : memref<1x32xf32, #tpu.memory_space<vmem>>, vector<1x32xf32>
    %c0_8 = arith.constant 0 : index
    %c0_9 = arith.constant 0 : index
    %8 = vector.load %arg5[%c0_8, %c0_9] : memref<1x32xf32, #tpu.memory_space<vmem>>, vector<1x32xf32>
    %cst_10 = arith.constant dense<0.000000e+00> : vector<109xf32>
    %9 = vector.multi_reduction <add>, %6, %cst_10 [1] : vector<109x32xf32> to vector<109xf32>
    %10 = vector.shape_cast %9 : vector<109xf32> to vector<109x1xf32>
    %cst_11 = arith.constant 3.200000e+01 : f32
    %11 = vector.broadcast %cst_11 : f32 to vector<109x1xf32>
    %12 = arith.divf %10, %11 : vector<109x1xf32>
    %13 = vector.broadcast %12 : vector<109x1xf32> to vector<109x32xf32>
    %14 = arith.subf %6, %13 : vector<109x32xf32>
    %15 = arith.mulf %14, %14 : vector<109x32xf32>
    %cst_12 = arith.constant dense<0.000000e+00> : vector<109xf32>
    %16 = vector.multi_reduction <add>, %15, %cst_12 [1] : vector<109x32xf32> to vector<109xf32>
    %17 = vector.shape_cast %16 : vector<109xf32> to vector<109x1xf32>
    %cst_13 = arith.constant 3.200000e+01 : f32
    %18 = vector.broadcast %cst_13 : f32 to vector<109x1xf32>
    %19 = arith.divf %17, %18 : vector<109x1xf32>
    %cst_14 = arith.constant 9.99999974E-6 : f32
    %20 = vector.broadcast %cst_14 : f32 to vector<109x1xf32>
    %21 = arith.addf %19, %20 : vector<109x1xf32>
    %22 = math.rsqrt %21 : vector<109x1xf32>
    %23 = vector.broadcast %22 : vector<109x1xf32> to vector<109x32xf32>
    %24 = arith.mulf %14, %23 : vector<109x32xf32>
    %25 = vector.broadcast %7 : vector<1x32xf32> to vector<109x32xf32>
    %26 = arith.mulf %24, %25 : vector<109x32xf32>
    %27 = vector.broadcast %8 : vector<1x32xf32> to vector<109x32xf32>
    %28 = arith.addf %26, %27 : vector<109x32xf32>
    %c0_15 = arith.constant 0 : index
    %c0_16 = arith.constant 0 : index
    %29 = vector.load %arg6[%c0_15, %c0_16] : memref<109x32xf32, #tpu.memory_space<vmem>>, vector<109x32xf32>
    %cst_17 = arith.constant dense<0.000000e+00> : vector<32x32xf32>
    %30 = tpu.matmul %28, %29, %cst_17 {dimension_numbers = #tpu.dot_dimension_numbers<[0], [0], [1], [1], [0, 1, 1, 1], [], []>} : vector<109x32xf32>, vector<109x32xf32>, vector<32x32xf32> -> vector<32x32xf32>
    %c0_18 = arith.constant 0 : index
    %c0_19 = arith.constant 0 : index
    %31 = vector.load %arg7[%c0_18, %c0_19] : memref<1x32xf32, #tpu.memory_space<vmem>>, vector<1x32xf32>
    %32 = vector.broadcast %31 : vector<1x32xf32> to vector<32x32xf32>
    %33 = arith.addf %30, %32 : vector<32x32xf32>
    %cst_20 = arith.constant 5.000000e-01 : f32
    %34 = vector.broadcast %cst_20 : f32 to vector<32x32xf32>
    %35 = arith.mulf %34, %33 : vector<32x32xf32>
    %cst_21 = arith.constant 4.471500e-02 : f32
    %36 = vector.broadcast %cst_21 : f32 to vector<32x32xf32>
    %37 = arith.mulf %36, %33 : vector<32x32xf32>
    %38 = arith.mulf %37, %33 : vector<32x32xf32>
    %39 = arith.mulf %38, %33 : vector<32x32xf32>
    %40 = arith.addf %33, %39 : vector<32x32xf32>
    %cst_22 = arith.constant 0.797884583 : f32
    %41 = vector.broadcast %cst_22 : f32 to vector<32x32xf32>
    %42 = arith.mulf %41, %40 : vector<32x32xf32>
    %43 = math.tanh %42 : vector<32x32xf32>
    %cst_23 = arith.constant 1.000000e+00 : f32
    %44 = vector.broadcast %cst_23 : f32 to vector<32x32xf32>
    %45 = arith.addf %44, %43 : vector<32x32xf32>
    %46 = arith.mulf %35, %45 : vector<32x32xf32>
    %c0_24 = arith.constant 0 : index
    %c0_25 = arith.constant 0 : index
    %47 = vector.load %arg8[%c0_24, %c0_25] : memref<32x109xf32, #tpu.memory_space<vmem>>, vector<32x109xf32>
    %cst_26 = arith.constant dense<0.000000e+00> : vector<109x32xf32>
    %48 = tpu.matmul %47, %46, %cst_26 {dimension_numbers = #tpu.dot_dimension_numbers<[0], [1], [1], [0], [0, 1, 1, 0], [], []>} : vector<32x109xf32>, vector<32x32xf32>, vector<109x32xf32> -> vector<109x32xf32>
    %49 = arith.addf %6, %48 : vector<109x32xf32>
    %c0_27 = arith.constant 0 : index
    %c0_28 = arith.constant 0 : index
    %50 = vector.load %arg9[%c0_27, %c0_28] : memref<109x1xf32, #tpu.memory_space<vmem>>, vector<109x1xf32>
    %51 = vector.broadcast %50 : vector<109x1xf32> to vector<109x32xf32>
    %52 = arith.addf %49, %51 : vector<109x32xf32>
    %c0_29 = arith.constant 0 : index
    %c0_30 = arith.constant 0 : index
    %53 = vector.load %arg10[%c0_29, %c0_30] : memref<1x32xf32, #tpu.memory_space<vmem>>, vector<1x32xf32>
    %c0_31 = arith.constant 0 : index
    %c0_32 = arith.constant 0 : index
    %54 = vector.load %arg11[%c0_31, %c0_32] : memref<1x32xf32, #tpu.memory_space<vmem>>, vector<1x32xf32>
    %cst_33 = arith.constant dense<0.000000e+00> : vector<109xf32>
    %55 = vector.multi_reduction <add>, %52, %cst_33 [1] : vector<109x32xf32> to vector<109xf32>
    %56 = vector.shape_cast %55 : vector<109xf32> to vector<109x1xf32>
    %cst_34 = arith.constant 3.200000e+01 : f32
    %57 = vector.broadcast %cst_34 : f32 to vector<109x1xf32>
    %58 = arith.divf %56, %57 : vector<109x1xf32>
    %59 = vector.broadcast %58 : vector<109x1xf32> to vector<109x32xf32>
    %60 = arith.subf %52, %59 : vector<109x32xf32>
    %61 = arith.mulf %60, %60 : vector<109x32xf32>
    %cst_35 = arith.constant dense<0.000000e+00> : vector<109xf32>
    %62 = vector.multi_reduction <add>, %61, %cst_35 [1] : vector<109x32xf32> to vector<109xf32>
    %63 = vector.shape_cast %62 : vector<109xf32> to vector<109x1xf32>
    %cst_36 = arith.constant 3.200000e+01 : f32
    %64 = vector.broadcast %cst_36 : f32 to vector<109x1xf32>
    %65 = arith.divf %63, %64 : vector<109x1xf32>
    %cst_37 = arith.constant 9.99999974E-6 : f32
    %66 = vector.broadcast %cst_37 : f32 to vector<109x1xf32>
    %67 = arith.addf %65, %66 : vector<109x1xf32>
    %68 = math.rsqrt %67 : vector<109x1xf32>
    %69 = vector.broadcast %68 : vector<109x1xf32> to vector<109x32xf32>
    %70 = arith.mulf %60, %69 : vector<109x32xf32>
    %71 = vector.broadcast %53 : vector<1x32xf32> to vector<109x32xf32>
    %72 = arith.mulf %70, %71 : vector<109x32xf32>
    %73 = vector.broadcast %54 : vector<1x32xf32> to vector<109x32xf32>
    %74 = arith.addf %72, %73 : vector<109x32xf32>
    %c0_38 = arith.constant 0 : index
    %c0_39 = arith.constant 0 : index
    %75 = vector.load %arg12[%c0_38, %c0_39] : memref<32x32xf32, #tpu.memory_space<vmem>>, vector<32x32xf32>
    %cst_40 = arith.constant dense<0.000000e+00> : vector<109x32xf32>
    %76 = tpu.matmul %74, %75, %cst_40 {dimension_numbers = #tpu.dot_dimension_numbers<[1], [0], [0], [1], [0, 0, 1, 1], [], []>} : vector<109x32xf32>, vector<32x32xf32>, vector<109x32xf32> -> vector<109x32xf32>
    %c0_41 = arith.constant 0 : index
    %c0_42 = arith.constant 0 : index
    %77 = vector.load %arg13[%c0_41, %c0_42] : memref<1x32xf32, #tpu.memory_space<vmem>>, vector<1x32xf32>
    %78 = vector.broadcast %77 : vector<1x32xf32> to vector<109x32xf32>
    %79 = arith.addf %76, %78 : vector<109x32xf32>
    %cst_43 = arith.constant 5.000000e-01 : f32
    %80 = vector.broadcast %cst_43 : f32 to vector<109x32xf32>
    %81 = arith.mulf %80, %79 : vector<109x32xf32>
    %cst_44 = arith.constant 4.471500e-02 : f32
    %82 = vector.broadcast %cst_44 : f32 to vector<109x32xf32>
    %83 = arith.mulf %82, %79 : vector<109x32xf32>
    %84 = arith.mulf %83, %79 : vector<109x32xf32>
    %85 = arith.mulf %84, %79 : vector<109x32xf32>
    %86 = arith.addf %79, %85 : vector<109x32xf32>
    %cst_45 = arith.constant 0.797884583 : f32
    %87 = vector.broadcast %cst_45 : f32 to vector<109x32xf32>
    %88 = arith.mulf %87, %86 : vector<109x32xf32>
    %89 = math.tanh %88 : vector<109x32xf32>
    %cst_46 = arith.constant 1.000000e+00 : f32
    %90 = vector.broadcast %cst_46 : f32 to vector<109x32xf32>
    %91 = arith.addf %90, %89 : vector<109x32xf32>
    %92 = arith.mulf %81, %91 : vector<109x32xf32>
    %c0_47 = arith.constant 0 : index
    %c0_48 = arith.constant 0 : index
    %93 = vector.load %arg14[%c0_47, %c0_48] : memref<32x32xf32, #tpu.memory_space<vmem>>, vector<32x32xf32>
    %cst_49 = arith.constant dense<0.000000e+00> : vector<109x32xf32>
    %94 = tpu.matmul %92, %93, %cst_49 {dimension_numbers = #tpu.dot_dimension_numbers<[1], [0], [0], [1], [0, 0, 1, 1], [], []>} : vector<109x32xf32>, vector<32x32xf32>, vector<109x32xf32> -> vector<109x32xf32>
    %c0_50 = arith.constant 0 : index
    %c0_51 = arith.constant 0 : index
    %95 = vector.load %arg15[%c0_50, %c0_51] : memref<1x32xf32, #tpu.memory_space<vmem>>, vector<1x32xf32>
    %96 = vector.broadcast %95 : vector<1x32xf32> to vector<109x32xf32>
    %97 = arith.addf %94, %96 : vector<109x32xf32>
    %98 = arith.addf %52, %97 : vector<109x32xf32>
    %c0_52 = arith.constant 0 : index
    %c0_53 = arith.constant 0 : index
    %99 = vector.load %arg16[%c0_52, %c0_53] : memref<1x32xf32, #tpu.memory_space<vmem>>, vector<1x32xf32>
    %c0_54 = arith.constant 0 : index
    %c0_55 = arith.constant 0 : index
    %100 = vector.load %arg17[%c0_54, %c0_55] : memref<1x32xf32, #tpu.memory_space<vmem>>, vector<1x32xf32>
    %cst_56 = arith.constant dense<0.000000e+00> : vector<109xf32>
    %101 = vector.multi_reduction <add>, %98, %cst_56 [1] : vector<109x32xf32> to vector<109xf32>
    %102 = vector.shape_cast %101 : vector<109xf32> to vector<109x1xf32>
    %cst_57 = arith.constant 3.200000e+01 : f32
    %103 = vector.broadcast %cst_57 : f32 to vector<109x1xf32>
    %104 = arith.divf %102, %103 : vector<109x1xf32>
    %105 = vector.broadcast %104 : vector<109x1xf32> to vector<109x32xf32>
    %106 = arith.subf %98, %105 : vector<109x32xf32>
    %107 = arith.mulf %106, %106 : vector<109x32xf32>
    %cst_58 = arith.constant dense<0.000000e+00> : vector<109xf32>
    %108 = vector.multi_reduction <add>, %107, %cst_58 [1] : vector<109x32xf32> to vector<109xf32>
    %109 = vector.shape_cast %108 : vector<109xf32> to vector<109x1xf32>
    %cst_59 = arith.constant 3.200000e+01 : f32
    %110 = vector.broadcast %cst_59 : f32 to vector<109x1xf32>
    %111 = arith.divf %109, %110 : vector<109x1xf32>
    %cst_60 = arith.constant 9.99999974E-6 : f32
    %112 = vector.broadcast %cst_60 : f32 to vector<109x1xf32>
    %113 = arith.addf %111, %112 : vector<109x1xf32>
    %114 = math.rsqrt %113 : vector<109x1xf32>
    %115 = vector.broadcast %114 : vector<109x1xf32> to vector<109x32xf32>
    %116 = arith.mulf %106, %115 : vector<109x32xf32>
    %117 = vector.broadcast %99 : vector<1x32xf32> to vector<109x32xf32>
    %118 = arith.mulf %116, %117 : vector<109x32xf32>
    %119 = vector.broadcast %100 : vector<1x32xf32> to vector<109x32xf32>
    %120 = arith.addf %118, %119 : vector<109x32xf32>
    %c0_61 = arith.constant 0 : index
    %c0_62 = arith.constant 0 : index
    %121 = vector.load %arg18[%c0_61, %c0_62] : memref<32x2xf32, #tpu.memory_space<vmem>>, vector<32x2xf32>
    %cst_63 = arith.constant dense<0.000000e+00> : vector<109x2xf32>
    %122 = tpu.matmul %120, %121, %cst_63 {dimension_numbers = #tpu.dot_dimension_numbers<[1], [0], [0], [1], [0, 0, 1, 1], [], []>} : vector<109x32xf32>, vector<32x2xf32>, vector<109x2xf32> -> vector<109x2xf32>
    %c0_64 = arith.constant 0 : index
    %c0_65 = arith.constant 0 : index
    %123 = vector.load %arg19[%c0_64, %c0_65] : memref<1x2xf32, #tpu.memory_space<vmem>>, vector<1x2xf32>
    %124 = vector.broadcast %123 : vector<1x2xf32> to vector<109x2xf32>
    %125 = arith.addf %122, %124 : vector<109x2xf32>
    %c0_66 = arith.constant 0 : index
    %c0_67 = arith.constant 0 : index
    %c0_68 = arith.constant 0 : index
    %126 = vector.load %arg20[%c0_66, %c0_67, %c0_68] : memref<1x109x2xf32, #tpu.memory_space<vmem>>, vector<1x109x2xf32>
    %127 = vector.shape_cast %126 : vector<1x109x2xf32> to vector<109x2xf32>
    %128 = vector.shape_cast %125 : vector<109x2xf32> to vector<1x109x2xf32>
    tpu.vector_store %arg20[%c0_66, %c0_67, %c0_68], %128 {strides = array<i32>} : memref<1x109x2xf32, #tpu.memory_space<vmem>>, vector<1x109x2xf32>,
    return
  }
  func.func @transform_0(%arg0: i32) -> (i32, i32, i32) {
    %c0_i32 = arith.constant 0 : i32
    %c0_i32_0 = arith.constant 0 : i32
    %c0_i32_1 = arith.constant 0 : i32
    return %arg0, %c0_i32, %c0_i32_0 : i32, i32, i32
  }
  func.func @transform_1(%arg0: i32) -> (i32, i32) {
    %c0_i32 = arith.constant 0 : i32
    %c0_i32_0 = arith.constant 0 : i32
    %c0_i32_1 = arith.constant 0 : i32
    return %c0_i32, %c0_i32_0 : i32, i32
  }
  func.func @transform_2(%arg0: i32) -> (i32, i32) {
    %c0_i32 = arith.constant 0 : i32
    %c0_i32_0 = arith.constant 0 : i32
    %c0_i32_1 = arith.constant 0 : i32
    return %c0_i32, %c0_i32_0 : i32, i32
  }
  func.func @transform_3(%arg0: i32) -> (i32, i32) {
    %c0_i32 = arith.constant 0 : i32
    %c0_i32_0 = arith.constant 0 : i32
    %c0_i32_1 = arith.constant 0 : i32
    return %c0_i32, %c0_i32_0 : i32, i32
  }
  func.func @transform_4(%arg0: i32) -> (i32, i32) {
    %c0_i32 = arith.constant 0 : i32
    %c0_i32_0 = arith.constant 0 : i32
    %c0_i32_1 = arith.constant 0 : i32
    return %c0_i32, %c0_i32_0 : i32, i32
  }
  func.func @transform_5(%arg0: i32) -> (i32, i32) {
    %c0_i32 = arith.constant 0 : i32
    %c0_i32_0 = arith.constant 0 : i32
    %c0_i32_1 = arith.constant 0 : i32
    return %c0_i32, %c0_i32_0 : i32, i32
  }
  func.func @transform_6(%arg0: i32) -> (i32, i32) {
    %c0_i32 = arith.constant 0 : i32
    %c0_i32_0 = arith.constant 0 : i32
    %c0_i32_1 = arith.constant 0 : i32
    return %c0_i32, %c0_i32_0 : i32, i32
  }
  func.func @transform_7(%arg0: i32) -> (i32, i32) {
    %c0_i32 = arith.constant 0 : i32
    %c0_i32_0 = arith.constant 0 : i32
    %c0_i32_1 = arith.constant 0 : i32
    return %c0_i32, %c0_i32_0 : i32, i32
  }
  func.func @transform_8(%arg0: i32) -> (i32, i32) {
    %c0_i32 = arith.constant 0 : i32
    %c0_i32_0 = arith.constant 0 : i32
    %c0_i32_1 = arith.constant 0 : i32
    return %c0_i32, %c0_i32_0 : i32, i32
  }
  func.func @transform_9(%arg0: i32) -> (i32, i32) {
    %c0_i32 = arith.constant 0 : i32
    %c0_i32_0 = arith.constant 0 : i32
    %c0_i32_1 = arith.constant 0 : i32
    return %c0_i32, %c0_i32_0 : i32, i32
  }
  func.func @transform_10(%arg0: i32) -> (i32, i32) {
    %c0_i32 = arith.constant 0 : i32
    %c0_i32_0 = arith.constant 0 : i32
    %c0_i32_1 = arith.constant 0 : i32
    return %c0_i32, %c0_i32_0 : i32, i32
  }
  func.func @transform_11(%arg0: i32) -> (i32, i32) {
    %c0_i32 = arith.constant 0 : i32
    %c0_i32_0 = arith.constant 0 : i32
    %c0_i32_1 = arith.constant 0 : i32
    return %c0_i32, %c0_i32_0 : i32, i32
  }
  func.func @transform_12(%arg0: i32) -> (i32, i32) {
    %c0_i32 = arith.constant 0 : i32
    %c0_i32_0 = arith.constant 0 : i32
    %c0_i32_1 = arith.constant 0 : i32
    return %c0_i32, %c0_i32_0 : i32, i32
  }
  func.func @transform_13(%arg0: i32) -> (i32, i32) {
    %c0_i32 = arith.constant 0 : i32
    %c0_i32_0 = arith.constant 0 : i32
    %c0_i32_1 = arith.constant 0 : i32
    return %c0_i32, %c0_i32_0 : i32, i32
  }
  func.func @transform_14(%arg0: i32) -> (i32, i32) {
    %c0_i32 = arith.constant 0 : i32
    %c0_i32_0 = arith.constant 0 : i32
    %c0_i32_1 = arith.constant 0 : i32
    return %c0_i32, %c0_i32_0 : i32, i32
  }
  func.func @transform_15(%arg0: i32) -> (i32, i32) {
    %c0_i32 = arith.constant 0 : i32
    %c0_i32_0 = arith.constant 0 : i32
    %c0_i32_1 = arith.constant 0 : i32
    return %c0_i32, %c0_i32_0 : i32, i32
  }
  func.func @transform_16(%arg0: i32) -> (i32, i32) {
    %c0_i32 = arith.constant 0 : i32
    %c0_i32_0 = arith.constant 0 : i32
    %c0_i32_1 = arith.constant 0 : i32
    return %c0_i32, %c0_i32_0 : i32, i32
  }
  func.func @transform_17(%arg0: i32) -> (i32, i32) {
    %c0_i32 = arith.constant 0 : i32
    %c0_i32_0 = arith.constant 0 : i32
    %c0_i32_1 = arith.constant 0 : i32
    return %c0_i32, %c0_i32_0 : i32, i32
  }
  func.func @transform_18(%arg0: i32) -> (i32, i32) {
    %c0_i32 = arith.constant 0 : i32
    %c0_i32_0 = arith.constant 0 : i32
    %c0_i32_1 = arith.constant 0 : i32
    return %c0_i32, %c0_i32_0 : i32, i32
  }
  func.func @transform_19(%arg0: i32) -> (i32, i32, i32) {
    %c0_i32 = arith.constant 0 : i32
    %c0_i32_0 = arith.constant 0 : i32
    %c0_i32_1 = arith.constant 0 : i32
    return %arg0, %c0_i32, %c0_i32_0 : i32, i32, i32
  }
}

module attributes {stable_mosaic.version = 11 : i64} {
  func.func @_fused_mixer_proj_kernel(%arg0: i32, %arg1: memref<1x109x18xf32, #tpu.memory_space<vmem>>, %arg2: memref<18x32xf32, #tpu.memory_space<vmem>>, %arg3: memref<1x32xf32, #tpu.memory_space<vmem>>, %arg4: memref<1x32xf32, #tpu.memory_space<vmem>>, %arg5: memref<1x32xf32, #tpu.memory_space<vmem>>, %arg6: memref<109x32xf32, #tpu.memory_space<vmem>>, %arg7: memref<1x32xf32, #tpu.memory_space<vmem>>, %arg8: memref<32x109xf32, #tpu.memory_space<vmem>>, %arg9: memref<109x1xf32, #tpu.memory_space<vmem>>, %arg10: memref<1x32xf32, #tpu.memory_space<vmem>>, %arg11: memref<1x32xf32, #tpu.memory_space<vmem>>, %arg12: memref<32x32xf32, #tpu.memory_space<vmem>>, %arg13: memref<1x32xf32, #tpu.memory_space<vmem>>, %arg14: memref<32x32xf32, #tpu.memory_space<vmem>>, %arg15: memref<1x32xf32, #tpu.memory_space<vmem>>, %arg16: memref<1x32xf32, #tpu.memory_space<vmem>>, %arg17: memref<1x32xf32, #tpu.memory_space<vmem>>, %arg18: memref<32x2xf32, #tpu.memory_space<vmem>>, %arg19: memref<1x2xf32, #tpu.memory_space<vmem>>, %arg20: memref<1x109x2xf32, #tpu.memory_space<vmem>>) attributes {dimension_semantics = [#tpu.dimension_semantics<parallel>], iteration_bounds = array<i64: 2>, scalar_prefetch = 0 : i64, scratch_operands = 0 : i64, tpu.core_type = #tpu.core_type<tc>, window_params = [{transform_indices = @transform_0, window_bounds = array<i64: 1, 109, 18>}, {pipeline_mode = #tpu.pipeline_mode<synchronous>, transform_indices = @transform_1, window_bounds = array<i64: 18, 32>}, {pipeline_mode = #tpu.pipeline_mode<synchronous>, transform_indices = @transform_2, window_bounds = array<i64: 1, 32>}, {pipeline_mode = #tpu.pipeline_mode<synchronous>, transform_indices = @transform_3, window_bounds = array<i64: 1, 32>}, {pipeline_mode = #tpu.pipeline_mode<synchronous>, transform_indices = @transform_4, window_bounds = array<i64: 1, 32>}, {pipeline_mode = #tpu.pipeline_mode<synchronous>, transform_indices = @transform_5, window_bounds = array<i64: 109, 32>}, {pipeline_mode = #tpu.pipeline_mode<synchronous>, transform_indices = @transform_6, window_bounds = array<i64: 1, 32>}, {pipeline_mode = #tpu.pipeline_mode<synchronous>, transform_indices = @transform_7, window_bounds = array<i64: 32, 109>}, {pipeline_mode = #tpu.pipeline_mode<synchronous>, transform_indices = @transform_8, window_bounds = array<i64: 109, 1>}, {pipeline_mode = #tpu.pipeline_mode<synchronous>, transform_indices = @transform_9, window_bounds = array<i64: 1, 32>}, {pipeline_mode = #tpu.pipeline_mode<synchronous>, transform_indices = @transform_10, window_bounds = array<i64: 1, 32>}, {pipeline_mode = #tpu.pipeline_mode<synchronous>, transform_indices = @transform_11, window_bounds = array<i64: 32, 32>}, {pipeline_mode = #tpu.pipeline_mode<synchronous>, transform_indices = @transform_12, window_bounds = array<i64: 1, 32>}, {pipeline_mode = #tpu.pipeline_mode<synchronous>, transform_indices = @transform_13, window_bounds = array<i64: 32, 32>}, {pipeline_mode = #tpu.pipeline_mode<synchronous>, transform_indices = @transform_14, window_bounds = array<i64: 1, 32>}, {pipeline_mode = #tpu.pipeline_mode<synchronous>, transform_indices = @transform_15, window_bounds = array<i64: 1, 32>}, {pipeline_mode = #tpu.pipeline_mode<synchronous>, transform_indices = @transform_16, window_bounds = array<i64: 1, 32>}, {pipeline_mode = #tpu.pipeline_mode<synchronous>, transform_indices = @transform_17, window_bounds = array<i64: 32, 2>}, {pipeline_mode = #tpu.pipeline_mode<synchronous>, transform_indices = @transform_18, window_bounds = array<i64: 1, 2>}, {transform_indices = @transform_19, window_bounds = array<i64: 1, 109, 2>}]} {
    %c0 = arith.constant 0 : index
    %c0_0 = arith.constant 0 : index
    %c0_1 = arith.constant 0 : index
    %0 = vector.load %arg1[%c0, %c0_0, %c0_1] : memref<1x109x18xf32, #tpu.memory_space<vmem>>, vector<1x109x18xf32>
    %1 = vector.shape_cast %0 : vector<1x109x18xf32> to vector<109x18xf32>
    %c0_2 = arith.constant 0 : index
    %c0_3 = arith.constant 0 : index
    %2 = vector.load %arg2[%c0_2, %c0_3] : memref<18x32xf32, #tpu.memory_space<vmem>>, vector<18x32xf32>
    %cst = arith.constant dense<0.000000e+00> : vector<109x32xf32>
    %3 = tpu.matmul %1, %2, %cst {dimension_numbers = #tpu.dot_dimension_numbers<[1], [0], [0], [1], [0, 0, 1, 1], [], []>} : vector<109x18xf32>, vector<18x32xf32>, vector<109x32xf32> -> vector<109x32xf32>
    %c0_4 = arith.constant 0 : index
    %c0_5 = arith.constant 0 : index
    %4 = vector.load %arg3[%c0_4, %c0_5] : memref<1x32xf32, #tpu.memory_space<vmem>>, vector<1x32xf32>
    %5 = vector.broadcast %4 : vector<1x32xf32> to vector<109x32xf32>
    %6 = arith.addf %3, %5 : vector<109x32xf32>
    %c0_6 = arith.constant 0 : index
    %c0_7 = arith.constant 0 : index
    %7 = vector.load %arg4[%c0_6, %c0_7] : memref<1x32xf32, #tpu.memory_space<vmem>>, vector<1x32xf32>
    %c0_8 = arith.constant 0 : index
    %c0_9 = arith.constant 0 : index
    %8 = vector.load %arg5[%c0_8, %c0_9] : memref<1x32xf32, #tpu.memory_space<vmem>>, vector<1x32xf32>
    %cst_10 = arith.constant dense<0.000000e+00> : vector<109xf32>
    %9 = vector.multi_reduction <add>, %6, %cst_10 [1] : vector<109x32xf32> to vector<109xf32>
    %10 = vector.shape_cast %9 : vector<109xf32> to vector<109x1xf32>
    %cst_11 = arith.constant 3.200000e+01 : f32
    %11 = vector.broadcast %cst_11 : f32 to vector<109x1xf32>
    %12 = arith.divf %10, %11 : vector<109x1xf32>
    %13 = vector.broadcast %12 : vector<109x1xf32> to vector<109x32xf32>
    %14 = arith.subf %6, %13 : vector<109x32xf32>
    %15 = arith.mulf %14, %14 : vector<109x32xf32>
    %cst_12 = arith.constant dense<0.000000e+00> : vector<109xf32>
    %16 = vector.multi_reduction <add>, %15, %cst_12 [1] : vector<109x32xf32> to vector<109xf32>
    %17 = vector.shape_cast %16 : vector<109xf32> to vector<109x1xf32>
    %cst_13 = arith.constant 3.200000e+01 : f32
    %18 = vector.broadcast %cst_13 : f32 to vector<109x1xf32>
    %19 = arith.divf %17, %18 : vector<109x1xf32>
    %cst_14 = arith.constant 9.99999974E-6 : f32
    %20 = vector.broadcast %cst_14 : f32 to vector<109x1xf32>
    %21 = arith.addf %19, %20 : vector<109x1xf32>
    %22 = math.rsqrt %21 : vector<109x1xf32>
    %23 = vector.broadcast %22 : vector<109x1xf32> to vector<109x32xf32>
    %24 = arith.mulf %14, %23 : vector<109x32xf32>
    %25 = vector.broadcast %7 : vector<1x32xf32> to vector<109x32xf32>
    %26 = arith.mulf %24, %25 : vector<109x32xf32>
    %27 = vector.broadcast %8 : vector<1x32xf32> to vector<109x32xf32>
    %28 = arith.addf %26, %27 : vector<109x32xf32>
    %c0_15 = arith.constant 0 : index
    %c0_16 = arith.constant 0 : index
    %29 = vector.load %arg6[%c0_15, %c0_16] : memref<109x32xf32, #tpu.memory_space<vmem>>, vector<109x32xf32>
    %cst_17 = arith.constant dense<0.000000e+00> : vector<32x32xf32>
    %30 = tpu.matmul %28, %29, %cst_17 {dimension_numbers = #tpu.dot_dimension_numbers<[0], [0], [1], [1], [0, 1, 1, 1], [], []>} : vector<109x32xf32>, vector<109x32xf32>, vector<32x32xf32> -> vector<32x32xf32>
    %c0_18 = arith.constant 0 : index
    %c0_19 = arith.constant 0 : index
    %31 = vector.load %arg7[%c0_18, %c0_19] : memref<1x32xf32, #tpu.memory_space<vmem>>, vector<1x32xf32>
    %32 = vector.broadcast %31 : vector<1x32xf32> to vector<32x32xf32>
    %33 = arith.addf %30, %32 : vector<32x32xf32>
    %cst_20 = arith.constant 5.000000e-01 : f32
    %34 = vector.broadcast %cst_20 : f32 to vector<32x32xf32>
    %35 = arith.mulf %34, %33 : vector<32x32xf32>
    %cst_21 = arith.constant 4.471500e-02 : f32
    %36 = vector.broadcast %cst_21 : f32 to vector<32x32xf32>
    %37 = arith.mulf %36, %33 : vector<32x32xf32>
    %38 = arith.mulf %37, %33 : vector<32x32xf32>
    %39 = arith.mulf %38, %33 : vector<32x32xf32>
    %40 = arith.addf %33, %39 : vector<32x32xf32>
    %cst_22 = arith.constant 0.797884583 : f32
    %41 = vector.broadcast %cst_22 : f32 to vector<32x32xf32>
    %42 = arith.mulf %41, %40 : vector<32x32xf32>
    %43 = math.tanh %42 : vector<32x32xf32>
    %cst_23 = arith.constant 1.000000e+00 : f32
    %44 = vector.broadcast %cst_23 : f32 to vector<32x32xf32>
    %45 = arith.addf %44, %43 : vector<32x32xf32>
    %46 = arith.mulf %35, %45 : vector<32x32xf32>
    %c0_24 = arith.constant 0 : index
    %c0_25 = arith.constant 0 : index
    %47 = vector.load %arg8[%c0_24, %c0_25] : memref<32x109xf32, #tpu.memory_space<vmem>>, vector<32x109xf32>
    %cst_26 = arith.constant dense<0.000000e+00> : vector<109x32xf32>
    %48 = tpu.matmul %47, %46, %cst_26 {dimension_numbers = #tpu.dot_dimension_numbers<[0], [1], [1], [0], [0, 1, 1, 0], [], []>} : vector<32x109xf32>, vector<32x32xf32>, vector<109x32xf32> -> vector<109x32xf32>
    %49 = arith.addf %6, %48 : vector<109x32xf32>
    %c0_27 = arith.constant 0 : index
    %c0_28 = arith.constant 0 : index
    %50 = vector.load %arg9[%c0_27, %c0_28] : memref<109x1xf32, #tpu.memory_space<vmem>>, vector<109x1xf32>
    %51 = vector.broadcast %50 : vector<109x1xf32> to vector<109x32xf32>
    %52 = arith.addf %49, %51 : vector<109x32xf32>
    %c0_29 = arith.constant 0 : index
    %c0_30 = arith.constant 0 : index
    %53 = vector.load %arg10[%c0_29, %c0_30] : memref<1x32xf32, #tpu.memory_space<vmem>>, vector<1x32xf32>
    %c0_31 = arith.constant 0 : index
    %c0_32 = arith.constant 0 : index
    %54 = vector.load %arg11[%c0_31, %c0_32] : memref<1x32xf32, #tpu.memory_space<vmem>>, vector<1x32xf32>
    %cst_33 = arith.constant dense<0.000000e+00> : vector<109xf32>
    %55 = vector.multi_reduction <add>, %52, %cst_33 [1] : vector<109x32xf32> to vector<109xf32>
    %56 = vector.shape_cast %55 : vector<109xf32> to vector<109x1xf32>
    %cst_34 = arith.constant 3.200000e+01 : f32
    %57 = vector.broadcast %cst_34 : f32 to vector<109x1xf32>
    %58 = arith.divf %56, %57 : vector<109x1xf32>
    %59 = vector.broadcast %58 : vector<109x1xf32> to vector<109x32xf32>
    %60 = arith.subf %52, %59 : vector<109x32xf32>
    %61 = arith.mulf %60, %60 : vector<109x32xf32>
    %cst_35 = arith.constant dense<0.000000e+00> : vector<109xf32>
    %62 = vector.multi_reduction <add>, %61, %cst_35 [1] : vector<109x32xf32> to vector<109xf32>
    %63 = vector.shape_cast %62 : vector<109xf32> to vector<109x1xf32>
    %cst_36 = arith.constant 3.200000e+01 : f32
    %64 = vector.broadcast %cst_36 : f32 to vector<109x1xf32>
    %65 = arith.divf %63, %64 : vector<109x1xf32>
    %cst_37 = arith.constant 9.99999974E-6 : f32
    %66 = vector.broadcast %cst_37 : f32 to vector<109x1xf32>
    %67 = arith.addf %65, %66 : vector<109x1xf32>
    %68 = math.rsqrt %67 : vector<109x1xf32>
    %69 = vector.broadcast %68 : vector<109x1xf32> to vector<109x32xf32>
    %70 = arith.mulf %60, %69 : vector<109x32xf32>
    %71 = vector.broadcast %53 : vector<1x32xf32> to vector<109x32xf32>
    %72 = arith.mulf %70, %71 : vector<109x32xf32>
    %73 = vector.broadcast %54 : vector<1x32xf32> to vector<109x32xf32>
    %74 = arith.addf %72, %73 : vector<109x32xf32>
    %c0_38 = arith.constant 0 : index
    %c0_39 = arith.constant 0 : index
    %75 = vector.load %arg12[%c0_38, %c0_39] : memref<32x32xf32, #tpu.memory_space<vmem>>, vector<32x32xf32>
    %cst_40 = arith.constant dense<0.000000e+00> : vector<109x32xf32>
    %76 = tpu.matmul %74, %75, %cst_40 {dimension_numbers = #tpu.dot_dimension_numbers<[1], [0], [0], [1], [0, 0, 1, 1], [], []>} : vector<109x32xf32>, vector<32x32xf32>, vector<109x32xf32> -> vector<109x32xf32>
    %c0_41 = arith.constant 0 : index
    %c0_42 = arith.constant 0 : index
    %77 = vector.load %arg13[%c0_41, %c0_42] : memref<1x32xf32, #tpu.memory_space<vmem>>, vector<1x32xf32>
    %78 = vector.broadcast %77 : vector<1x32xf32> to vector<109x32xf32>
    %79 = arith.addf %76, %78 : vector<109x32xf32>
    %cst_43 = arith.constant 5.000000e-01 : f32
    %80 = vector.broadcast %cst_43 : f32 to vector<109x32xf32>
    %81 = arith.mulf %80, %79 : vector<109x32xf32>
    %cst_44 = arith.constant 4.471500e-02 : f32
    %82 = vector.broadcast %cst_44 : f32 to vector<109x32xf32>
    %83 = arith.mulf %82, %79 : vector<109x32xf32>
    %84 = arith.mulf %83, %79 : vector<109x32xf32>
    %85 = arith.mulf %84, %79 : vector<109x32xf32>
    %86 = arith.addf %79, %85 : vector<109x32xf32>
    %cst_45 = arith.constant 0.797884583 : f32
    %87 = vector.broadcast %cst_45 : f32 to vector<109x32xf32>
    %88 = arith.mulf %87, %86 : vector<109x32xf32>
    %89 = math.tanh %88 : vector<109x32xf32>
    %cst_46 = arith.constant 1.000000e+00 : f32
    %90 = vector.broadcast %cst_46 : f32 to vector<109x32xf32>
    %91 = arith.addf %90, %89 : vector<109x32xf32>
    %92 = arith.mulf %81, %91 : vector<109x32xf32>
    %c0_47 = arith.constant 0 : index
    %c0_48 = arith.constant 0 : index
    %93 = vector.load %arg14[%c0_47, %c0_48] : memref<32x32xf32, #tpu.memory_space<vmem>>, vector<32x32xf32>
    %cst_49 = arith.constant dense<0.000000e+00> : vector<109x32xf32>
    %94 = tpu.matmul %92, %93, %cst_49 {dimension_numbers = #tpu.dot_dimension_numbers<[1], [0], [0], [1], [0, 0, 1, 1], [], []>} : vector<109x32xf32>, vector<32x32xf32>, vector<109x32xf32> -> vector<109x32xf32>
    %c0_50 = arith.constant 0 : index
    %c0_51 = arith.constant 0 : index
    %95 = vector.load %arg15[%c0_50, %c0_51] : memref<1x32xf32, #tpu.memory_space<vmem>>, vector<1x32xf32>
    %96 = vector.broadcast %95 : vector<1x32xf32> to vector<109x32xf32>
    %97 = arith.addf %94, %96 : vector<109x32xf32>
    %98 = arith.addf %52, %97 : vector<109x32xf32>
    %c0_52 = arith.constant 0 : index
    %c0_53 = arith.constant 0 : index
    %99 = vector.load %arg16[%c0_52, %c0_53] : memref<1x32xf32, #tpu.memory_space<vmem>>, vector<1x32xf32>
    %c0_54 = arith.constant 0 : index
    %c0_55 = arith.constant 0 : index
    %100 = vector.load %arg17[%c0_54, %c0_55] : memref<1x32xf32, #tpu.memory_space<vmem>>, vector<1x32xf32>
    %cst_56 = arith.constant dense<0.000000e+00> : vector<109xf32>
    %101 = vector.multi_reduction <add>, %98, %cst_56 [1] : vector<109x32xf32> to vector<109xf32>
    %102 = vector.shape_cast %101 : vector<109xf32> to vector<109x1xf32>
    %cst_57 = arith.constant 3.200000e+01 : f32
    %103 = vector.broadcast %cst_57 : f32 to vector<109x1xf32>
    %104 = arith.divf %102, %103 : vector<109x1xf32>
    %105 = vector.broadcast %104 : vector<109x1xf32> to vector<109x32xf32>
    %106 = arith.subf %98, %105 : vector<109x32xf32>
    %107 = arith.mulf %106, %106 : vector<109x32xf32>
    %cst_58 = arith.constant dense<0.000000e+00> : vector<109xf32>
    %108 = vector.multi_reduction <add>, %107, %cst_58 [1] : vector<109x32xf32> to vector<109xf32>
    %109 = vector.shape_cast %108 : vector<109xf32> to vector<109x1xf32>
    %cst_59 = arith.constant 3.200000e+01 : f32
    %110 = vector.broadcast %cst_59 : f32 to vector<109x1xf32>
    %111 = arith.divf %109, %110 : vector<109x1xf32>
    %cst_60 = arith.constant 9.99999974E-6 : f32
    %112 = vector.broadcast %cst_60 : f32 to vector<109x1xf32>
    %113 = arith.addf %111, %112 : vector<109x1xf32>
    %114 = math.rsqrt %113 : vector<109x1xf32>
    %115 = vector.broadcast %114 : vector<109x1xf32> to vector<109x32xf32>
    %116 = arith.mulf %106, %115 : vector<109x32xf32>
    %117 = vector.broadcast %99 : vector<1x32xf32> to vector<109x32xf32>
    %118 = arith.mulf %116, %117 : vector<109x32xf32>
    %119 = vector.broadcast %100 : vector<1x32xf32> to vector<109x32xf32>
    %120 = arith.addf %118, %119 : vector<109x32xf32>
    %c0_61 = arith.constant 0 : index
    %c0_62 = arith.constant 0 : index
    %121 = vector.load %arg18[%c0_61, %c0_62] : memref<32x2xf32, #tpu.memory_space<vmem>>, vector<32x2xf32>
    %cst_63 = arith.constant dense<0.000000e+00> : vector<109x2xf32>
    %122 = tpu.matmul %120, %121, %cst_63 {dimension_numbers = #tpu.dot_dimension_numbers<[1], [0], [0], [1], [0, 0, 1, 1], [], []>} : vector<109x32xf32>, vector<32x2xf32>, vector<109x2xf32> -> vector<109x2xf32>
    %c0_64 = arith.constant 0 : index
    %c0_65 = arith.constant 0 : index
    %123 = vector.load %arg19[%c0_64, %c0_65] : memref<1x2xf32, #tpu.memory_space<vmem>>, vector<1x2xf32>
    %124 = vector.broadcast %123 : vector<1x2xf32> to vector<109x2xf32>
    %125 = arith.addf %122, %124 : vector<109x2xf32>
    %c0_66 = arith.constant 0 : index
    %c0_67 = arith.constant 0 : index
    %c0_68 = arith.constant 0 : index
    %126 = vector.load %arg20[%c0_66, %c0_67, %c0_68] : memref<1x109x2xf32, #tpu.memory_space<vmem>>, vector<1x109x2xf32>
    %127 = vector.shape_cast %126 : vector<1x109x2xf32> to vector<109x2xf32>
    %128 = vector.shape_cast %125 : vector<109x2xf32> to vector<1x109x2xf32>
    tpu.vector_store %arg20[%c0_66, %c0_67, %c0_68], %128 {strides = array<i32>} : memref<1x109x2xf32, #tpu.memory_space<vmem>>, vector<1x109x2xf32>,
    return
  }
  func.func @transform_0(%arg0: i32) -> (i32, i32, i32) {
    %c0_i32 = arith.constant 0 : i32
    %c0_i32_0 = arith.constant 0 : i32
    %c0_i32_1 = arith.constant 0 : i32
    return %arg0, %c0_i32, %c0_i32_0 : i32, i32, i32
  }
  func.func @transform_1(%arg0: i32) -> (i32, i32) {
    %c0_i32 = arith.constant 0 : i32
    %c0_i32_0 = arith.constant 0 : i32
    %c0_i32_1 = arith.constant 0 : i32
    return %c0_i32, %c0_i32_0 : i32, i32
  }
  func.func @transform_2(%arg0: i32) -> (i32, i32) {
    %c0_i32 = arith.constant 0 : i32
    %c0_i32_0 = arith.constant 0 : i32
    %c0_i32_1 = arith.constant 0 : i32
    return %c0_i32, %c0_i32_0 : i32, i32
  }
  func.func @transform_3(%arg0: i32) -> (i32, i32) {
    %c0_i32 = arith.constant 0 : i32
    %c0_i32_0 = arith.constant 0 : i32
    %c0_i32_1 = arith.constant 0 : i32
    return %c0_i32, %c0_i32_0 : i32, i32
  }
  func.func @transform_4(%arg0: i32) -> (i32, i32) {
    %c0_i32 = arith.constant 0 : i32
    %c0_i32_0 = arith.constant 0 : i32
    %c0_i32_1 = arith.constant 0 : i32
    return %c0_i32, %c0_i32_0 : i32, i32
  }
  func.func @transform_5(%arg0: i32) -> (i32, i32) {
    %c0_i32 = arith.constant 0 : i32
    %c0_i32_0 = arith.constant 0 : i32
    %c0_i32_1 = arith.constant 0 : i32
    return %c0_i32, %c0_i32_0 : i32, i32
  }
  func.func @transform_6(%arg0: i32) -> (i32, i32) {
    %c0_i32 = arith.constant 0 : i32
    %c0_i32_0 = arith.constant 0 : i32
    %c0_i32_1 = arith.constant 0 : i32
    return %c0_i32, %c0_i32_0 : i32, i32
  }
  func.func @transform_7(%arg0: i32) -> (i32, i32) {
    %c0_i32 = arith.constant 0 : i32
    %c0_i32_0 = arith.constant 0 : i32
    %c0_i32_1 = arith.constant 0 : i32
    return %c0_i32, %c0_i32_0 : i32, i32
  }
  func.func @transform_8(%arg0: i32) -> (i32, i32) {
    %c0_i32 = arith.constant 0 : i32
    %c0_i32_0 = arith.constant 0 : i32
    %c0_i32_1 = arith.constant 0 : i32
    return %c0_i32, %c0_i32_0 : i32, i32
  }
  func.func @transform_9(%arg0: i32) -> (i32, i32) {
    %c0_i32 = arith.constant 0 : i32
    %c0_i32_0 = arith.constant 0 : i32
    %c0_i32_1 = arith.constant 0 : i32
    return %c0_i32, %c0_i32_0 : i32, i32
  }
  func.func @transform_10(%arg0: i32) -> (i32, i32) {
    %c0_i32 = arith.constant 0 : i32
    %c0_i32_0 = arith.constant 0 : i32
    %c0_i32_1 = arith.constant 0 : i32
    return %c0_i32, %c0_i32_0 : i32, i32
  }
  func.func @transform_11(%arg0: i32) -> (i32, i32) {
    %c0_i32 = arith.constant 0 : i32
    %c0_i32_0 = arith.constant 0 : i32
    %c0_i32_1 = arith.constant 0 : i32
    return %c0_i32, %c0_i32_0 : i32, i32
  }
  func.func @transform_12(%arg0: i32) -> (i32, i32) {
    %c0_i32 = arith.constant 0 : i32
    %c0_i32_0 = arith.constant 0 : i32
    %c0_i32_1 = arith.constant 0 : i32
    return %c0_i32, %c0_i32_0 : i32, i32
  }
  func.func @transform_13(%arg0: i32) -> (i32, i32) {
    %c0_i32 = arith.constant 0 : i32
    %c0_i32_0 = arith.constant 0 : i32
    %c0_i32_1 = arith.constant 0 : i32
    return %c0_i32, %c0_i32_0 : i32, i32
  }
  func.func @transform_14(%arg0: i32) -> (i32, i32) {
    %c0_i32 = arith.constant 0 : i32
    %c0_i32_0 = arith.constant 0 : i32
    %c0_i32_1 = arith.constant 0 : i32
    return %c0_i32, %c0_i32_0 : i32, i32
  }
  func.func @transform_15(%arg0: i32) -> (i32, i32) {
    %c0_i32 = arith.constant 0 : i32
    %c0_i32_0 = arith.constant 0 : i32
    %c0_i32_1 = arith.constant 0 : i32
    return %c0_i32, %c0_i32_0 : i32, i32
  }
  func.func @transform_16(%arg0: i32) -> (i32, i32) {
    %c0_i32 = arith.constant 0 : i32
    %c0_i32_0 = arith.constant 0 : i32
    %c0_i32_1 = arith.constant 0 : i32
    return %c0_i32, %c0_i32_0 : i32, i32
  }
  func.func @transform_17(%arg0: i32) -> (i32, i32) {
    %c0_i32 = arith.constant 0 : i32
    %c0_i32_0 = arith.constant 0 : i32
    %c0_i32_1 = arith.constant 0 : i32
    return %c0_i32, %c0_i32_0 : i32, i32
  }
  func.func @transform_18(%arg0: i32) -> (i32, i32) {
    %c0_i32 = arith.constant 0 : i32
    %c0_i32_0 = arith.constant 0 : i32
    %c0_i32_1 = arith.constant 0 : i32
    return %c0_i32, %c0_i32_0 : i32, i32
  }
  func.func @transform_19(%arg0: i32) -> (i32, i32, i32) {
    %c0_i32 = arith.constant 0 : i32
    %c0_i32_0 = arith.constant 0 : i32
    %c0_i32_1 = arith.constant 0 : i32
    return %arg0, %c0_i32, %c0_i32_0 : i32, i32, i32
  }
}

</mosaic_0001>

<llo_original>
// kernel: mlp_forward.2
$region0: #{mlp_forward.2}
  #allocation0 [shape = 'u32[]', space=smem, size = 0x4, offset = 0x4, fixed_abs, tag = 'smem constant byte address 0x4 - core index']
  #allocation1 [shape = 'u32[72,128]{1,0:T(1,128)}', space=vmem, size = 0x9000, scoped, tag = 'internal scratch']
  %s0 = inlined_call_operand.vmem [shape: f32[2,109,16], index: 0, kind: input, shape index: {}]
  %s1 = inlined_call_operand.vmem [shape: f32[16,32], index: 1, kind: input, shape index: {}]
  %s2 = inlined_call_operand.vmem [shape: f32[1,32], index: 2, kind: input, shape index: {}]
  %s3 = inlined_call_operand.vmem [shape: f32[1,32], index: 3, kind: input, shape index: {}, may-alias: {3,9,15}]
  %s4 = inlined_call_operand.vmem [shape: f32[1,32], index: 4, kind: input, shape index: {}, may-alias: {4,10,16}]
  %s5 = inlined_call_operand.vmem [shape: f32[109,32], index: 5, kind: input, shape index: {}]
  %s6 = inlined_call_operand.vmem [shape: f32[1,32], index: 6, kind: input, shape index: {}]
  %s7 = inlined_call_operand.vmem [shape: f32[32,109], index: 7, kind: input, shape index: {}]
  %s8 = inlined_call_operand.hbm [shape: f32[109,1], index: 8, kind: input, shape index: {}]
  %s9 = inlined_call_operand.vmem [shape: f32[1,32], index: 9, kind: input, shape index: {}, may-alias: {3,9,15}]
  %s10 = inlined_call_operand.vmem [shape: f32[1,32], index: 10, kind: input, shape index: {}, may-alias: {4,10,16}]
  %s11 = inlined_call_operand.vmem [shape: f32[32,32], index: 11, kind: input, shape index: {}]
  %s12 = inlined_call_operand.vmem [shape: f32[1,32], index: 12, kind: input, shape index: {}]
  %s13 = inlined_call_operand.vmem [shape: f32[32,32], index: 13, kind: input, shape index: {}]
  %s14 = inlined_call_operand.vmem [shape: f32[1,32], index: 14, kind: input, shape index: {}]
  %s15 = inlined_call_operand.vmem [shape: f32[1,32], index: 15, kind: input, shape index: {}, may-alias: {3,9,15}]
  %s16 = inlined_call_operand.vmem [shape: f32[1,32], index: 16, kind: input, shape index: {}, may-alias: {4,10,16}]
  %s17 = inlined_call_operand.vmem [shape: f32[32,2], index: 17, kind: input, shape index: {}]
  %s18 = inlined_call_operand.vmem [shape: f32[1,2], index: 18, kind: input, shape index: {}]
  %s19 = inlined_call_operand.vmem [shape: f32[2,109,2], index: 19, kind: output, shape index: {}]
  %s20 = sld [smem:[#allocation0]]
  $region113: #{mlp_forward.2} parent=0
    _
  %s22 = ssub.s32 1, %s20
  %s23 = scalar_select 0, %s22, %s20
  $region1: #{mlp_forward.2} parent=0
    #allocation2 [shape = 'u8[57344]{0}', space=vmem, size = 0xe000, scoped, tag = 'input window, operand 8, single buffered']
    #allocation3 [shape = 's32[2]{0}', space=sflag, size = 0x8, scoped, tag = 'scoped memory for mlp_forward.2']
    %24 = vsyncpa [#allocation3], 0
    loop: start=0, step=1, limit=4
    $region2: #{mlp_forward.2} parent=1 // loop_pre_header
      _
    $region3: #{mlp_forward.2} parent=1 // loop_header
      %s26 = sphi 0, %s30
      %p27 = scmp.ge.s32.totalorder %s26, 4
      %s36 = sphi 0, %s38
      %s39 = sphi 0, %s36
      %s40 = sphi 0, %s39
      %s56 = sphi 0, %s40
      %s60 = sphi 0, %s60
      %s62 = sphi 0, %s60
      %s63 = sphi 0, %s62
      %s77 = sphi 0, %s63
      %s81 = sphi 0, %s81
      %s83 = sphi 0, %s81
      %s84 = sphi 0, %s83
      %s98 = sphi 0, %s84
      %s102 = sphi 0, %s102
      %s104 = sphi 0, %s102
      %s105 = sphi 0, %s104
      %s119 = sphi 0, %s105
      %s123 = sphi 0, %s123
      %s125 = sphi 0, %s123
      %s126 = sphi 0, %s125
      %s140 = sphi 0, %s126
      %s144 = sphi 0, %s144
      %s146 = sphi 0, %s144
      %s147 = sphi 0, %s146
      %s161 = sphi 0, %s147
      %s165 = sphi 0, %s165
      %s167 = sphi 0, %s165
      %s168 = sphi 0, %s167
      %s182 = sphi 0, %s168
      %s186 = sphi 0, %s186
      %s188 = sphi 0, %s186
      %s189 = sphi 0, %s188
      %s203 = sphi 0, %s189
      %s207 = sphi 0, %s207
      %s209 = sphi 0, %s207
      %s210 = sphi 0, %s209
      %s224 = sphi 0, %s210
      %s228 = sphi 0, %s228
      %s230 = sphi 0, %s228
      %s231 = sphi 0, %s230
      %s245 = sphi 0, %s231
      %s249 = sphi 0, %s249
      %s251 = sphi 0, %s249
      %s252 = sphi 0, %s251
      %s266 = sphi 0, %s252
      %s270 = sphi 0, %s270
      %s272 = sphi 0, %s270
      %s273 = sphi 0, %s272
      %s287 = sphi 0, %s273
      %s291 = sphi 0, %s291
      %s293 = sphi 0, %s291
      %s294 = sphi 0, %s293
      %s308 = sphi 0, %s294
      %s312 = sphi 0, %s312
      %s314 = sphi 0, %s312
      %s315 = sphi 0, %s314
      %s329 = sphi 0, %s315
      %s333 = sphi 0, %s333
      %s335 = sphi 0, %s333
      %s336 = sphi 0, %s335
      %s350 = sphi 0, %s336
      %s354 = sphi 0, %s354
      %s356 = sphi 0, %s354
      %s357 = sphi 0, %s356
      %s371 = sphi 0, %s357
      %s375 = sphi 0, %s375
      %s377 = sphi 0, %s375
      %s378 = sphi 0, %s377
      %s392 = sphi 0, %s378
      %s396 = sphi 0, %s396
      %s398 = sphi 0, %s396
      %s399 = sphi 0, %s398
      %s413 = sphi 0, %s399
      %s417 = sphi 0, %s417
      %s419 = sphi 0, %s417
      %s420 = sphi 0, %s419
      %s434 = sphi 0, %s420
      %s440 = sphi 0, %s442
      %s443 = sphi 0, %s440
      %s444 = sphi 0, %s443
      %s460 = sphi 0, %s444
    $region4: #{mlp_forward.2} parent=1 // loop_header_branch
      %29 = sbr.rel (%p27) target = $region8
    $region5: #{mlp_forward.2} parent=1 // loop_body
      %s31 = ssub.s32 %s26, 1
      %s32 = ssub.s32 %s26, 2
      %s33 = sadd.s32 %s26, 1
      %s34 = ssub.s32 %s26, %s33
      %p35 = scmp.eq.s32.totalorder %s34, 0
      %s37 = sadd.s32 %s36, 1
      %s38 = scalar_select %p35, %s36, %s37
      %p41 = pneg %p35
      %p42 = scmp.eq.s32.totalorder %s26, 1
      %p43 = por %p41, %p42
      %p44 = scmp.ne.s32.totalorder %s36, %s39
      %p45 = scmp.eq.s32.totalorder %s26, 0
      %p46 = por %p44, %p45
      %p47 = scmp.ne.s32.totalorder %s36, %s39
      %p48 = scmp.eq.s32.totalorder %s31, 1
      %p49 = por %p47, %p48
      %p50 = scmp.ne.s32.totalorder %s39, %s40
      %p51 = scmp.eq.s32.totalorder %s31, 0
      %p52 = por %p50, %p51
      %p53 = scmp.ne.s32.totalorder %s39, %s40
      %p54 = scmp.eq.s32.totalorder %s32, 1
      %p55 = por %p53, %p54
      %p57 = scmp.ne.s32.totalorder %s40, %s56
      %p58 = scmp.eq.s32.totalorder %s32, 0
      %p59 = por %p57, %p58
      %s61 = sadd.s32 %s60, 1
      %p64 = scmp.eq.s32.totalorder %s26, 1
      %p65 = scmp.ne.s32.totalorder %s60, %s62
      %p66 = scmp.eq.s32.totalorder %s26, 0
      %p67 = por %p65, %p66
      %p68 = scmp.ne.s32.totalorder %s60, %s62
      %p69 = scmp.eq.s32.totalorder %s31, 1
      %p70 = por %p68, %p69
      %p71 = scmp.ne.s32.totalorder %s62, %s63
      %p72 = scmp.eq.s32.totalorder %s31, 0
      %p73 = por %p71, %p72
      %p74 = scmp.ne.s32.totalorder %s62, %s63
      %p75 = scmp.eq.s32.totalorder %s32, 1
      %p76 = por %p74, %p75
      %p78 = scmp.ne.s32.totalorder %s63, %s77
      %p79 = scmp.eq.s32.totalorder %s32, 0
      %p80 = por %p78, %p79
      %s82 = sadd.s32 %s81, 1
      %p85 = scmp.eq.s32.totalorder %s26, 1
      %p86 = scmp.ne.s32.totalorder %s81, %s83
      %p87 = scmp.eq.s32.totalorder %s26, 0
      %p88 = por %p86, %p87
      %p89 = scmp.ne.s32.totalorder %s81, %s83
      %p90 = scmp.eq.s32.totalorder %s31, 1
      %p91 = por %p89, %p90
      %p92 = scmp.ne.s32.totalorder %s83, %s84
      %p93 = scmp.eq.s32.totalorder %s31, 0
      %p94 = por %p92, %p93
      %p95 = scmp.ne.s32.totalorder %s83, %s84
      %p96 = scmp.eq.s32.totalorder %s32, 1
      %p97 = por %p95, %p96
      %p99 = scmp.ne.s32.totalorder %s84, %s98
      %p100 = scmp.eq.s32.totalorder %s32, 0
      %p101 = por %p99, %p100
      %s103 = sadd.s32 %s102, 1
      %p106 = scmp.eq.s32.totalorder %s26, 1
      %p107 = scmp.ne.s32.totalorder %s102, %s104
      %p108 = scmp.eq.s32.totalorder %s26, 0
      %p109 = por %p107, %p108
      %p110 = scmp.ne.s32.totalorder %s102, %s104
      %p111 = scmp.eq.s32.totalorder %s31, 1
      %p112 = por %p110, %p111
      %p113 = scmp.ne.s32.totalorder %s104, %s105
      %p114 = scmp.eq.s32.totalorder %s31, 0
      %p115 = por %p113, %p114
      %p116 = scmp.ne.s32.totalorder %s104, %s105
      %p117 = scmp.eq.s32.totalorder %s32, 1
      %p118 = por %p116, %p117
      %p120 = scmp.ne.s32.totalorder %s105, %s119
      %p121 = scmp.eq.s32.totalorder %s32, 0
      %p122 = por %p120, %p121
      %s124 = sadd.s32 %s123, 1
      %p127 = scmp.eq.s32.totalorder %s26, 1
      %p128 = scmp.ne.s32.totalorder %s123, %s125
      %p129 = scmp.eq.s32.totalorder %s26, 0
      %p130 = por %p128, %p129
      %p131 = scmp.ne.s32.totalorder %s123, %s125
      %p132 = scmp.eq.s32.totalorder %s31, 1
      %p133 = por %p131, %p132
      %p134 = scmp.ne.s32.totalorder %s125, %s126
      %p135 = scmp.eq.s32.totalorder %s31, 0
      %p136 = por %p134, %p135
      %p137 = scmp.ne.s32.totalorder %s125, %s126
      %p138 = scmp.eq.s32.totalorder %s32, 1
      %p139 = por %p137, %p138
      %p141 = scmp.ne.s32.totalorder %s126, %s140
      %p142 = scmp.eq.s32.totalorder %s32, 0
      %p143 = por %p141, %p142
      %s145 = sadd.s32 %s144, 1
      %p148 = scmp.eq.s32.totalorder %s26, 1
      %p149 = scmp.ne.s32.totalorder %s144, %s146
      %p150 = scmp.eq.s32.totalorder %s26, 0
      %p151 = por %p149, %p150
      %p152 = scmp.ne.s32.totalorder %s144, %s146
      %p153 = scmp.eq.s32.totalorder %s31, 1
      %p154 = por %p152, %p153
      %p155 = scmp.ne.s32.totalorder %s146, %s147
      %p156 = scmp.eq.s32.totalorder %s31, 0
      %p157 = por %p155, %p156
      %p158 = scmp.ne.s32.totalorder %s146, %s147
      %p159 = scmp.eq.s32.totalorder %s32, 1
      %p160 = por %p158, %p159
      %p162 = scmp.ne.s32.totalorder %s147, %s161
      %p163 = scmp.eq.s32.totalorder %s32, 0
      %p164 = por %p162, %p163
      %s166 = sadd.s32 %s165, 1
      %p169 = scmp.eq.s32.totalorder %s26, 1
      %p170 = scmp.ne.s32.totalorder %s165, %s167
      %p171 = scmp.eq.s32.totalorder %s26, 0
      %p172 = por %p170, %p171
      %p173 = scmp.ne.s32.totalorder %s165, %s167
      %p174 = scmp.eq.s32.totalorder %s31, 1
      %p175 = por %p173, %p174
      %p176 = scmp.ne.s32.totalorder %s167, %s168
      %p177 = scmp.eq.s32.totalorder %s31, 0
      %p178 = por %p176, %p177
      %p179 = scmp.ne.s32.totalorder %s167, %s168
      %p180 = scmp.eq.s32.totalorder %s32, 1
      %p181 = por %p179, %p180
      %p183 = scmp.ne.s32.totalorder %s168, %s182
      %p184 = scmp.eq.s32.totalorder %s32, 0
      %p185 = por %p183, %p184
      %s187 = sadd.s32 %s186, 1
      %p190 = scmp.eq.s32.totalorder %s26, 1
      %p191 = scmp.ne.s32.totalorder %s186, %s188
      %p192 = scmp.eq.s32.totalorder %s26, 0
      %p193 = por %p191, %p192
      %p194 = scmp.ne.s32.totalorder %s186, %s188
      %p195 = scmp.eq.s32.totalorder %s31, 1
      %p196 = por %p194, %p195
      %p197 = scmp.ne.s32.totalorder %s188, %s189
      %p198 = scmp.eq.s32.totalorder %s31, 0
      %p199 = por %p197, %p198
      %p200 = scmp.ne.s32.totalorder %s188, %s189
      %p201 = scmp.eq.s32.totalorder %s32, 1
      %p202 = por %p200, %p201
      %p204 = scmp.ne.s32.totalorder %s189, %s203
      %p205 = scmp.eq.s32.totalorder %s32, 0
      %p206 = por %p204, %p205
      %s208 = sadd.s32 %s207, 1
      %p211 = scmp.eq.s32.totalorder %s26, 1
      %p212 = scmp.ne.s32.totalorder %s207, %s209
      %p213 = scmp.eq.s32.totalorder %s26, 0
      %p214 = por %p212, %p213
      %p215 = scmp.ne.s32.totalorder %s207, %s209
      %p216 = scmp.eq.s32.totalorder %s31, 1
      %p217 = por %p215, %p216
      %p218 = scmp.ne.s32.totalorder %s209, %s210
      %p219 = scmp.eq.s32.totalorder %s31, 0
      %p220 = por %p218, %p219
      %p221 = scmp.ne.s32.totalorder %s209, %s210
      %p222 = scmp.eq.s32.totalorder %s32, 1
      %p223 = por %p221, %p222
      %p225 = scmp.ne.s32.totalorder %s210, %s224
      %p226 = scmp.eq.s32.totalorder %s32, 0
      %p227 = por %p225, %p226
      %s229 = sadd.s32 %s228, 1
      %p232 = scmp.eq.s32.totalorder %s26, 1
      %p233 = scmp.ne.s32.totalorder %s228, %s230
      %p234 = scmp.eq.s32.totalorder %s26, 0
      %p235 = por %p233, %p234
      %p236 = scmp.ne.s32.totalorder %s228, %s230
      %p237 = scmp.eq.s32.totalorder %s31, 1
      %p238 = por %p236, %p237
      %p239 = scmp.ne.s32.totalorder %s230, %s231
      %p240 = scmp.eq.s32.totalorder %s31, 0
      %p241 = por %p239, %p240
      %p242 = scmp.ne.s32.totalorder %s230, %s231
      %p243 = scmp.eq.s32.totalorder %s32, 1
      %p244 = por %p242, %p243
      %p246 = scmp.ne.s32.totalorder %s231, %s245
      %p247 = scmp.eq.s32.totalorder %s32, 0
      %p248 = por %p246, %p247
      %s250 = sadd.s32 %s249, 1
      %p253 = scmp.eq.s32.totalorder %s26, 1
      %p254 = scmp.ne.s32.totalorder %s249, %s251
      %p255 = scmp.eq.s32.totalorder %s26, 0
      %p256 = por %p254, %p255
      %p257 = scmp.ne.s32.totalorder %s249, %s251
      %p258 = scmp.eq.s32.totalorder %s31, 1
      %p259 = por %p257, %p258
      %p260 = scmp.ne.s32.totalorder %s251, %s252
      %p261 = scmp.eq.s32.totalorder %s31, 0
      %p262 = por %p260, %p261
      %p263 = scmp.ne.s32.totalorder %s251, %s252
      %p264 = scmp.eq.s32.totalorder %s32, 1
      %p265 = por %p263, %p264
      %p267 = scmp.ne.s32.totalorder %s252, %s266
      %p268 = scmp.eq.s32.totalorder %s32, 0
      %p269 = por %p267, %p268
      %s271 = sadd.s32 %s270, 1
      %p274 = scmp.eq.s32.totalorder %s26, 1
      %p275 = scmp.ne.s32.totalorder %s270, %s272
      %p276 = scmp.eq.s32.totalorder %s26, 0
      %p277 = por %p275, %p276
      %p278 = scmp.ne.s32.totalorder %s270, %s272
      %p279 = scmp.eq.s32.totalorder %s31, 1
      %p280 = por %p278, %p279
      %p281 = scmp.ne.s32.totalorder %s272, %s273
      %p282 = scmp.eq.s32.totalorder %s31, 0
      %p283 = por %p281, %p282
      %p284 = scmp.ne.s32.totalorder %s272, %s273
      %p285 = scmp.eq.s32.totalorder %s32, 1
      %p286 = por %p284, %p285
      %p288 = scmp.ne.s32.totalorder %s273, %s287
      %p289 = scmp.eq.s32.totalorder %s32, 0
      %p290 = por %p288, %p289
      %s292 = sadd.s32 %s291, 1
      %p295 = scmp.eq.s32.totalorder %s26, 1
      %p296 = scmp.ne.s32.totalorder %s291, %s293
      %p297 = scmp.eq.s32.totalorder %s26, 0
      %p298 = por %p296, %p297
      %p299 = scmp.ne.s32.totalorder %s291, %s293
      %p300 = scmp.eq.s32.totalorder %s31, 1
      %p301 = por %p299, %p300
      %p302 = scmp.ne.s32.totalorder %s293, %s294
      %p303 = scmp.eq.s32.totalorder %s31, 0
      %p304 = por %p302, %p303
      %p305 = scmp.ne.s32.totalorder %s293, %s294
      %p306 = scmp.eq.s32.totalorder %s32, 1
      %p307 = por %p305, %p306
      %p309 = scmp.ne.s32.totalorder %s294, %s308
      %p310 = scmp.eq.s32.totalorder %s32, 0
      %p311 = por %p309, %p310
      %s313 = sadd.s32 %s312, 1
      %p316 = scmp.eq.s32.totalorder %s26, 1
      %p317 = scmp.ne.s32.totalorder %s312, %s314
      %p318 = scmp.eq.s32.totalorder %s26, 0
      %p319 = por %p317, %p318
      %p320 = scmp.ne.s32.totalorder %s312, %s314
      %p321 = scmp.eq.s32.totalorder %s31, 1
      %p322 = por %p320, %p321
      %p323 = scmp.ne.s32.totalorder %s314, %s315
      %p324 = scmp.eq.s32.totalorder %s31, 0
      %p325 = por %p323, %p324
      %p326 = scmp.ne.s32.totalorder %s314, %s315
      %p327 = scmp.eq.s32.totalorder %s32, 1
      %p328 = por %p326, %p327
      %p330 = scmp.ne.s32.totalorder %s315, %s329
      %p331 = scmp.eq.s32.totalorder %s32, 0
      %p332 = por %p330, %p331
      %s334 = sadd.s32 %s333, 1
      %p337 = scmp.eq.s32.totalorder %s26, 1
      %p338 = scmp.ne.s32.totalorder %s333, %s335
      %p339 = scmp.eq.s32.totalorder %s26, 0
      %p340 = por %p338, %p339
      %p341 = scmp.ne.s32.totalorder %s333, %s335
      %p342 = scmp.eq.s32.totalorder %s31, 1
      %p343 = por %p341, %p342
      %p344 = scmp.ne.s32.totalorder %s335, %s336
      %p345 = scmp.eq.s32.totalorder %s31, 0
      %p346 = por %p344, %p345
      %p347 = scmp.ne.s32.totalorder %s335, %s336
      %p348 = scmp.eq.s32.totalorder %s32, 1
      %p349 = por %p347, %p348
      %p351 = scmp.ne.s32.totalorder %s336, %s350
      %p352 = scmp.eq.s32.totalorder %s32, 0
      %p353 = por %p351, %p352
      %s355 = sadd.s32 %s354, 1
      %p358 = scmp.eq.s32.totalorder %s26, 1
      %p359 = scmp.ne.s32.totalorder %s354, %s356
      %p360 = scmp.eq.s32.totalorder %s26, 0
      %p361 = por %p359, %p360
      %p362 = scmp.ne.s32.totalorder %s354, %s356
      %p363 = scmp.eq.s32.totalorder %s31, 1
      %p364 = por %p362, %p363
      %p365 = scmp.ne.s32.totalorder %s356, %s357
      %p366 = scmp.eq.s32.totalorder %s31, 0
      %p367 = por %p365, %p366
      %p368 = scmp.ne.s32.totalorder %s356, %s357
      %p369 = scmp.eq.s32.totalorder %s32, 1
      %p370 = por %p368, %p369
      %p372 = scmp.ne.s32.totalorder %s357, %s371
      %p373 = scmp.eq.s32.totalorder %s32, 0
      %p374 = por %p372, %p373
      %s376 = sadd.s32 %s375, 1
      %p379 = scmp.eq.s32.totalorder %s26, 1
      %p380 = scmp.ne.s32.totalorder %s375, %s377
      %p381 = scmp.eq.s32.totalorder %s26, 0
      %p382 = por %p380, %p381
      %p383 = scmp.ne.s32.totalorder %s375, %s377
      %p384 = scmp.eq.s32.totalorder %s31, 1
      %p385 = por %p383, %p384
      %p386 = scmp.ne.s32.totalorder %s377, %s378
      %p387 = scmp.eq.s32.totalorder %s31, 0
      %p388 = por %p386, %p387
      %p389 = scmp.ne.s32.totalorder %s377, %s378
      %p390 = scmp.eq.s32.totalorder %s32, 1
      %p391 = por %p389, %p390
      %p393 = scmp.ne.s32.totalorder %s378, %s392
      %p394 = scmp.eq.s32.totalorder %s32, 0
      %p395 = por %p393, %p394
      %s397 = sadd.s32 %s396, 1
      %p400 = scmp.eq.s32.totalorder %s26, 1
      %p401 = scmp.ne.s32.totalorder %s396, %s398
      %p402 = scmp.eq.s32.totalorder %s26, 0
      %p403 = por %p401, %p402
      %p404 = scmp.ne.s32.totalorder %s396, %s398
      %p405 = scmp.eq.s32.totalorder %s31, 1
      %p406 = por %p404, %p405
      %p407 = scmp.ne.s32.totalorder %s398, %s399
      %p408 = scmp.eq.s32.totalorder %s31, 0
      %p409 = por %p407, %p408
      %p410 = scmp.ne.s32.totalorder %s398, %s399
      %p411 = scmp.eq.s32.totalorder %s32, 1
      %p412 = por %p410, %p411
      %p414 = scmp.ne.s32.totalorder %s399, %s413
      %p415 = scmp.eq.s32.totalorder %s32, 0
      %p416 = por %p414, %p415
      %s418 = sadd.s32 %s417, 1
      %p421 = scmp.eq.s32.totalorder %s26, 1
      %p422 = scmp.ne.s32.totalorder %s417, %s419
      %p423 = scmp.eq.s32.totalorder %s26, 0
      %p424 = por %p422, %p423
      %p425 = scmp.ne.s32.totalorder %s417, %s419
      %p426 = scmp.eq.s32.totalorder %s31, 1
      %p427 = por %p425, %p426
      %p428 = scmp.ne.s32.totalorder %s419, %s420
      %p429 = scmp.eq.s32.totalorder %s31, 0
      %p430 = por %p428, %p429
      %p431 = scmp.ne.s32.totalorder %s419, %s420
      %p432 = scmp.eq.s32.totalorder %s32, 1
      %p433 = por %p431, %p432
      %p435 = scmp.ne.s32.totalorder %s420, %s434
      %p436 = scmp.eq.s32.totalorder %s32, 0
      %p437 = por %p435, %p436
      %s438 = ssub.s32 %s26, %s33
      %p439 = scmp.eq.s32.totalorder %s438, 0
      %s441 = sadd.s32 %s440, 1
      %s442 = scalar_select %p439, %s440, %s441
      %p445 = pneg %p439
      %p446 = scmp.eq.s32.totalorder %s26, 1
      %p447 = por %p445, %p446
      %p448 = scmp.ne.s32.totalorder %s440, %s443
      %p449 = scmp.eq.s32.totalorder %s26, 0
      %p450 = por %p448, %p449
      %p451 = scmp.ne.s32.totalorder %s440, %s443
      %p452 = scmp.eq.s32.totalorder %s31, 1
      %p453 = por %p451, %p452
      %p454 = scmp.ne.s32.totalorder %s443, %s444
      %p455 = scmp.eq.s32.totalorder %s31, 0
      %p456 = por %p454, %p455
      %p457 = scmp.ne.s32.totalorder %s443, %s444
      %p458 = scmp.eq.s32.totalorder %s32, 1
      %p459 = por %p457, %p458
      %p461 = scmp.ne.s32.totalorder %s444, %s460
      %p462 = scmp.eq.s32.totalorder %s32, 0
      %p463 = por %p461, %p462
      %p464 = scmp.le.s32.totalorder 1, %s26
      %p465 = scmp.lt.s32.totalorder %s26, 3
      %p466 = pnand %p464, %p465
      %p467 = pneg %p466
      // Predicated region
      $region9: #{mlp_forward.2} parent=5 // pred_check
        _
      $region10: #{mlp_forward.2} parent=5 // pred_check_branch
        %469 = sbr.rel (%p466) target = $region12
      $region11: #{mlp_forward.2} parent=5 // pred_region
        %s470 = ssub.s32 %s26, 1
        // Predicated region
        $region13: #{mlp_forward.2} parent=11 // pred_check
          %p471 = pneg %p73
        $region14: #{mlp_forward.2} parent=11 // pred_check_branch
          %473 = sbr.rel (%p471) target = $region16
        $region15: #{mlp_forward.2} parent=11 // pred_region
          _
        $region16: #{mlp_forward.2} parent=11 // pred_fallthru
          _
        // Predicated region
        $region17: #{mlp_forward.2} parent=11 // pred_check
          %p474 = pneg %p94
        $region18: #{mlp_forward.2} parent=11 // pred_check_branch
          %476 = sbr.rel (%p474) target = $region20
        $region19: #{mlp_forward.2} parent=11 // pred_region
          _
        $region20: #{mlp_forward.2} parent=11 // pred_fallthru
          _
        // Predicated region
        $region21: #{mlp_forward.2} parent=11 // pred_check
          %p477 = pneg %p115
        $region22: #{mlp_forward.2} parent=11 // pred_check_branch
          %479 = sbr.rel (%p477) target = $region24
        $region23: #{mlp_forward.2} parent=11 // pred_region
          _
        $region24: #{mlp_forward.2} parent=11 // pred_fallthru
          _
        // Predicated region
        $region25: #{mlp_forward.2} parent=11 // pred_check
          %p480 = pneg %p136
        $region26: #{mlp_forward.2} parent=11 // pred_check_branch
          %482 = sbr.rel (%p480) target = $region28
        $region27: #{mlp_forward.2} parent=11 // pred_region
          _
        $region28: #{mlp_forward.2} parent=11 // pred_fallthru
          _
        // Predicated region
        $region29: #{mlp_forward.2} parent=11 // pred_check
          %p483 = pneg %p157
        $region30: #{mlp_forward.2} parent=11 // pred_check_branch
          %485 = sbr.rel (%p483) target = $region32
        $region31: #{mlp_forward.2} parent=11 // pred_region
          _
        $region32: #{mlp_forward.2} parent=11 // pred_fallthru
          _
        // Predicated region
        $region33: #{mlp_forward.2} parent=11 // pred_check
          %p486 = pneg %p178
        $region34: #{mlp_forward.2} parent=11 // pred_check_branch
          %488 = sbr.rel (%p486) target = $region36
        $region35: #{mlp_forward.2} parent=11 // pred_region
          _
        $region36: #{mlp_forward.2} parent=11 // pred_fallthru
          _
        // Predicated region
        $region37: #{mlp_forward.2} parent=11 // pred_check
          %p489 = pneg %p199
        $region38: #{mlp_forward.2} parent=11 // pred_check_branch
          %491 = sbr.rel (%p489) target = $region40
        $region39: #{mlp_forward.2} parent=11 // pred_region
          _
        $region40: #{mlp_forward.2} parent=11 // pred_fallthru
          _
        // Predicated region
        $region41: #{mlp_forward.2} parent=11 // pred_check
          %p492 = pneg %p220
        $region42: #{mlp_forward.2} parent=11 // pred_check_branch
          %494 = sbr.rel (%p492) target = $region44
        $region43: #{mlp_forward.2} parent=11 // pred_region
          %496 = vsyncadd [#allocation3], 0
          %s497 = sshll.u32 %s8, 4
          %s498 = int_to_ptr.hbm [resolvable:$true] %s497
          %s499 = sshll.u32 [#allocation2], 4
          %s500 = int_to_ptr.vmem [resolvable:$true] %s499
          %505 = dma.hbm_to_vmem [thread:$0]  %s498, 1792, %s500, [#allocation3], 128, 128, 8
        $region44: #{mlp_forward.2} parent=11 // pred_fallthru
          _
        // Predicated region
        $region45: #{mlp_forward.2} parent=11 // pred_check
          %p506 = pneg %p241
        $region46: #{mlp_forward.2} parent=11 // pred_check_branch
          %508 = sbr.rel (%p506) target = $region48
        $region47: #{mlp_forward.2} parent=11 // pred_region
          _
        $region48: #{mlp_forward.2} parent=11 // pred_fallthru
          _
        // Predicated region
        $region49: #{mlp_forward.2} parent=11 // pred_check
          %p509 = pneg %p262
        $region50: #{mlp_forward.2} parent=11 // pred_check_branch
          %511 = sbr.rel (%p509) target = $region52
        $region51: #{mlp_forward.2} parent=11 // pred_region
          _
        $region52: #{mlp_forward.2} parent=11 // pred_fallthru
          _
        // Predicated region
        $region53: #{mlp_forward.2} parent=11 // pred_check
          %p512 = pneg %p283
        $region54: #{mlp_forward.2} parent=11 // pred_check_branch
          %514 = sbr.rel (%p512) target = $region56
        $region55: #{mlp_forward.2} parent=11 // pred_region
          _
        $region56: #{mlp_forward.2} parent=11 // pred_fallthru
          _
        // Predicated region
        $region57: #{mlp_forward.2} parent=11 // pred_check
          %p515 = pneg %p304
        $region58: #{mlp_forward.2} parent=11 // pred_check_branch
          %517 = sbr.rel (%p515) target = $region60
        $region59: #{mlp_forward.2} parent=11 // pred_region
          _
        $region60: #{mlp_forward.2} parent=11 // pred_fallthru
          _
        // Predicated region
        $region61: #{mlp_forward.2} parent=11 // pred_check
          %p518 = pneg %p325
        $region62: #{mlp_forward.2} parent=11 // pred_check_branch
          %520 = sbr.rel (%p518) target = $region64
        $region63: #{mlp_forward.2} parent=11 // pred_region
          _
        $region64: #{mlp_forward.2} parent=11 // pred_fallthru
          _
        // Predicated region
        $region65: #{mlp_forward.2} parent=11 // pred_check
          %p521 = pneg %p346
        $region66: #{mlp_forward.2} parent=11 // pred_check_branch
          %523 = sbr.rel (%p521) target = $region68
        $region67: #{mlp_forward.2} parent=11 // pred_region
          _
        $region68: #{mlp_forward.2} parent=11 // pred_fallthru
          _
        // Predicated region
        $region69: #{mlp_forward.2} parent=11 // pred_check
          %p524 = pneg %p367
        $region70: #{mlp_forward.2} parent=11 // pred_check_branch
          %526 = sbr.rel (%p524) target = $region72
        $region71: #{mlp_forward.2} parent=11 // pred_region
          _
        $region72: #{mlp_forward.2} parent=11 // pred_fallthru
          _
        // Predicated region
        $region73: #{mlp_forward.2} parent=11 // pred_check
          %p527 = pneg %p388
        $region74: #{mlp_forward.2} parent=11 // pred_check_branch
          %529 = sbr.rel (%p527) target = $region76
        $region75: #{mlp_forward.2} parent=11 // pred_region
          _
        $region76: #{mlp_forward.2} parent=11 // pred_fallthru
          _
        // Predicated region
        $region77: #{mlp_forward.2} parent=11 // pred_check
          %p530 = pneg %p409
        $region78: #{mlp_forward.2} parent=11 // pred_check_branch
          %532 = sbr.rel (%p530) target = $region80
        $region79: #{mlp_forward.2} parent=11 // pred_region
          _
        $region80: #{mlp_forward.2} parent=11 // pred_fallthru
          _
        // Predicated region
        $region81: #{mlp_forward.2} parent=11 // pred_check
          %p533 = pneg %p430
        $region82: #{mlp_forward.2} parent=11 // pred_check_branch
          %535 = sbr.rel (%p533) target = $region84
        $region83: #{mlp_forward.2} parent=11 // pred_region
          _
        $region84: #{mlp_forward.2} parent=11 // pred_fallthru
          _
      $region12: #{mlp_forward.2} parent=5 // pred_fallthru
        _
      %p536 = scmp.lt.s32.totalorder %s26, 2
      // Predicated region
      $region85: #{mlp_forward.2} parent=5 // pred_check
        %p537 = pneg %p536
      $region86: #{mlp_forward.2} parent=5 // pred_check_branch
        %539 = sbr.rel (%p537) target = $region88
      $region87: #{mlp_forward.2} parent=5 // pred_region
        // Predicated region
        $region89: #{mlp_forward.2} parent=87 // pred_check
          %p540 = pneg %p46
        $region90: #{mlp_forward.2} parent=87 // pred_check_branch
          %542 = sbr.rel (%p540) target = $region92
        $region91: #{mlp_forward.2} parent=87 // pred_region
          %p543 = scmp.lt.s32.totalorder %s26, 1
          %s544 = scalar_select %p543, %s26, 1
          %s545 = smul.addr %s544, 14
          %s546 = smul.addr %s545, 8
          %s547 = scalar_lea.vmem %s0, %s546
        $region92: #{mlp_forward.2} parent=87 // pred_fallthru
          _
      $region88: #{mlp_forward.2} parent=5 // pred_fallthru
        _
      %p548 = scmp.le.s32.totalorder 1, %s26
      %p549 = scmp.lt.s32.totalorder %s26, 3
      %p550 = pnand %p548, %p549
      %p551 = pneg %p550
      // Predicated region
      $region93: #{mlp_forward.2} parent=5 // pred_check
        _
      $region94: #{mlp_forward.2} parent=5 // pred_check_branch
        %553 = sbr.rel (%p550) target = $region96
      $region95: #{mlp_forward.2} parent=5 // pred_region
        %s554 = ssub.s32 %s26, 1
        // Predicated region
        $region97: #{mlp_forward.2} parent=95 // pred_check
          %p555 = pneg %p220
        $region98: #{mlp_forward.2} parent=95 // pred_check_branch
          %557 = sbr.rel (%p555) target = $region100
        $region99: #{mlp_forward.2} parent=95 // pred_region
          %559 = dma.done [#allocation3], 1792
        $region100: #{mlp_forward.2} parent=95 // pred_fallthru
          _
        %p560 = scmp.lt.s32.totalorder %s31, 1
        %s561 = scalar_select %p560, %s31, 1
        %s562 = smul.addr %s561, 14
        %s563 = smul.addr %s562, 8
        %s564 = scalar_lea.vmem %s0, %s563
        %p565 = pneg %p52
        %p566 = pneg %p49
        %p567 = pneg %p73
        %p568 = pneg %p70
        %p569 = pneg %p94
        %p570 = pneg %p91
        %p571 = pneg %p115
        %p572 = pneg %p112
        %p573 = pneg %p136
        %p574 = pneg %p133
        %p575 = pneg %p157
        %p576 = pneg %p154
        %p577 = pneg %p178
        %p578 = pneg %p175
        %p579 = pneg %p199
        %p580 = pneg %p196
        %p581 = pneg %p220
        %p582 = pneg %p217
        %p583 = pneg %p241
        %p584 = pneg %p238
        %p585 = pneg %p262
        %p586 = pneg %p259
        %p587 = pneg %p283
        %p588 = pneg %p280
        %p589 = pneg %p304
        %p590 = pneg %p301
        %p591 = pneg %p325
        %p592 = pneg %p322
        %p593 = pneg %p346
        %p594 = pneg %p343
        %p595 = pneg %p367
        %p596 = pneg %p364
        %p597 = pneg %p388
        %p598 = pneg %p385
        %p599 = pneg %p409
        %p600 = pneg %p406
        %p601 = pneg %p430
        %p602 = pneg %p427
        %p603 = pneg %p456
        %p604 = pneg %p453
        %p605 = scmp.lt.s32.totalorder %s31, 1
        %s606 = scalar_select %p605, %s31, 1
        %s607 = smul.addr %s606, 14
        %s608 = smul.addr %s607, 8
        %s609 = scalar_lea.vmem %s19, %s608
        %p610 = scmp.lt.s32.totalorder %s31, 1
        %s611 = scalar_select %p610, %s31, 1
        %s612 = smul.addr %s611, 14
        %s613 = smul.addr %s612, 8
        %s614 = scalar_lea.vmem %s0, %s613
        %p615 = scmp.lt.s32.totalorder %s31, 1
        %s616 = scalar_select %p615, %s31, 1
        %s617 = smul.addr %s616, 14
        %s618 = smul.addr %s617, 8
        %s619 = scalar_lea.vmem %s19, %s618
        %v620 = vld [vmem:[%s614] sm:$0xff]
        %v621 = vld [vmem:[%s614 + $0x8] sm:$0xff]
        %v622 = vld [vmem:[%s614 + $0x10] sm:$0xff]
        %v623 = vld [vmem:[%s614 + $0x18] sm:$0xff]
        %v624 = vld [vmem:[%s614 + $0x20] sm:$0xff]
        %v625 = vld [vmem:[%s614 + $0x28] sm:$0xff]
        %v626 = vld [vmem:[%s614 + $0x30] sm:$0xff]
        %v627 = vld [vmem:[%s614 + $0x38] sm:$0xff]
        %v628 = vld [vmem:[%s614 + $0x40] sm:$0xff]
        %v629 = vld [vmem:[%s614 + $0x48] sm:$0xff]
        %v630 = vld [vmem:[%s614 + $0x50] sm:$0xff]
        %v631 = vld [vmem:[%s614 + $0x58] sm:$0xff]
        %v632 = vld [vmem:[%s614 + $0x60] sm:$0xff]
        %v633 = vld [vmem:[%s614 + $0x68] sm:$0x1f]
        %v634 = vld [vmem:[%s1] sm:$0xff]
        %v635 = vld [vmem:[%s1 + $0x8] sm:$0xff]
        %v636 = vld [vmem:[%s2] sm:$0x1]
        %v638 = vperm.slane %v636, 0
        %vm640 = vcmask 130048
        %v642 = vsel %vm640, %v620, 0
        %v645 = vsel %vm640, %v621, 0
        %v648 = vsel %vm640, %v622, 0
        %v651 = vsel %vm640, %v623, 0
        %v654 = vsel %vm640, %v624, 0
        %v657 = vsel %vm640, %v625, 0
        %v660 = vsel %vm640, %v626, 0
        %v663 = vsel %vm640, %v627, 0
        %v666 = vsel %vm640, %v628, 0
        %v669 = vsel %vm640, %v629, 0
        %v672 = vsel %vm640, %v630, 0
        %v675 = vsel %vm640, %v631, 0
        %v678 = vsel %vm640, %v632, 0
        %v681 = vsel %vm640, %v633, 0
        %683 = vmatpush.msra.mxu0 0.0
        %684 = vmatpush.msra.mxu0 0.0
        %685 = vmatpush.msra.mxu0 0.0
        %686 = vmatpush.msra.mxu0 0.0
        %687 = vmatpush.msra.mxu0 0.0
        %688 = vmatpush.msra.mxu0 0.0
        %689 = vmatpush.msra.mxu0 0.0
        %690 = vmatpush.msra.mxu0 0.0
        %691 = vmatpush.msra.mxu0 0.0
        %692 = vmatpush.msra.mxu0 0.0
        %693 = vmatpush.msra.mxu0 0.0
        %694 = vmatpush.msra.mxu0 0.0
        %695 = vmatpush.msra.mxu0 0.0
        %696 = vmatpush.msra.mxu0 0.0
        %697 = vmatpush.msra.mxu0 %v635
        %698 = vmatpush.msra.mxu0 %v634
        %699 = vmatmul.f32.gmra.mxu0 %v642
        %v700 = vpop.f32.mrf.mxu0
        %v701 = vadd.f32 %v638, %v700
        %702 = vmatmul.f32.gmra.mxu0 %v645
        %v703 = vpop.f32.mrf.mxu0
        %v704 = vadd.f32 %v638, %v703
        %705 = vmatmul.f32.gmra.mxu0 %v648
        %v706 = vpop.f32.mrf.mxu0
        %v707 = vadd.f32 %v638, %v706
        %708 = vmatmul.f32.gmra.mxu0 %v651
        %v709 = vpop.f32.mrf.mxu0
        %v710 = vadd.f32 %v638, %v709
        %711 = vmatmul.f32.gmra.mxu0 %v654
        %v712 = vpop.f32.mrf.mxu0
        %v713 = vadd.f32 %v638, %v712
        %714 = vmatmul.f32.gmra.mxu0 %v657
        %v715 = vpop.f32.mrf.mxu0
        %v716 = vadd.f32 %v638, %v715
        %717 = vmatmul.f32.gmra.mxu0 %v660
        %v718 = vpop.f32.mrf.mxu0
        %v719 = vadd.f32 %v638, %v718
        %720 = vmatmul.f32.gmra.mxu0 %v663
        %v721 = vpop.f32.mrf.mxu0
        %v722 = vadd.f32 %v638, %v721
        %723 = vmatmul.f32.gmra.mxu0 %v666
        %v724 = vpop.f32.mrf.mxu0
        %v725 = vadd.f32 %v638, %v724
        %726 = vmatmul.f32.gmra.mxu0 %v669
        %v727 = vpop.f32.mrf.mxu0
        %v728 = vadd.f32 %v638, %v727
        %729 = vmatmul.f32.gmra.mxu0 %v672
        %v730 = vpop.f32.mrf.mxu0
        %v731 = vadd.f32 %v638, %v730
        %732 = vmatmul.f32.gmra.mxu0 %v675
        %v733 = vpop.f32.mrf.mxu0
        %v734 = vadd.f32 %v638, %v733
        %735 = vmatmul.f32.gmra.mxu0 %v678
        %v736 = vpop.f32.mrf.mxu0
        %v737 = vadd.f32 %v638, %v736
        %738 = vmatmul.f32.gmra.mxu0 %v681
        %v739 = vpop.f32.mrf.mxu0
        %v740 = vadd.f32 %v638, %v739
        %741 = vdwg.mxu0
        %v742 = vld [vmem:[%s3] sm:$0x1]
        %v743 = vld [vmem:[%s4] sm:$0x1]
        %vm744 = vcmask 261120
        %v745 = vsel %vm744, %v701, 0.0
        %746 = vadd.xlane.f32.xlu0 %v745
        %v747 = vpop.xlane.xlu0 %746
        %v748 = vsel %vm744, %v704, 0.0
        %749 = vadd.xlane.f32.xlu0 %v748
        %v750 = vpop.xlane.xlu0 %749
        %v751 = vsel %vm744, %v707, 0.0
        %752 = vadd.xlane.f32.xlu0 %v751
        %v753 = vpop.xlane.xlu0 %752
        %v754 = vsel %vm744, %v710, 0.0
        %755 = vadd.xlane.f32.xlu0 %v754
        %v756 = vpop.xlane.xlu0 %755
        %v757 = vsel %vm744, %v713, 0.0
        %758 = vadd.xlane.f32.xlu0 %v757
        %v759 = vpop.xlane.xlu0 %758
        %v760 = vsel %vm744, %v716, 0.0
        %761 = vadd.xlane.f32.xlu0 %v760
        %v762 = vpop.xlane.xlu0 %761
        %v763 = vsel %vm744, %v719, 0.0
        %764 = vadd.xlane.f32.xlu0 %v763
        %v765 = vpop.xlane.xlu0 %764
        %v766 = vsel %vm744, %v722, 0.0
        %767 = vadd.xlane.f32.xlu0 %v766
        %v768 = vpop.xlane.xlu0 %767
        %v769 = vsel %vm744, %v725, 0.0
        %770 = vadd.xlane.f32.xlu0 %v769
        %v771 = vpop.xlane.xlu0 %770
        %v772 = vsel %vm744, %v728, 0.0
        %773 = vadd.xlane.f32.xlu0 %v772
        %v774 = vpop.xlane.xlu0 %773
        %v775 = vsel %vm744, %v731, 0.0
        %776 = vadd.xlane.f32.xlu0 %v775
        %v777 = vpop.xlane.xlu0 %776
        %v778 = vsel %vm744, %v734, 0.0
        %779 = vadd.xlane.f32.xlu0 %v778
        %v780 = vpop.xlane.xlu0 %779
        %v781 = vsel %vm744, %v737, 0.0
        %782 = vadd.xlane.f32.xlu0 %v781
        %v783 = vpop.xlane.xlu0 %782
        %vm784 = vcmask 258048
        %v785 = vsel %vm784, %v740, 0.0
        %786 = vadd.xlane.f32.xlu0 %v785
        %v787 = vpop.xlane.xlu0 %786
        %v788 = vrcp.pop 32.0
        %v789 = vmul.f32 32.0, %v788
        %v790 = vsub.f32 1.0, %v789
        %v791 = vmul.f32 %v788, %v790
        %v792 = vadd.f32 %v788, %v791
        %vm793 = vweird.f32 %v788
        %v794 = vsel %vm793, %v788, %v792
        %v795 = vmul.f32 %v747, %v794
        %v796 = vmul.f32 %v750, %v794
        %v797 = vmul.f32 %v753, %v794
        %v798 = vmul.f32 %v756, %v794
        %v799 = vmul.f32 %v759, %v794
        %v800 = vmul.f32 %v762, %v794
        %v801 = vmul.f32 %v765, %v794
        %v802 = vmul.f32 %v768, %v794
        %v803 = vmul.f32 %v771, %v794
        %v804 = vmul.f32 %v774, %v794
        %v805 = vmul.f32 %v777, %v794
        %v806 = vmul.f32 %v780, %v794
        %v807 = vmul.f32 %v783, %v794
        %v808 = vmul.f32 %v787, %v794
        %v809 = vsub.f32 %v701, %v795
        %v810 = vsub.f32 %v704, %v796
        %v811 = vsub.f32 %v707, %v797
        %v812 = vsub.f32 %v710, %v798
        %v813 = vsub.f32 %v713, %v799
        %v814 = vsub.f32 %v716, %v800
        %v815 = vsub.f32 %v719, %v801
        %v816 = vsub.f32 %v722, %v802
        %v817 = vsub.f32 %v725, %v803
        %v818 = vsub.f32 %v728, %v804
        %v819 = vsub.f32 %v731, %v805
        %v820 = vsub.f32 %v734, %v806
        %v821 = vsub.f32 %v737, %v807
        %v822 = vsub.f32 %v740, %v808
        %v823 = vmul.f32 %v809, %v809
        %v824 = vmul.f32 %v810, %v810
        %v825 = vmul.f32 %v811, %v811
        %v826 = vmul.f32 %v812, %v812
        %v827 = vmul.f32 %v813, %v813
        %v828 = vmul.f32 %v814, %v814
        %v829 = vmul.f32 %v815, %v815
        %v830 = vmul.f32 %v816, %v816
        %v831 = vmul.f32 %v817, %v817
        %v832 = vmul.f32 %v818, %v818
        %v833 = vmul.f32 %v819, %v819
        %v834 = vmul.f32 %v820, %v820
        %v835 = vmul.f32 %v821, %v821
        %v836 = vmul.f32 %v822, %v822
        %v837 = vsel %vm744, %v823, 0.0
        %838 = vadd.xlane.f32.xlu0 %v837
        %v839 = vpop.xlane.xlu0 %838
        %v840 = vsel %vm744, %v824, 0.0
        %841 = vadd.xlane.f32.xlu0 %v840
        %v842 = vpop.xlane.xlu0 %841
        %v843 = vsel %vm744, %v825, 0.0
        %844 = vadd.xlane.f32.xlu0 %v843
        %v845 = vpop.xlane.xlu0 %844
        %v846 = vsel %vm744, %v826, 0.0
        %847 = vadd.xlane.f32.xlu0 %v846
        %v848 = vpop.xlane.xlu0 %847
        %v849 = vsel %vm744, %v827, 0.0
        %850 = vadd.xlane.f32.xlu0 %v849
        %v851 = vpop.xlane.xlu0 %850
        %v852 = vsel %vm744, %v828, 0.0
        %853 = vadd.xlane.f32.xlu0 %v852
        %v854 = vpop.xlane.xlu0 %853
        %v855 = vsel %vm744, %v829, 0.0
        %856 = vadd.xlane.f32.xlu0 %v855
        %v857 = vpop.xlane.xlu0 %856
        %v858 = vsel %vm744, %v830, 0.0
        %859 = vadd.xlane.f32.xlu0 %v858
        %v860 = vpop.xlane.xlu0 %859
        %v861 = vsel %vm744, %v831, 0.0
        %862 = vadd.xlane.f32.xlu0 %v861
        %v863 = vpop.xlane.xlu0 %862
        %v864 = vsel %vm744, %v832, 0.0
        %865 = vadd.xlane.f32.xlu0 %v864
        %v866 = vpop.xlane.xlu0 %865
        %v867 = vsel %vm744, %v833, 0.0
        %868 = vadd.xlane.f32.xlu0 %v867
        %v869 = vpop.xlane.xlu0 %868
        %v870 = vsel %vm744, %v834, 0.0
        %871 = vadd.xlane.f32.xlu0 %v870
        %v872 = vpop.xlane.xlu0 %871
        %v873 = vsel %vm744, %v835, 0.0
        %874 = vadd.xlane.f32.xlu0 %v873
        %v875 = vpop.xlane.xlu0 %874
        %v876 = vsel %vm784, %v836, 0.0
        %877 = vadd.xlane.f32.xlu0 %v876
        %v878 = vpop.xlane.xlu0 %877
        %v879 = vmul.f32 %v839, %v794
        %v880 = vmul.f32 %v842, %v794
        %v881 = vmul.f32 %v845, %v794
        %v882 = vmul.f32 %v848, %v794
        %v883 = vmul.f32 %v851, %v794
        %v884 = vmul.f32 %v854, %v794
        %v885 = vmul.f32 %v857, %v794
        %v886 = vmul.f32 %v860, %v794
        %v887 = vmul.f32 %v863, %v794
        %v888 = vmul.f32 %v866, %v794
        %v889 = vmul.f32 %v869, %v794
        %v890 = vmul.f32 %v872, %v794
        %v891 = vmul.f32 %v875, %v794
        %v892 = vmul.f32 %v878, %v794
        %v893 = vadd.f32 %v879, 1e-05
        %v894 = vadd.f32 %v880, 1e-05
        %v895 = vadd.f32 %v881, 1e-05
        %v896 = vadd.f32 %v882, 1e-05
        %v897 = vadd.f32 %v883, 1e-05
        %v898 = vadd.f32 %v884, 1e-05
        %v899 = vadd.f32 %v885, 1e-05
        %v900 = vadd.f32 %v886, 1e-05
        %v901 = vadd.f32 %v887, 1e-05
        %v902 = vadd.f32 %v888, 1e-05
        %v903 = vadd.f32 %v889, 1e-05
        %v904 = vadd.f32 %v890, 1e-05
        %v905 = vadd.f32 %v891, 1e-05
        %v906 = vadd.f32 %v892, 1e-05
        %v907 = vrsqrt.pop %v893
        %v908 = vmul.f32 %v907, %v893
        %v909 = vmul.f32 %v908, %v907
        %v910 = vmul.f32 0.5, %v909
        %v911 = vsub.f32 1.5, %v910
        %v912 = vmul.f32 %v907, %v911
        %vm913 = vweird.f32 %v893
        %vm914 = vweird.f32 %v907
        %vm915 = vmor %vm913, %vm914
        %v916 = vsel %vm915, %v907, %v912
        %v917 = vrsqrt.pop %v894
        %v918 = vmul.f32 %v917, %v894
        %v919 = vmul.f32 %v918, %v917
        %v920 = vmul.f32 0.5, %v919
        %v921 = vsub.f32 1.5, %v920
        %v922 = vmul.f32 %v917, %v921
        %vm923 = vweird.f32 %v894
        %vm924 = vweird.f32 %v917
        %vm925 = vmor %vm923, %vm924
        %v926 = vsel %vm925, %v917, %v922
        %v927 = vrsqrt.pop %v895
        %v928 = vmul.f32 %v927, %v895
        %v929 = vmul.f32 %v928, %v927
        %v930 = vmul.f32 0.5, %v929
        %v931 = vsub.f32 1.5, %v930
        %v932 = vmul.f32 %v927, %v931
        %vm933 = vweird.f32 %v895
        %vm934 = vweird.f32 %v927
        %vm935 = vmor %vm933, %vm934
        %v936 = vsel %vm935, %v927, %v932
        %v937 = vrsqrt.pop %v896
        %v938 = vmul.f32 %v937, %v896
        %v939 = vmul.f32 %v938, %v937
        %v940 = vmul.f32 0.5, %v939
        %v941 = vsub.f32 1.5, %v940
        %v942 = vmul.f32 %v937, %v941
        %vm943 = vweird.f32 %v896
        %vm944 = vweird.f32 %v937
        %vm945 = vmor %vm943, %vm944
        %v946 = vsel %vm945, %v937, %v942
        %v947 = vrsqrt.pop %v897
        %v948 = vmul.f32 %v947, %v897
        %v949 = vmul.f32 %v948, %v947
        %v950 = vmul.f32 0.5, %v949
        %v951 = vsub.f32 1.5, %v950
        %v952 = vmul.f32 %v947, %v951
        %vm953 = vweird.f32 %v897
        %vm954 = vweird.f32 %v947
        %vm955 = vmor %vm953, %vm954
        %v956 = vsel %vm955, %v947, %v952
        %v957 = vrsqrt.pop %v898
        %v958 = vmul.f32 %v957, %v898
        %v959 = vmul.f32 %v958, %v957
        %v960 = vmul.f32 0.5, %v959
        %v961 = vsub.f32 1.5, %v960
        %v962 = vmul.f32 %v957, %v961
        %vm963 = vweird.f32 %v898
        %vm964 = vweird.f32 %v957
        %vm965 = vmor %vm963, %vm964
        %v966 = vsel %vm965, %v957, %v962
        %v967 = vrsqrt.pop %v899
        %v968 = vmul.f32 %v967, %v899
        %v969 = vmul.f32 %v968, %v967
        %v970 = vmul.f32 0.5, %v969
        %v971 = vsub.f32 1.5, %v970
        %v972 = vmul.f32 %v967, %v971
        %vm973 = vweird.f32 %v899
        %vm974 = vweird.f32 %v967
        %vm975 = vmor %vm973, %vm974
        %v976 = vsel %vm975, %v967, %v972
        %v977 = vrsqrt.pop %v900
        %v978 = vmul.f32 %v977, %v900
        %v979 = vmul.f32 %v978, %v977
        %v980 = vmul.f32 0.5, %v979
        %v981 = vsub.f32 1.5, %v980
        %v982 = vmul.f32 %v977, %v981
        %vm983 = vweird.f32 %v900
        %vm984 = vweird.f32 %v977
        %vm985 = vmor %vm983, %vm984
        %v986 = vsel %vm985, %v977, %v982
        %v987 = vrsqrt.pop %v901
        %v988 = vmul.f32 %v987, %v901
        %v989 = vmul.f32 %v988, %v987
        %v990 = vmul.f32 0.5, %v989
        %v991 = vsub.f32 1.5, %v990
        %v992 = vmul.f32 %v987, %v991
        %vm993 = vweird.f32 %v901
        %vm994 = vweird.f32 %v987
        %vm995 = vmor %vm993, %vm994
        %v996 = vsel %vm995, %v987, %v992
        %v997 = vrsqrt.pop %v902
        %v998 = vmul.f32 %v997, %v902
        %v999 = vmul.f32 %v998, %v997
        %v1000 = vmul.f32 0.5, %v999
        %v1001 = vsub.f32 1.5, %v1000
        %v1002 = vmul.f32 %v997, %v1001
        %vm1003 = vweird.f32 %v902
        %vm1004 = vweird.f32 %v997
        %vm1005 = vmor %vm1003, %vm1004
        %v1006 = vsel %vm1005, %v997, %v1002
        %v1007 = vrsqrt.pop %v903
        %v1008 = vmul.f32 %v1007, %v903
        %v1009 = vmul.f32 %v1008, %v1007
        %v1010 = vmul.f32 0.5, %v1009
        %v1011 = vsub.f32 1.5, %v1010
        %v1012 = vmul.f32 %v1007, %v1011
        %vm1013 = vweird.f32 %v903
        %vm1014 = vweird.f32 %v1007
        %vm1015 = vmor %vm1013, %vm1014
        %v1016 = vsel %vm1015, %v1007, %v1012
        %v1017 = vrsqrt.pop %v904
        %v1018 = vmul.f32 %v1017, %v904
        %v1019 = vmul.f32 %v1018, %v1017
        %v1020 = vmul.f32 0.5, %v1019
        %v1021 = vsub.f32 1.5, %v1020
        %v1022 = vmul.f32 %v1017, %v1021
        %vm1023 = vweird.f32 %v904
        %vm1024 = vweird.f32 %v1017
        %vm1025 = vmor %vm1023, %vm1024
        %v1026 = vsel %vm1025, %v1017, %v1022
        %v1027 = vrsqrt.pop %v905
        %v1028 = vmul.f32 %v1027, %v905
        %v1029 = vmul.f32 %v1028, %v1027
        %v1030 = vmul.f32 0.5, %v1029
        %v1031 = vsub.f32 1.5, %v1030
        %v1032 = vmul.f32 %v1027, %v1031
        %vm1033 = vweird.f32 %v905
        %vm1034 = vweird.f32 %v1027
        %vm1035 = vmor %vm1033, %vm1034
        %v1036 = vsel %vm1035, %v1027, %v1032
        %v1037 = vrsqrt.pop %v906
        %v1038 = vmul.f32 %v1037, %v906
        %v1039 = vmul.f32 %v1038, %v1037
        %v1040 = vmul.f32 0.5, %v1039
        %v1041 = vsub.f32 1.5, %v1040
        %v1042 = vmul.f32 %v1037, %v1041
        %vm1043 = vweird.f32 %v906
        %vm1044 = vweird.f32 %v1037
        %vm1045 = vmor %vm1043, %vm1044
        %v1046 = vsel %vm1045, %v1037, %v1042
        %v1047 = vmul.f32 %v809, %v916
        %v1048 = vmul.f32 %v810, %v926
        %v1049 = vmul.f32 %v811, %v936
        %v1050 = vmul.f32 %v812, %v946
        %v1051 = vmul.f32 %v813, %v956
        %v1052 = vmul.f32 %v814, %v966
        %v1053 = vmul.f32 %v815, %v976
        %v1054 = vmul.f32 %v816, %v986
        %v1055 = vmul.f32 %v817, %v996
        %v1056 = vmul.f32 %v818, %v1006
        %v1057 = vmul.f32 %v819, %v1016
        %v1058 = vmul.f32 %v820, %v1026
        %v1059 = vmul.f32 %v821, %v1036
        %v1060 = vmul.f32 %v822, %v1046
        %v1062 = vperm.slane %v742, 0
        %v1064 = vmul.f32 %v1047, %v1062
        %v1065 = vmul.f32 %v1048, %v1062
        %v1066 = vmul.f32 %v1049, %v1062
        %v1067 = vmul.f32 %v1050, %v1062
        %v1068 = vmul.f32 %v1051, %v1062
        %v1069 = vmul.f32 %v1052, %v1062
        %v1070 = vmul.f32 %v1053, %v1062
        %v1071 = vmul.f32 %v1054, %v1062
        %v1072 = vmul.f32 %v1055, %v1062
        %v1073 = vmul.f32 %v1056, %v1062
        %v1074 = vmul.f32 %v1057, %v1062
        %v1075 = vmul.f32 %v1058, %v1062
        %v1076 = vmul.f32 %v1059, %v1062
        %v1077 = vmul.f32 %v1060, %v1062
        %v1079 = vperm.slane %v743, 0
        %v1081 = vadd.f32 %v1064, %v1079
        %v1082 = vadd.f32 %v1065, %v1079
        %v1083 = vadd.f32 %v1066, %v1079
        %v1084 = vadd.f32 %v1067, %v1079
        %v1085 = vadd.f32 %v1068, %v1079
        %v1086 = vadd.f32 %v1069, %v1079
        %v1087 = vadd.f32 %v1070, %v1079
        %v1088 = vadd.f32 %v1071, %v1079
        %v1089 = vadd.f32 %v1072, %v1079
        %v1090 = vadd.f32 %v1073, %v1079
        %v1091 = vadd.f32 %v1074, %v1079
        %v1092 = vadd.f32 %v1075, %v1079
        %v1093 = vadd.f32 %v1076, %v1079
        %v1094 = vadd.f32 %v1077, %v1079
        %v1095 = vld [vmem:[%s5] sm:$0xff]
        %v1096 = vld [vmem:[%s5 + $0x8] sm:$0xff]
        %v1097 = vld [vmem:[%s5 + $0x10] sm:$0xff]
        %v1098 = vld [vmem:[%s5 + $0x18] sm:$0xff]
        %v1099 = vld [vmem:[%s5 + $0x20] sm:$0xff]
        %v1100 = vld [vmem:[%s5 + $0x28] sm:$0xff]
        %v1101 = vld [vmem:[%s5 + $0x30] sm:$0xff]
        %v1102 = vld [vmem:[%s5 + $0x38] sm:$0xff]
        %v1103 = vld [vmem:[%s5 + $0x40] sm:$0xff]
        %v1104 = vld [vmem:[%s5 + $0x48] sm:$0xff]
        %v1105 = vld [vmem:[%s5 + $0x50] sm:$0xff]
        %v1106 = vld [vmem:[%s5 + $0x58] sm:$0xff]
        %v1107 = vld [vmem:[%s5 + $0x60] sm:$0xff]
        %v1108 = vld [vmem:[%s5 + $0x68] sm:$0x1f]
        %v1109 = vld [vmem:[%s6] sm:$0x1]
        %v1111 = vperm.slane %v1109, 0
        %1113 = vxpose.xlu0.b32.start [1/16] %v1081, 128
        %1114 = vxpose.xlu0.b32.cont [2/16] %v1082, 128
        %1115 = vxpose.xlu0.b32.cont [3/16] %v1083, 128
        %1116 = vxpose.xlu0.b32.cont [4/16] %v1084, 128
        %1117 = vxpose.xlu0.b32.cont [5/16] %v1085, 128
        %1118 = vxpose.xlu0.b32.cont [6/16] %v1086, 128
        %1119 = vxpose.xlu0.b32.cont [7/16] %v1087, 128
        %1120 = vxpose.xlu0.b32.cont [8/16] %v1088, 128
        %1121 = vxpose.xlu0.b32.cont [9/16] %v1089, 128
        %1122 = vxpose.xlu0.b32.cont [10/16] %v1090, 128
        %1123 = vxpose.xlu0.b32.cont [11/16] %v1091, 128
        %1124 = vxpose.xlu0.b32.cont [12/16] %v1092, 128
        %1125 = vxpose.xlu0.b32.cont [13/16] %v1093, 128
        %1126 = vxpose.xlu0.b32.cont [14/16] %v1094, 128
        %1127 = vxpose.xlu0.b32.cont [15/16] 0.0, 128
        %1128 = vxpose.xlu0.b32.end [16/16] 0.0, 128
        %v1129 = vpop.trf.xlu0
        %v1130 = vpop.trf.xlu0
        %v1131 = vpop.trf.xlu0
        %v1132 = vpop.trf.xlu0
        %v1133 = vpop.trf.xlu0
        %v1134 = vpop.trf.xlu0
        %v1135 = vpop.trf.xlu0
        %v1136 = vpop.trf.xlu0
        %v1137 = vpop.trf.xlu0
        %v1138 = vpop.trf.xlu0
        %v1139 = vpop.trf.xlu0
        %v1140 = vpop.trf.xlu0
        %v1141 = vpop.trf.xlu0
        %v1142 = vpop.trf.xlu0
        %v1143 = vpop.trf.xlu0
        %v1144 = vpop.trf.xlu0
        %vm1145 = vcmask 891904
        %v1147 = vsel %vm1145, %v1129, 0
        %v1150 = vsel %vm1145, %v1130, 0
        %v1153 = vsel %vm1145, %v1131, 0
        %v1156 = vsel %vm1145, %v1132, 0
        %vm1158 = vcmask 1044480
        %v1160 = vsel %vm1158, %v1108, 0
        %1162 = vmatpush.msra.mxu0 0.0
        %1163 = vmatpush.msra.mxu0 0.0
        %1164 = vmatpush.msra.mxu0 %v1160
        %1165 = vmatpush.msra.mxu0 %v1107
        %1166 = vmatpush.msra.mxu0 %v1106
        %1167 = vmatpush.msra.mxu0 %v1105
        %1168 = vmatpush.msra.mxu0 %v1104
        %1169 = vmatpush.msra.mxu0 %v1103
        %1170 = vmatpush.msra.mxu0 %v1102
        %1171 = vmatpush.msra.mxu0 %v1101
        %1172 = vmatpush.msra.mxu0 %v1100
        %1173 = vmatpush.msra.mxu0 %v1099
        %1174 = vmatpush.msra.mxu0 %v1098
        %1175 = vmatpush.msra.mxu0 %v1097
        %1176 = vmatpush.msra.mxu0 %v1096
        %1177 = vmatpush.msra.mxu0 %v1095
        %1178 = vmatmul.f32.gmra.mxu0 %v1147
        %v1179 = vpop.f32.mrf.mxu0
        %v1180 = vadd.f32 %v1111, %v1179
        %1181 = vmatmul.f32.gmra.mxu0 %v1150
        %v1182 = vpop.f32.mrf.mxu0
        %v1183 = vadd.f32 %v1111, %v1182
        %1184 = vmatmul.f32.gmra.mxu0 %v1153
        %v1185 = vpop.f32.mrf.mxu0
        %v1186 = vadd.f32 %v1111, %v1185
        %1187 = vmatmul.f32.gmra.mxu0 %v1156
        %v1188 = vpop.f32.mrf.mxu0
        %v1189 = vadd.f32 %v1111, %v1188
        %1190 = vdwg.mxu0
        %v1191 = vmul.f32 %v1180, 0.5
        %v1192 = vmul.f32 %v1183, 0.5
        %v1193 = vmul.f32 %v1186, 0.5
        %v1194 = vmul.f32 %v1189, 0.5
        %v1195 = vmul.f32 %v1180, 0.044715
        %v1196 = vmul.f32 %v1183, 0.044715
        %v1197 = vmul.f32 %v1186, 0.044715
        %v1198 = vmul.f32 %v1189, 0.044715
        %v1199 = vmul.f32 %v1195, %v1180
        %v1200 = vmul.f32 %v1196, %v1183
        %v1201 = vmul.f32 %v1197, %v1186
        %v1202 = vmul.f32 %v1198, %v1189
        %v1203 = vmul.f32 %v1199, %v1180
        %v1204 = vmul.f32 %v1200, %v1183
        %v1205 = vmul.f32 %v1201, %v1186
        %v1206 = vmul.f32 %v1202, %v1189
        %v1207 = vadd.f32 %v1180, %v1203
        %v1208 = vadd.f32 %v1183, %v1204
        %v1209 = vadd.f32 %v1186, %v1205
        %v1210 = vadd.f32 %v1189, %v1206
        %v1211 = vmul.f32 %v1207, 0.7978846
        %v1212 = vmul.f32 %v1208, 0.7978846
        %v1213 = vmul.f32 %v1209, 0.7978846
        %v1214 = vmul.f32 %v1210, 0.7978846
        %v1215 = vtanh.pop %v1211
        %v1216 = vtanh.pop %v1212
        %v1217 = vtanh.pop %v1213
        %v1218 = vtanh.pop %v1214
        %v1219 = vadd.f32 %v1215, 1.0
        %v1220 = vadd.f32 %v1216, 1.0
        %v1221 = vadd.f32 %v1217, 1.0
        %v1222 = vadd.f32 %v1218, 1.0
        %v1223 = vmul.f32 %v1191, %v1219
        %v1224 = vmul.f32 %v1192, %v1220
        %v1225 = vmul.f32 %v1193, %v1221
        %v1226 = vmul.f32 %v1194, %v1222
        %v1227 = vld [vmem:[%s7] sm:$0xff]
        %v1228 = vld [vmem:[%s7 + $0x8] sm:$0xff]
        %v1229 = vld [vmem:[%s7 + $0x10] sm:$0xff]
        %v1230 = vld [vmem:[%s7 + $0x18] sm:$0xff]
        %1231 = vxpose.xlu0.b32.start [1/16] %v1227, 128
        %1232 = vxpose.xlu0.b32.cont [2/16] %v1228, 128
        %1233 = vxpose.xlu0.b32.cont [3/16] %v1229, 128
        %1234 = vxpose.xlu0.b32.cont [4/16] %v1230, 128
        %1235 = vxpose.xlu0.b32.cont [5/16] 0.0, 128
        %1236 = vxpose.xlu0.b32.cont [6/16] 0.0, 128
        %1237 = vxpose.xlu0.b32.cont [7/16] 0.0, 128
        %1238 = vxpose.xlu0.b32.cont [8/16] 0.0, 128
        %1239 = vxpose.xlu0.b32.cont [9/16] 0.0, 128
        %1240 = vxpose.xlu0.b32.cont [10/16] 0.0, 128
        %1241 = vxpose.xlu0.b32.cont [11/16] 0.0, 128
        %1242 = vxpose.xlu0.b32.cont [12/16] 0.0, 128
        %1243 = vxpose.xlu0.b32.cont [13/16] 0.0, 128
        %1244 = vxpose.xlu0.b32.cont [14/16] 0.0, 128
        %1245 = vxpose.xlu0.b32.cont [15/16] 0.0, 128
        %1246 = vxpose.xlu0.b32.end [16/16] 0.0, 128
        %v1247 = vpop.trf.xlu0
        %v1248 = vpop.trf.xlu0
        %v1249 = vpop.trf.xlu0
        %v1250 = vpop.trf.xlu0
        %v1251 = vpop.trf.xlu0
        %v1252 = vpop.trf.xlu0
        %v1253 = vpop.trf.xlu0
        %v1254 = vpop.trf.xlu0
        %v1255 = vpop.trf.xlu0
        %v1256 = vpop.trf.xlu0
        %v1257 = vpop.trf.xlu0
        %v1258 = vpop.trf.xlu0
        %v1259 = vpop.trf.xlu0
        %v1260 = vpop.trf.xlu0
        %v1261 = vpop.trf.xlu0
        %v1262 = vpop.trf.xlu0
        %v1264 = vsel %vm744, %v1247, 0
        %v1267 = vsel %vm744, %v1248, 0
        %v1270 = vsel %vm744, %v1249, 0
        %v1273 = vsel %vm744, %v1250, 0
        %v1276 = vsel %vm744, %v1251, 0
        %v1279 = vsel %vm744, %v1252, 0
        %v1282 = vsel %vm744, %v1253, 0
        %v1285 = vsel %vm744, %v1254, 0
        %v1288 = vsel %vm744, %v1255, 0
        %v1291 = vsel %vm744, %v1256, 0
        %v1294 = vsel %vm744, %v1257, 0
        %v1297 = vsel %vm744, %v1258, 0
        %v1300 = vsel %vm744, %v1259, 0
        %v1303 = vsel %vm744, %v1260, 0
        %v1306 = vsel %vm744, %v1223, 0
        %v1309 = vsel %vm744, %v1224, 0
        %v1312 = vsel %vm744, %v1225, 0
        %v1315 = vsel %vm744, %v1226, 0
        %1317 = vmatpush.xpose.msra.mxu0 0.0
        %1318 = vmatpush.xpose.msra.mxu0 0.0
        %1319 = vmatpush.xpose.msra.mxu0 0.0
        %1320 = vmatpush.xpose.msra.mxu0 0.0
        %1321 = vmatpush.xpose.msra.mxu0 0.0
        %1322 = vmatpush.xpose.msra.mxu0 0.0
        %1323 = vmatpush.xpose.msra.mxu0 0.0
        %1324 = vmatpush.xpose.msra.mxu0 0.0
        %1325 = vmatpush.xpose.msra.mxu0 0.0
        %1326 = vmatpush.xpose.msra.mxu0 0.0
        %1327 = vmatpush.xpose.msra.mxu0 0.0
        %1328 = vmatpush.xpose.msra.mxu0 0.0
        %1329 = vmatpush.xpose.msra.mxu0 %v1315
        %1330 = vmatpush.xpose.msra.mxu0 %v1312
        %1331 = vmatpush.xpose.msra.mxu0 %v1309
        %1332 = vmatpush.xpose.msra.mxu0 %v1306
        %1333 = vmatmul.f32.gmra.mxu0 %v1264
        %v1334 = vpop.f32.mrf.mxu0
        %v1335 = vadd.f32 0.0, %v1334
        %1336 = vmatmul.f32.gmra.mxu0 %v1267
        %v1337 = vpop.f32.mrf.mxu0
        %v1338 = vadd.f32 0.0, %v1337
        %1339 = vmatmul.f32.gmra.mxu0 %v1270
        %v1340 = vpop.f32.mrf.mxu0
        %v1341 = vadd.f32 0.0, %v1340
        %1342 = vmatmul.f32.gmra.mxu0 %v1273
        %v1343 = vpop.f32.mrf.mxu0
        %v1344 = vadd.f32 0.0, %v1343
        %1345 = vmatmul.f32.gmra.mxu0 %v1276
        %v1346 = vpop.f32.mrf.mxu0
        %v1347 = vadd.f32 0.0, %v1346
        %1348 = vmatmul.f32.gmra.mxu0 %v1279
        %v1349 = vpop.f32.mrf.mxu0
        %v1350 = vadd.f32 0.0, %v1349
        %1351 = vmatmul.f32.gmra.mxu0 %v1282
        %v1352 = vpop.f32.mrf.mxu0
        %v1353 = vadd.f32 0.0, %v1352
        %1354 = vmatmul.f32.gmra.mxu0 %v1285
        %v1355 = vpop.f32.mrf.mxu0
        %v1356 = vadd.f32 0.0, %v1355
        %1357 = vmatmul.f32.gmra.mxu0 %v1288
        %v1358 = vpop.f32.mrf.mxu0
        %v1359 = vadd.f32 0.0, %v1358
        %1360 = vmatmul.f32.gmra.mxu0 %v1291
        %v1361 = vpop.f32.mrf.mxu0
        %v1362 = vadd.f32 0.0, %v1361
        %1363 = vmatmul.f32.gmra.mxu0 %v1294
        %v1364 = vpop.f32.mrf.mxu0
        %v1365 = vadd.f32 0.0, %v1364
        %1366 = vmatmul.f32.gmra.mxu0 %v1297
        %v1367 = vpop.f32.mrf.mxu0
        %v1368 = vadd.f32 0.0, %v1367
        %1369 = vmatmul.f32.gmra.mxu0 %v1300
        %v1370 = vpop.f32.mrf.mxu0
        %v1371 = vadd.f32 0.0, %v1370
        %1372 = vmatmul.f32.gmra.mxu0 %v1303
        %v1373 = vpop.f32.mrf.mxu0
        %v1374 = vadd.f32 0.0, %v1373
        %1375 = vdwg.mxu0
        %v1376 = vadd.f32 %v701, %v1335
        %v1377 = vadd.f32 %v704, %v1338
        %v1378 = vadd.f32 %v707, %v1341
        %v1379 = vadd.f32 %v710, %v1344
        %v1380 = vadd.f32 %v713, %v1347
        %v1381 = vadd.f32 %v716, %v1350
        %v1382 = vadd.f32 %v719, %v1353
        %v1383 = vadd.f32 %v722, %v1356
        %v1384 = vadd.f32 %v725, %v1359
        %v1385 = vadd.f32 %v728, %v1362
        %v1386 = vadd.f32 %v731, %v1365
        %v1387 = vadd.f32 %v734, %v1368
        %v1388 = vadd.f32 %v737, %v1371
        %v1389 = vadd.f32 %v740, %v1374
        %v1390 = vld [vmem:[#allocation2] sm:$0xff]
        %v1391 = vld [vmem:[#allocation2 + $0x8] sm:$0xff]
        %v1392 = vld [vmem:[#allocation2 + $0x10] sm:$0xff]
        %v1393 = vld [vmem:[#allocation2 + $0x18] sm:$0xff]
        %v1394 = vld [vmem:[#allocation2 + $0x20] sm:$0xff]
        %v1395 = vld [vmem:[#allocation2 + $0x28] sm:$0xff]
        %v1396 = vld [vmem:[#allocation2 + $0x30] sm:$0xff]
        %v1397 = vld [vmem:[#allocation2 + $0x38] sm:$0xff]
        %v1398 = vld [vmem:[#allocation2 + $0x40] sm:$0xff]
        %v1399 = vld [vmem:[#allocation2 + $0x48] sm:$0xff]
        %v1400 = vld [vmem:[#allocation2 + $0x50] sm:$0xff]
        %v1401 = vld [vmem:[#allocation2 + $0x58] sm:$0xff]
        %v1402 = vld [vmem:[#allocation2 + $0x60] sm:$0xff]
        %v1403 = vld [vmem:[#allocation2 + $0x68] sm:$0x1f]
        %1405 = vset.pattern.permute.xlu0 0
        %1406 = vperm.xlu0 %1405, %v1390
        %v1407 = vpop.permute.xlu0 %1406
        %1410 = vset.pattern.permute.xlu0 0
        %1411 = vperm.xlu0 %1410, %v1391
        %v1412 = vpop.permute.xlu0 %1411
        %1415 = vset.pattern.permute.xlu0 0
        %1416 = vperm.xlu0 %1415, %v1392
        %v1417 = vpop.permute.xlu0 %1416
        %1420 = vset.pattern.permute.xlu0 0
        %1421 = vperm.xlu0 %1420, %v1393
        %v1422 = vpop.permute.xlu0 %1421
        %1425 = vset.pattern.permute.xlu0 0
        %1426 = vperm.xlu0 %1425, %v1394
        %v1427 = vpop.permute.xlu0 %1426
        %1430 = vset.pattern.permute.xlu0 0
        %1431 = vperm.xlu0 %1430, %v1395
        %v1432 = vpop.permute.xlu0 %1431
        %1435 = vset.pattern.permute.xlu0 0
        %1436 = vperm.xlu0 %1435, %v1396
        %v1437 = vpop.permute.xlu0 %1436
        %1440 = vset.pattern.permute.xlu0 0
        %1441 = vperm.xlu0 %1440, %v1397
        %v1442 = vpop.permute.xlu0 %1441
        %1445 = vset.pattern.permute.xlu0 0
        %1446 = vperm.xlu0 %1445, %v1398
        %v1447 = vpop.permute.xlu0 %1446
        %1450 = vset.pattern.permute.xlu0 0
        %1451 = vperm.xlu0 %1450, %v1399
        %v1452 = vpop.permute.xlu0 %1451
        %1455 = vset.pattern.permute.xlu0 0
        %1456 = vperm.xlu0 %1455, %v1400
        %v1457 = vpop.permute.xlu0 %1456
        %1460 = vset.pattern.permute.xlu0 0
        %1461 = vperm.xlu0 %1460, %v1401
        %v1462 = vpop.permute.xlu0 %1461
        %1465 = vset.pattern.permute.xlu0 0
        %1466 = vperm.xlu0 %1465, %v1402
        %v1467 = vpop.permute.xlu0 %1466
        %1470 = vset.pattern.permute.xlu0 0
        %1471 = vperm.xlu0 %1470, %v1403
        %v1472 = vpop.permute.xlu0 %1471
        %v1474 = vadd.f32 %v1376, %v1407
        %v1475 = vadd.f32 %v1377, %v1412
        %v1476 = vadd.f32 %v1378, %v1417
        %v1477 = vadd.f32 %v1379, %v1422
        %v1478 = vadd.f32 %v1380, %v1427
        %v1479 = vadd.f32 %v1381, %v1432
        %v1480 = vadd.f32 %v1382, %v1437
        %v1481 = vadd.f32 %v1383, %v1442
        %v1482 = vadd.f32 %v1384, %v1447
        %v1483 = vadd.f32 %v1385, %v1452
        %v1484 = vadd.f32 %v1386, %v1457
        %v1485 = vadd.f32 %v1387, %v1462
        %v1486 = vadd.f32 %v1388, %v1467
        %v1487 = vadd.f32 %v1389, %v1472
        %v1488 = vld [vmem:[%s9] sm:$0x1]
        %v1489 = vld [vmem:[%s10] sm:$0x1]
        %v1490 = vsel %vm744, %v1474, 0.0
        %1491 = vadd.xlane.f32.xlu0 %v1490
        %v1492 = vpop.xlane.xlu0 %1491
        %v1493 = vsel %vm744, %v1475, 0.0
        %1494 = vadd.xlane.f32.xlu0 %v1493
        %v1495 = vpop.xlane.xlu0 %1494
        %v1496 = vsel %vm744, %v1476, 0.0
        %1497 = vadd.xlane.f32.xlu0 %v1496
        %v1498 = vpop.xlane.xlu0 %1497
        %v1499 = vsel %vm744, %v1477, 0.0
        %1500 = vadd.xlane.f32.xlu0 %v1499
        %v1501 = vpop.xlane.xlu0 %1500
        %v1502 = vsel %vm744, %v1478, 0.0
        %1503 = vadd.xlane.f32.xlu0 %v1502
        %v1504 = vpop.xlane.xlu0 %1503
        %v1505 = vsel %vm744, %v1479, 0.0
        %1506 = vadd.xlane.f32.xlu0 %v1505
        %v1507 = vpop.xlane.xlu0 %1506
        %v1508 = vsel %vm744, %v1480, 0.0
        %1509 = vadd.xlane.f32.xlu0 %v1508
        %v1510 = vpop.xlane.xlu0 %1509
        %v1511 = vsel %vm744, %v1481, 0.0
        %1512 = vadd.xlane.f32.xlu0 %v1511
        %v1513 = vpop.xlane.xlu0 %1512
        %v1514 = vsel %vm744, %v1482, 0.0
        %1515 = vadd.xlane.f32.xlu0 %v1514
        %v1516 = vpop.xlane.xlu0 %1515
        %v1517 = vsel %vm744, %v1483, 0.0
        %1518 = vadd.xlane.f32.xlu0 %v1517
        %v1519 = vpop.xlane.xlu0 %1518
        %v1520 = vsel %vm744, %v1484, 0.0
        %1521 = vadd.xlane.f32.xlu0 %v1520
        %v1522 = vpop.xlane.xlu0 %1521
        %v1523 = vsel %vm744, %v1485, 0.0
        %1524 = vadd.xlane.f32.xlu0 %v1523
        %v1525 = vpop.xlane.xlu0 %1524
        %v1526 = vsel %vm744, %v1486, 0.0
        %1527 = vadd.xlane.f32.xlu0 %v1526
        %v1528 = vpop.xlane.xlu0 %1527
        %v1529 = vsel %vm784, %v1487, 0.0
        %1530 = vadd.xlane.f32.xlu0 %v1529
        %v1531 = vpop.xlane.xlu0 %1530
        %v1532 = vmul.f32 %v1492, %v794
        %v1533 = vmul.f32 %v1495, %v794
        %v1534 = vmul.f32 %v1498, %v794
        %v1535 = vmul.f32 %v1501, %v794
        %v1536 = vmul.f32 %v1504, %v794
        %v1537 = vmul.f32 %v1507, %v794
        %v1538 = vmul.f32 %v1510, %v794
        %v1539 = vmul.f32 %v1513, %v794
        %v1540 = vmul.f32 %v1516, %v794
        %v1541 = vmul.f32 %v1519, %v794
        %v1542 = vmul.f32 %v1522, %v794
        %v1543 = vmul.f32 %v1525, %v794
        %v1544 = vmul.f32 %v1528, %v794
        %v1545 = vmul.f32 %v1531, %v794
        %v1546 = vsub.f32 %v1474, %v1532
        %v1547 = vsub.f32 %v1475, %v1533
        %v1548 = vsub.f32 %v1476, %v1534
        %v1549 = vsub.f32 %v1477, %v1535
        %v1550 = vsub.f32 %v1478, %v1536
        %v1551 = vsub.f32 %v1479, %v1537
        %v1552 = vsub.f32 %v1480, %v1538
        %v1553 = vsub.f32 %v1481, %v1539
        %v1554 = vsub.f32 %v1482, %v1540
        %v1555 = vsub.f32 %v1483, %v1541
        %v1556 = vsub.f32 %v1484, %v1542
        %v1557 = vsub.f32 %v1485, %v1543
        %v1558 = vsub.f32 %v1486, %v1544
        %v1559 = vsub.f32 %v1487, %v1545
        %v1560 = vmul.f32 %v1546, %v1546
        %v1561 = vmul.f32 %v1547, %v1547
        %v1562 = vmul.f32 %v1548, %v1548
        %v1563 = vmul.f32 %v1549, %v1549
        %v1564 = vmul.f32 %v1550, %v1550
        %v1565 = vmul.f32 %v1551, %v1551
        %v1566 = vmul.f32 %v1552, %v1552
        %v1567 = vmul.f32 %v1553, %v1553
        %v1568 = vmul.f32 %v1554, %v1554
        %v1569 = vmul.f32 %v1555, %v1555
        %v1570 = vmul.f32 %v1556, %v1556
        %v1571 = vmul.f32 %v1557, %v1557
        %v1572 = vmul.f32 %v1558, %v1558
        %v1573 = vmul.f32 %v1559, %v1559
        %v1574 = vsel %vm744, %v1560, 0.0
        %1575 = vadd.xlane.f32.xlu0 %v1574
        %v1576 = vpop.xlane.xlu0 %1575
        %v1577 = vsel %vm744, %v1561, 0.0
        %1578 = vadd.xlane.f32.xlu0 %v1577
        %v1579 = vpop.xlane.xlu0 %1578
        %v1580 = vsel %vm744, %v1562, 0.0
        %1581 = vadd.xlane.f32.xlu0 %v1580
        %v1582 = vpop.xlane.xlu0 %1581
        %v1583 = vsel %vm744, %v1563, 0.0
        %1584 = vadd.xlane.f32.xlu0 %v1583
        %v1585 = vpop.xlane.xlu0 %1584
        %v1586 = vsel %vm744, %v1564, 0.0
        %1587 = vadd.xlane.f32.xlu0 %v1586
        %v1588 = vpop.xlane.xlu0 %1587
        %v1589 = vsel %vm744, %v1565, 0.0
        %1590 = vadd.xlane.f32.xlu0 %v1589
        %v1591 = vpop.xlane.xlu0 %1590
        %v1592 = vsel %vm744, %v1566, 0.0
        %1593 = vadd.xlane.f32.xlu0 %v1592
        %v1594 = vpop.xlane.xlu0 %1593
        %v1595 = vsel %vm744, %v1567, 0.0
        %1596 = vadd.xlane.f32.xlu0 %v1595
        %v1597 = vpop.xlane.xlu0 %1596
        %v1598 = vsel %vm744, %v1568, 0.0
        %1599 = vadd.xlane.f32.xlu0 %v1598
        %v1600 = vpop.xlane.xlu0 %1599
        %v1601 = vsel %vm744, %v1569, 0.0
        %1602 = vadd.xlane.f32.xlu0 %v1601
        %v1603 = vpop.xlane.xlu0 %1602
        %v1604 = vsel %vm744, %v1570, 0.0
        %1605 = vadd.xlane.f32.xlu0 %v1604
        %v1606 = vpop.xlane.xlu0 %1605
        %v1607 = vsel %vm744, %v1571, 0.0
        %1608 = vadd.xlane.f32.xlu0 %v1607
        %v1609 = vpop.xlane.xlu0 %1608
        %v1610 = vsel %vm744, %v1572, 0.0
        %1611 = vadd.xlane.f32.xlu0 %v1610
        %v1612 = vpop.xlane.xlu0 %1611
        %v1613 = vsel %vm784, %v1573, 0.0
        %1614 = vadd.xlane.f32.xlu0 %v1613
        %v1615 = vpop.xlane.xlu0 %1614
        %v1616 = vmul.f32 %v1576, %v794
        %v1617 = vmul.f32 %v1579, %v794
        %v1618 = vmul.f32 %v1582, %v794
        %v1619 = vmul.f32 %v1585, %v794
        %v1620 = vmul.f32 %v1588, %v794
        %v1621 = vmul.f32 %v1591, %v794
        %v1622 = vmul.f32 %v1594, %v794
        %v1623 = vmul.f32 %v1597, %v794
        %v1624 = vmul.f32 %v1600, %v794
        %v1625 = vmul.f32 %v1603, %v794
        %v1626 = vmul.f32 %v1606, %v794
        %v1627 = vmul.f32 %v1609, %v794
        %v1628 = vmul.f32 %v1612, %v794
        %v1629 = vmul.f32 %v1615, %v794
        %v1630 = vadd.f32 %v1616, 1e-05
        %v1631 = vadd.f32 %v1617, 1e-05
        %v1632 = vadd.f32 %v1618, 1e-05
        %v1633 = vadd.f32 %v1619, 1e-05
        %v1634 = vadd.f32 %v1620, 1e-05
        %v1635 = vadd.f32 %v1621, 1e-05
        %v1636 = vadd.f32 %v1622, 1e-05
        %v1637 = vadd.f32 %v1623, 1e-05
        %v1638 = vadd.f32 %v1624, 1e-05
        %v1639 = vadd.f32 %v1625, 1e-05
        %v1640 = vadd.f32 %v1626, 1e-05
        %v1641 = vadd.f32 %v1627, 1e-05
        %v1642 = vadd.f32 %v1628, 1e-05
        %v1643 = vadd.f32 %v1629, 1e-05
        %v1644 = vrsqrt.pop %v1630
        %v1645 = vmul.f32 %v1644, %v1630
        %v1646 = vmul.f32 %v1645, %v1644
        %v1647 = vmul.f32 0.5, %v1646
        %v1648 = vsub.f32 1.5, %v1647
        %v1649 = vmul.f32 %v1644, %v1648
        %vm1650 = vweird.f32 %v1630
        %vm1651 = vweird.f32 %v1644
        %vm1652 = vmor %vm1650, %vm1651
        %v1653 = vsel %vm1652, %v1644, %v1649
        %v1654 = vrsqrt.pop %v1631
        %v1655 = vmul.f32 %v1654, %v1631
        %v1656 = vmul.f32 %v1655, %v1654
        %v1657 = vmul.f32 0.5, %v1656
        %v1658 = vsub.f32 1.5, %v1657
        %v1659 = vmul.f32 %v1654, %v1658
        %vm1660 = vweird.f32 %v1631
        %vm1661 = vweird.f32 %v1654
        %vm1662 = vmor %vm1660, %vm1661
        %v1663 = vsel %vm1662, %v1654, %v1659
        %v1664 = vrsqrt.pop %v1632
        %v1665 = vmul.f32 %v1664, %v1632
        %v1666 = vmul.f32 %v1665, %v1664
        %v1667 = vmul.f32 0.5, %v1666
        %v1668 = vsub.f32 1.5, %v1667
        %v1669 = vmul.f32 %v1664, %v1668
        %vm1670 = vweird.f32 %v1632
        %vm1671 = vweird.f32 %v1664
        %vm1672 = vmor %vm1670, %vm1671
        %v1673 = vsel %vm1672, %v1664, %v1669
        %v1674 = vrsqrt.pop %v1633
        %v1675 = vmul.f32 %v1674, %v1633
        %v1676 = vmul.f32 %v1675, %v1674
        %v1677 = vmul.f32 0.5, %v1676
        %v1678 = vsub.f32 1.5, %v1677
        %v1679 = vmul.f32 %v1674, %v1678
        %vm1680 = vweird.f32 %v1633
        %vm1681 = vweird.f32 %v1674
        %vm1682 = vmor %vm1680, %vm1681
        %v1683 = vsel %vm1682, %v1674, %v1679
        %v1684 = vrsqrt.pop %v1634
        %v1685 = vmul.f32 %v1684, %v1634
        %v1686 = vmul.f32 %v1685, %v1684
        %v1687 = vmul.f32 0.5, %v1686
        %v1688 = vsub.f32 1.5, %v1687
        %v1689 = vmul.f32 %v1684, %v1688
        %vm1690 = vweird.f32 %v1634
        %vm1691 = vweird.f32 %v1684
        %vm1692 = vmor %vm1690, %vm1691
        %v1693 = vsel %vm1692, %v1684, %v1689
        %v1694 = vrsqrt.pop %v1635
        %v1695 = vmul.f32 %v1694, %v1635
        %v1696 = vmul.f32 %v1695, %v1694
        %v1697 = vmul.f32 0.5, %v1696
        %v1698 = vsub.f32 1.5, %v1697
        %v1699 = vmul.f32 %v1694, %v1698
        %vm1700 = vweird.f32 %v1635
        %vm1701 = vweird.f32 %v1694
        %vm1702 = vmor %vm1700, %vm1701
        %v1703 = vsel %vm1702, %v1694, %v1699
        %v1704 = vrsqrt.pop %v1636
        %v1705 = vmul.f32 %v1704, %v1636
        %v1706 = vmul.f32 %v1705, %v1704
        %v1707 = vmul.f32 0.5, %v1706
        %v1708 = vsub.f32 1.5, %v1707
        %v1709 = vmul.f32 %v1704, %v1708
        %vm1710 = vweird.f32 %v1636
        %vm1711 = vweird.f32 %v1704
        %vm1712 = vmor %vm1710, %vm1711
        %v1713 = vsel %vm1712, %v1704, %v1709
        %v1714 = vrsqrt.pop %v1637
        %v1715 = vmul.f32 %v1714, %v1637
        %v1716 = vmul.f32 %v1715, %v1714
        %v1717 = vmul.f32 0.5, %v1716
        %v1718 = vsub.f32 1.5, %v1717
        %v1719 = vmul.f32 %v1714, %v1718
        %vm1720 = vweird.f32 %v1637
        %vm1721 = vweird.f32 %v1714
        %vm1722 = vmor %vm1720, %vm1721
        %v1723 = vsel %vm1722, %v1714, %v1719
        %v1724 = vrsqrt.pop %v1638
        %v1725 = vmul.f32 %v1724, %v1638
        %v1726 = vmul.f32 %v1725, %v1724
        %v1727 = vmul.f32 0.5, %v1726
        %v1728 = vsub.f32 1.5, %v1727
        %v1729 = vmul.f32 %v1724, %v1728
        %vm1730 = vweird.f32 %v1638
        %vm1731 = vweird.f32 %v1724
        %vm1732 = vmor %vm1730, %vm1731
        %v1733 = vsel %vm1732, %v1724, %v1729
        %v1734 = vrsqrt.pop %v1639
        %v1735 = vmul.f32 %v1734, %v1639
        %v1736 = vmul.f32 %v1735, %v1734
        %v1737 = vmul.f32 0.5, %v1736
        %v1738 = vsub.f32 1.5, %v1737
        %v1739 = vmul.f32 %v1734, %v1738
        %vm1740 = vweird.f32 %v1639
        %vm1741 = vweird.f32 %v1734
        %vm1742 = vmor %vm1740, %vm1741
        %v1743 = vsel %vm1742, %v1734, %v1739
        %v1744 = vrsqrt.pop %v1640
        %v1745 = vmul.f32 %v1744, %v1640
        %v1746 = vmul.f32 %v1745, %v1744
        %v1747 = vmul.f32 0.5, %v1746
        %v1748 = vsub.f32 1.5, %v1747
        %v1749 = vmul.f32 %v1744, %v1748
        %vm1750 = vweird.f32 %v1640
        %vm1751 = vweird.f32 %v1744
        %vm1752 = vmor %vm1750, %vm1751
        %v1753 = vsel %vm1752, %v1744, %v1749
        %v1754 = vrsqrt.pop %v1641
        %v1755 = vmul.f32 %v1754, %v1641
        %v1756 = vmul.f32 %v1755, %v1754
        %v1757 = vmul.f32 0.5, %v1756
        %v1758 = vsub.f32 1.5, %v1757
        %v1759 = vmul.f32 %v1754, %v1758
        %vm1760 = vweird.f32 %v1641
        %vm1761 = vweird.f32 %v1754
        %vm1762 = vmor %vm1760, %vm1761
        %v1763 = vsel %vm1762, %v1754, %v1759
        %v1764 = vrsqrt.pop %v1642
        %v1765 = vmul.f32 %v1764, %v1642
        %v1766 = vmul.f32 %v1765, %v1764
        %v1767 = vmul.f32 0.5, %v1766
        %v1768 = vsub.f32 1.5, %v1767
        %v1769 = vmul.f32 %v1764, %v1768
        %vm1770 = vweird.f32 %v1642
        %vm1771 = vweird.f32 %v1764
        %vm1772 = vmor %vm1770, %vm1771
        %v1773 = vsel %vm1772, %v1764, %v1769
        %v1774 = vrsqrt.pop %v1643
        %v1775 = vmul.f32 %v1774, %v1643
        %v1776 = vmul.f32 %v1775, %v1774
        %v1777 = vmul.f32 0.5, %v1776
        %v1778 = vsub.f32 1.5, %v1777
        %v1779 = vmul.f32 %v1774, %v1778
        %vm1780 = vweird.f32 %v1643
        %vm1781 = vweird.f32 %v1774
        %vm1782 = vmor %vm1780, %vm1781
        %v1783 = vsel %vm1782, %v1774, %v1779
        %v1784 = vmul.f32 %v1546, %v1653
        %v1785 = vmul.f32 %v1547, %v1663
        %v1786 = vmul.f32 %v1548, %v1673
        %v1787 = vmul.f32 %v1549, %v1683
        %v1788 = vmul.f32 %v1550, %v1693
        %v1789 = vmul.f32 %v1551, %v1703
        %v1790 = vmul.f32 %v1552, %v1713
        %v1791 = vmul.f32 %v1553, %v1723
        %v1792 = vmul.f32 %v1554, %v1733
        %v1793 = vmul.f32 %v1555, %v1743
        %v1794 = vmul.f32 %v1556, %v1753
        %v1795 = vmul.f32 %v1557, %v1763
        %v1796 = vmul.f32 %v1558, %v1773
        %v1797 = vmul.f32 %v1559, %v1783
        %v1799 = vperm.slane %v1488, 0
        %v1801 = vmul.f32 %v1784, %v1799
        %v1802 = vmul.f32 %v1785, %v1799
        %v1803 = vmul.f32 %v1786, %v1799
        %v1804 = vmul.f32 %v1787, %v1799
        %v1805 = vmul.f32 %v1788, %v1799
        %v1806 = vmul.f32 %v1789, %v1799
        %v1807 = vmul.f32 %v1790, %v1799
        %v1808 = vmul.f32 %v1791, %v1799
        %v1809 = vmul.f32 %v1792, %v1799
        %v1810 = vmul.f32 %v1793, %v1799
        %v1811 = vmul.f32 %v1794, %v1799
        %v1812 = vmul.f32 %v1795, %v1799
        %v1813 = vmul.f32 %v1796, %v1799
        %v1814 = vmul.f32 %v1797, %v1799
        %v1816 = vperm.slane %v1489, 0
        %v1818 = vadd.f32 %v1801, %v1816
        %v1819 = vadd.f32 %v1802, %v1816
        %v1820 = vadd.f32 %v1803, %v1816
        %v1821 = vadd.f32 %v1804, %v1816
        %v1822 = vadd.f32 %v1805, %v1816
        %v1823 = vadd.f32 %v1806, %v1816
        %v1824 = vadd.f32 %v1807, %v1816
        %v1825 = vadd.f32 %v1808, %v1816
        %v1826 = vadd.f32 %v1809, %v1816
        %v1827 = vadd.f32 %v1810, %v1816
        %v1828 = vadd.f32 %v1811, %v1816
        %v1829 = vadd.f32 %v1812, %v1816
        %v1830 = vadd.f32 %v1813, %v1816
        %v1831 = vadd.f32 %v1814, %v1816
        %v1832 = vld [vmem:[%s11] sm:$0xff]
        %v1833 = vld [vmem:[%s11 + $0x8] sm:$0xff]
        %v1834 = vld [vmem:[%s11 + $0x10] sm:$0xff]
        %v1835 = vld [vmem:[%s11 + $0x18] sm:$0xff]
        %v1836 = vld [vmem:[%s12] sm:$0x1]
        %v1838 = vperm.slane %v1836, 0
        %v1841 = vsel %vm744, %v1818, 0
        %v1844 = vsel %vm744, %v1819, 0
        %v1847 = vsel %vm744, %v1820, 0
        %v1850 = vsel %vm744, %v1821, 0
        %v1853 = vsel %vm744, %v1822, 0
        %v1856 = vsel %vm744, %v1823, 0
        %v1859 = vsel %vm744, %v1824, 0
        %v1862 = vsel %vm744, %v1825, 0
        %v1865 = vsel %vm744, %v1826, 0
        %v1868 = vsel %vm744, %v1827, 0
        %v1871 = vsel %vm744, %v1828, 0
        %v1874 = vsel %vm744, %v1829, 0
        %v1877 = vsel %vm744, %v1830, 0
        %v1880 = vsel %vm744, %v1831, 0
        %1882 = vmatpush.msra.mxu0 0.0
        %1883 = vmatpush.msra.mxu0 0.0
        %1884 = vmatpush.msra.mxu0 0.0
        %1885 = vmatpush.msra.mxu0 0.0
        %1886 = vmatpush.msra.mxu0 0.0
        %1887 = vmatpush.msra.mxu0 0.0
        %1888 = vmatpush.msra.mxu0 0.0
        %1889 = vmatpush.msra.mxu0 0.0
        %1890 = vmatpush.msra.mxu0 0.0
        %1891 = vmatpush.msra.mxu0 0.0
        %1892 = vmatpush.msra.mxu0 0.0
        %1893 = vmatpush.msra.mxu0 0.0
        %1894 = vmatpush.msra.mxu0 %v1835
        %1895 = vmatpush.msra.mxu0 %v1834
        %1896 = vmatpush.msra.mxu0 %v1833
        %1897 = vmatpush.msra.mxu0 %v1832
        %1898 = vmatmul.f32.gmra.mxu0 %v1841
        %v1899 = vpop.f32.mrf.mxu0
        %v1900 = vadd.f32 %v1838, %v1899
        %1901 = vmatmul.f32.gmra.mxu0 %v1844
        %v1902 = vpop.f32.mrf.mxu0
        %v1903 = vadd.f32 %v1838, %v1902
        %1904 = vmatmul.f32.gmra.mxu0 %v1847
        %v1905 = vpop.f32.mrf.mxu0
        %v1906 = vadd.f32 %v1838, %v1905
        %1907 = vmatmul.f32.gmra.mxu0 %v1850
        %v1908 = vpop.f32.mrf.mxu0
        %v1909 = vadd.f32 %v1838, %v1908
        %1910 = vmatmul.f32.gmra.mxu0 %v1853
        %v1911 = vpop.f32.mrf.mxu0
        %v1912 = vadd.f32 %v1838, %v1911
        %1913 = vmatmul.f32.gmra.mxu0 %v1856
        %v1914 = vpop.f32.mrf.mxu0
        %v1915 = vadd.f32 %v1838, %v1914
        %1916 = vmatmul.f32.gmra.mxu0 %v1859
        %v1917 = vpop.f32.mrf.mxu0
        %v1918 = vadd.f32 %v1838, %v1917
        %1919 = vmatmul.f32.gmra.mxu0 %v1862
        %v1920 = vpop.f32.mrf.mxu0
        %v1921 = vadd.f32 %v1838, %v1920
        %1922 = vmatmul.f32.gmra.mxu0 %v1865
        %v1923 = vpop.f32.mrf.mxu0
        %v1924 = vadd.f32 %v1838, %v1923
        %1925 = vmatmul.f32.gmra.mxu0 %v1868
        %v1926 = vpop.f32.mrf.mxu0
        %v1927 = vadd.f32 %v1838, %v1926
        %1928 = vmatmul.f32.gmra.mxu0 %v1871
        %v1929 = vpop.f32.mrf.mxu0
        %v1930 = vadd.f32 %v1838, %v1929
        %1931 = vmatmul.f32.gmra.mxu0 %v1874
        %v1932 = vpop.f32.mrf.mxu0
        %v1933 = vadd.f32 %v1838, %v1932
        %1934 = vmatmul.f32.gmra.mxu0 %v1877
        %v1935 = vpop.f32.mrf.mxu0
        %v1936 = vadd.f32 %v1838, %v1935
        %1937 = vmatmul.f32.gmra.mxu0 %v1880
        %v1938 = vpop.f32.mrf.mxu0
        %v1939 = vadd.f32 %v1838, %v1938
        %1940 = vdwg.mxu0
        %v1941 = vmul.f32 %v1900, 0.5
        %v1942 = vmul.f32 %v1903, 0.5
        %v1943 = vmul.f32 %v1906, 0.5
        %v1944 = vmul.f32 %v1909, 0.5
        %v1945 = vmul.f32 %v1912, 0.5
        %v1946 = vmul.f32 %v1915, 0.5
        %v1947 = vmul.f32 %v1918, 0.5
        %v1948 = vmul.f32 %v1921, 0.5
        %v1949 = vmul.f32 %v1924, 0.5
        %v1950 = vmul.f32 %v1927, 0.5
        %v1951 = vmul.f32 %v1930, 0.5
        %v1952 = vmul.f32 %v1933, 0.5
        %v1953 = vmul.f32 %v1936, 0.5
        %v1954 = vmul.f32 %v1939, 0.5
        %v1955 = vmul.f32 %v1900, 0.044715
        %v1956 = vmul.f32 %v1903, 0.044715
        %v1957 = vmul.f32 %v1906, 0.044715
        %v1958 = vmul.f32 %v1909, 0.044715
        %v1959 = vmul.f32 %v1912, 0.044715
        %v1960 = vmul.f32 %v1915, 0.044715
        %v1961 = vmul.f32 %v1918, 0.044715
        %v1962 = vmul.f32 %v1921, 0.044715
        %v1963 = vmul.f32 %v1924, 0.044715
        %v1964 = vmul.f32 %v1927, 0.044715
        %v1965 = vmul.f32 %v1930, 0.044715
        %v1966 = vmul.f32 %v1933, 0.044715
        %v1967 = vmul.f32 %v1936, 0.044715
        %v1968 = vmul.f32 %v1939, 0.044715
        %v1969 = vmul.f32 %v1955, %v1900
        %v1970 = vmul.f32 %v1956, %v1903
        %v1971 = vmul.f32 %v1957, %v1906
        %v1972 = vmul.f32 %v1958, %v1909
        %v1973 = vmul.f32 %v1959, %v1912
        %v1974 = vmul.f32 %v1960, %v1915
        %v1975 = vmul.f32 %v1961, %v1918
        %v1976 = vmul.f32 %v1962, %v1921
        %v1977 = vmul.f32 %v1963, %v1924
        %v1978 = vmul.f32 %v1964, %v1927
        %v1979 = vmul.f32 %v1965, %v1930
        %v1980 = vmul.f32 %v1966, %v1933
        %v1981 = vmul.f32 %v1967, %v1936
        %v1982 = vmul.f32 %v1968, %v1939
        %v1983 = vmul.f32 %v1969, %v1900
        %v1984 = vmul.f32 %v1970, %v1903
        %v1985 = vmul.f32 %v1971, %v1906
        %v1986 = vmul.f32 %v1972, %v1909
        %v1987 = vmul.f32 %v1973, %v1912
        %v1988 = vmul.f32 %v1974, %v1915
        %v1989 = vmul.f32 %v1975, %v1918
        %v1990 = vmul.f32 %v1976, %v1921
        %v1991 = vmul.f32 %v1977, %v1924
        %v1992 = vmul.f32 %v1978, %v1927
        %v1993 = vmul.f32 %v1979, %v1930
        %v1994 = vmul.f32 %v1980, %v1933
        %v1995 = vmul.f32 %v1981, %v1936
        %v1996 = vmul.f32 %v1982, %v1939
        %v1997 = vadd.f32 %v1900, %v1983
        %v1998 = vadd.f32 %v1903, %v1984
        %v1999 = vadd.f32 %v1906, %v1985
        %v2000 = vadd.f32 %v1909, %v1986
        %v2001 = vadd.f32 %v1912, %v1987
        %v2002 = vadd.f32 %v1915, %v1988
        %v2003 = vadd.f32 %v1918, %v1989
        %v2004 = vadd.f32 %v1921, %v1990
        %v2005 = vadd.f32 %v1924, %v1991
        %v2006 = vadd.f32 %v1927, %v1992
        %v2007 = vadd.f32 %v1930, %v1993
        %v2008 = vadd.f32 %v1933, %v1994
        %v2009 = vadd.f32 %v1936, %v1995
        %v2010 = vadd.f32 %v1939, %v1996
        %v2011 = vmul.f32 %v1997, 0.7978846
        %v2012 = vmul.f32 %v1998, 0.7978846
        %v2013 = vmul.f32 %v1999, 0.7978846
        %v2014 = vmul.f32 %v2000, 0.7978846
        %v2015 = vmul.f32 %v2001, 0.7978846
        %v2016 = vmul.f32 %v2002, 0.7978846
        %v2017 = vmul.f32 %v2003, 0.7978846
        %v2018 = vmul.f32 %v2004, 0.7978846
        %v2019 = vmul.f32 %v2005, 0.7978846
        %v2020 = vmul.f32 %v2006, 0.7978846
        %v2021 = vmul.f32 %v2007, 0.7978846
        %v2022 = vmul.f32 %v2008, 0.7978846
        %v2023 = vmul.f32 %v2009, 0.7978846
        %v2024 = vmul.f32 %v2010, 0.7978846
        %v2025 = vtanh.pop %v2011
        %v2026 = vtanh.pop %v2012
        %v2027 = vtanh.pop %v2013
        %v2028 = vtanh.pop %v2014
        %v2029 = vtanh.pop %v2015
        %v2030 = vtanh.pop %v2016
        %v2031 = vtanh.pop %v2017
        %v2032 = vtanh.pop %v2018
        %v2033 = vtanh.pop %v2019
        %v2034 = vtanh.pop %v2020
        %v2035 = vtanh.pop %v2021
        %v2036 = vtanh.pop %v2022
        %v2037 = vtanh.pop %v2023
        %v2038 = vtanh.pop %v2024
        %v2039 = vadd.f32 %v2025, 1.0
        %v2040 = vadd.f32 %v2026, 1.0
        %v2041 = vadd.f32 %v2027, 1.0
        %v2042 = vadd.f32 %v2028, 1.0
        %v2043 = vadd.f32 %v2029, 1.0
        %v2044 = vadd.f32 %v2030, 1.0
        %v2045 = vadd.f32 %v2031, 1.0
        %v2046 = vadd.f32 %v2032, 1.0
        %v2047 = vadd.f32 %v2033, 1.0
        %v2048 = vadd.f32 %v2034, 1.0
        %v2049 = vadd.f32 %v2035, 1.0
        %v2050 = vadd.f32 %v2036, 1.0
        %v2051 = vadd.f32 %v2037, 1.0
        %v2052 = vadd.f32 %v2038, 1.0
        %v2053 = vmul.f32 %v1941, %v2039
        %v2054 = vmul.f32 %v1942, %v2040
        %v2055 = vmul.f32 %v1943, %v2041
        %v2056 = vmul.f32 %v1944, %v2042
        %v2057 = vmul.f32 %v1945, %v2043
        %v2058 = vmul.f32 %v1946, %v2044
        %v2059 = vmul.f32 %v1947, %v2045
        %v2060 = vmul.f32 %v1948, %v2046
        %v2061 = vmul.f32 %v1949, %v2047
        %v2062 = vmul.f32 %v1950, %v2048
        %v2063 = vmul.f32 %v1951, %v2049
        %v2064 = vmul.f32 %v1952, %v2050
        %v2065 = vmul.f32 %v1953, %v2051
        %v2066 = vmul.f32 %v1954, %v2052
        %v2067 = vld [vmem:[%s13] sm:$0xff]
        %v2068 = vld [vmem:[%s13 + $0x8] sm:$0xff]
        %v2069 = vld [vmem:[%s13 + $0x10] sm:$0xff]
        %v2070 = vld [vmem:[%s13 + $0x18] sm:$0xff]
        %v2071 = vld [vmem:[%s14] sm:$0x1]
        %v2073 = vperm.slane %v2071, 0
        %v2076 = vsel %vm744, %v2053, 0
        %v2079 = vsel %vm744, %v2054, 0
        %v2082 = vsel %vm744, %v2055, 0
        %v2085 = vsel %vm744, %v2056, 0
        %v2088 = vsel %vm744, %v2057, 0
        %v2091 = vsel %vm744, %v2058, 0
        %v2094 = vsel %vm744, %v2059, 0
        %v2097 = vsel %vm744, %v2060, 0
        %v2100 = vsel %vm744, %v2061, 0
        %v2103 = vsel %vm744, %v2062, 0
        %v2106 = vsel %vm744, %v2063, 0
        %v2109 = vsel %vm744, %v2064, 0
        %v2112 = vsel %vm744, %v2065, 0
        %v2115 = vsel %vm744, %v2066, 0
        %2117 = vmatpush.msra.mxu0 0.0
        %2118 = vmatpush.msra.mxu0 0.0
        %2119 = vmatpush.msra.mxu0 0.0
        %2120 = vmatpush.msra.mxu0 0.0
        %2121 = vmatpush.msra.mxu0 0.0
        %2122 = vmatpush.msra.mxu0 0.0
        %2123 = vmatpush.msra.mxu0 0.0
        %2124 = vmatpush.msra.mxu0 0.0
        %2125 = vmatpush.msra.mxu0 0.0
        %2126 = vmatpush.msra.mxu0 0.0
        %2127 = vmatpush.msra.mxu0 0.0
        %2128 = vmatpush.msra.mxu0 0.0
        %2129 = vmatpush.msra.mxu0 %v2070
        %2130 = vmatpush.msra.mxu0 %v2069
        %2131 = vmatpush.msra.mxu0 %v2068
        %2132 = vmatpush.msra.mxu0 %v2067
        %2133 = vmatmul.f32.gmra.mxu0 %v2076
        %v2134 = vpop.f32.mrf.mxu0
        %v2135 = vadd.f32 %v2073, %v2134
        %2136 = vmatmul.f32.gmra.mxu0 %v2079
        %v2137 = vpop.f32.mrf.mxu0
        %v2138 = vadd.f32 %v2073, %v2137
        %2139 = vmatmul.f32.gmra.mxu0 %v2082
        %v2140 = vpop.f32.mrf.mxu0
        %v2141 = vadd.f32 %v2073, %v2140
        %2142 = vmatmul.f32.gmra.mxu0 %v2085
        %v2143 = vpop.f32.mrf.mxu0
        %v2144 = vadd.f32 %v2073, %v2143
        %2145 = vmatmul.f32.gmra.mxu0 %v2088
        %v2146 = vpop.f32.mrf.mxu0
        %v2147 = vadd.f32 %v2073, %v2146
        %2148 = vmatmul.f32.gmra.mxu0 %v2091
        %v2149 = vpop.f32.mrf.mxu0
        %v2150 = vadd.f32 %v2073, %v2149
        %2151 = vmatmul.f32.gmra.mxu0 %v2094
        %v2152 = vpop.f32.mrf.mxu0
        %v2153 = vadd.f32 %v2073, %v2152
        %2154 = vmatmul.f32.gmra.mxu0 %v2097
        %v2155 = vpop.f32.mrf.mxu0
        %v2156 = vadd.f32 %v2073, %v2155
        %2157 = vmatmul.f32.gmra.mxu0 %v2100
        %v2158 = vpop.f32.mrf.mxu0
        %v2159 = vadd.f32 %v2073, %v2158
        %2160 = vmatmul.f32.gmra.mxu0 %v2103
        %v2161 = vpop.f32.mrf.mxu0
        %v2162 = vadd.f32 %v2073, %v2161
        %2163 = vmatmul.f32.gmra.mxu0 %v2106
        %v2164 = vpop.f32.mrf.mxu0
        %v2165 = vadd.f32 %v2073, %v2164
        %2166 = vmatmul.f32.gmra.mxu0 %v2109
        %v2167 = vpop.f32.mrf.mxu0
        %v2168 = vadd.f32 %v2073, %v2167
        %2169 = vmatmul.f32.gmra.mxu0 %v2112
        %v2170 = vpop.f32.mrf.mxu0
        %v2171 = vadd.f32 %v2073, %v2170
        %2172 = vmatmul.f32.gmra.mxu0 %v2115
        %v2173 = vpop.f32.mrf.mxu0
        %v2174 = vadd.f32 %v2073, %v2173
        %2175 = vdwg.mxu0
        %v2176 = vadd.f32 %v1474, %v2135
        %v2177 = vadd.f32 %v1475, %v2138
        %v2178 = vadd.f32 %v1476, %v2141
        %v2179 = vadd.f32 %v1477, %v2144
        %v2180 = vadd.f32 %v1478, %v2147
        %v2181 = vadd.f32 %v1479, %v2150
        %v2182 = vadd.f32 %v1480, %v2153
        %v2183 = vadd.f32 %v1481, %v2156
        %v2184 = vadd.f32 %v1482, %v2159
        %v2185 = vadd.f32 %v1483, %v2162
        %v2186 = vadd.f32 %v1484, %v2165
        %v2187 = vadd.f32 %v1485, %v2168
        %v2188 = vadd.f32 %v1486, %v2171
        %v2189 = vadd.f32 %v1487, %v2174
        %v2190 = vld [vmem:[%s15] sm:$0x1]
        %v2191 = vld [vmem:[%s16] sm:$0x1]
        %v2192 = vsel %vm744, %v2176, 0.0
        %2193 = vadd.xlane.f32.xlu0 %v2192
        %v2194 = vpop.xlane.xlu0 %2193
        %v2195 = vsel %vm744, %v2177, 0.0
        %2196 = vadd.xlane.f32.xlu0 %v2195
        %v2197 = vpop.xlane.xlu0 %2196
        %v2198 = vsel %vm744, %v2178, 0.0
        %2199 = vadd.xlane.f32.xlu0 %v2198
        %v2200 = vpop.xlane.xlu0 %2199
        %v2201 = vsel %vm744, %v2179, 0.0
        %2202 = vadd.xlane.f32.xlu0 %v2201
        %v2203 = vpop.xlane.xlu0 %2202
        %v2204 = vsel %vm744, %v2180, 0.0
        %2205 = vadd.xlane.f32.xlu0 %v2204
        %v2206 = vpop.xlane.xlu0 %2205
        %v2207 = vsel %vm744, %v2181, 0.0
        %2208 = vadd.xlane.f32.xlu0 %v2207
        %v2209 = vpop.xlane.xlu0 %2208
        %v2210 = vsel %vm744, %v2182, 0.0
        %2211 = vadd.xlane.f32.xlu0 %v2210
        %v2212 = vpop.xlane.xlu0 %2211
        %v2213 = vsel %vm744, %v2183, 0.0
        %2214 = vadd.xlane.f32.xlu0 %v2213
        %v2215 = vpop.xlane.xlu0 %2214
        %v2216 = vsel %vm744, %v2184, 0.0
        %2217 = vadd.xlane.f32.xlu0 %v2216
        %v2218 = vpop.xlane.xlu0 %2217
        %v2219 = vsel %vm744, %v2185, 0.0
        %2220 = vadd.xlane.f32.xlu0 %v2219
        %v2221 = vpop.xlane.xlu0 %2220
        %v2222 = vsel %vm744, %v2186, 0.0
        %2223 = vadd.xlane.f32.xlu0 %v2222
        %v2224 = vpop.xlane.xlu0 %2223
        %v2225 = vsel %vm744, %v2187, 0.0
        %2226 = vadd.xlane.f32.xlu0 %v2225
        %v2227 = vpop.xlane.xlu0 %2226
        %v2228 = vsel %vm744, %v2188, 0.0
        %2229 = vadd.xlane.f32.xlu0 %v2228
        %v2230 = vpop.xlane.xlu0 %2229
        %v2231 = vsel %vm784, %v2189, 0.0
        %2232 = vadd.xlane.f32.xlu0 %v2231
        %v2233 = vpop.xlane.xlu0 %2232
        %v2234 = vmul.f32 %v2194, %v794
        %v2235 = vmul.f32 %v2197, %v794
        %v2236 = vmul.f32 %v2200, %v794
        %v2237 = vmul.f32 %v2203, %v794
        %v2238 = vmul.f32 %v2206, %v794
        %v2239 = vmul.f32 %v2209, %v794
        %v2240 = vmul.f32 %v2212, %v794
        %v2241 = vmul.f32 %v2215, %v794
        %v2242 = vmul.f32 %v2218, %v794
        %v2243 = vmul.f32 %v2221, %v794
        %v2244 = vmul.f32 %v2224, %v794
        %v2245 = vmul.f32 %v2227, %v794
        %v2246 = vmul.f32 %v2230, %v794
        %v2247 = vmul.f32 %v2233, %v794
        %v2248 = vsub.f32 %v2176, %v2234
        %v2249 = vsub.f32 %v2177, %v2235
        %v2250 = vsub.f32 %v2178, %v2236
        %v2251 = vsub.f32 %v2179, %v2237
        %v2252 = vsub.f32 %v2180, %v2238
        %v2253 = vsub.f32 %v2181, %v2239
        %v2254 = vsub.f32 %v2182, %v2240
        %v2255 = vsub.f32 %v2183, %v2241
        %v2256 = vsub.f32 %v2184, %v2242
        %v2257 = vsub.f32 %v2185, %v2243
        %v2258 = vsub.f32 %v2186, %v2244
        %v2259 = vsub.f32 %v2187, %v2245
        %v2260 = vsub.f32 %v2188, %v2246
        %v2261 = vsub.f32 %v2189, %v2247
        %v2262 = vmul.f32 %v2248, %v2248
        %v2263 = vmul.f32 %v2249, %v2249
        %v2264 = vmul.f32 %v2250, %v2250
        %v2265 = vmul.f32 %v2251, %v2251
        %v2266 = vmul.f32 %v2252, %v2252
        %v2267 = vmul.f32 %v2253, %v2253
        %v2268 = vmul.f32 %v2254, %v2254
        %v2269 = vmul.f32 %v2255, %v2255
        %v2270 = vmul.f32 %v2256, %v2256
        %v2271 = vmul.f32 %v2257, %v2257
        %v2272 = vmul.f32 %v2258, %v2258
        %v2273 = vmul.f32 %v2259, %v2259
        %v2274 = vmul.f32 %v2260, %v2260
        %v2275 = vmul.f32 %v2261, %v2261
        %v2276 = vsel %vm744, %v2262, 0.0
        %2277 = vadd.xlane.f32.xlu0 %v2276
        %v2278 = vpop.xlane.xlu0 %2277
        %v2279 = vsel %vm744, %v2263, 0.0
        %2280 = vadd.xlane.f32.xlu0 %v2279
        %v2281 = vpop.xlane.xlu0 %2280
        %v2282 = vsel %vm744, %v2264, 0.0
        %2283 = vadd.xlane.f32.xlu0 %v2282
        %v2284 = vpop.xlane.xlu0 %2283
        %v2285 = vsel %vm744, %v2265, 0.0
        %2286 = vadd.xlane.f32.xlu0 %v2285
        %v2287 = vpop.xlane.xlu0 %2286
        %v2288 = vsel %vm744, %v2266, 0.0
        %2289 = vadd.xlane.f32.xlu0 %v2288
        %v2290 = vpop.xlane.xlu0 %2289
        %v2291 = vsel %vm744, %v2267, 0.0
        %2292 = vadd.xlane.f32.xlu0 %v2291
        %v2293 = vpop.xlane.xlu0 %2292
        %v2294 = vsel %vm744, %v2268, 0.0
        %2295 = vadd.xlane.f32.xlu0 %v2294
        %v2296 = vpop.xlane.xlu0 %2295
        %v2297 = vsel %vm744, %v2269, 0.0
        %2298 = vadd.xlane.f32.xlu0 %v2297
        %v2299 = vpop.xlane.xlu0 %2298
        %v2300 = vsel %vm744, %v2270, 0.0
        %2301 = vadd.xlane.f32.xlu0 %v2300
        %v2302 = vpop.xlane.xlu0 %2301
        %v2303 = vsel %vm744, %v2271, 0.0
        %2304 = vadd.xlane.f32.xlu0 %v2303
        %v2305 = vpop.xlane.xlu0 %2304
        %v2306 = vsel %vm744, %v2272, 0.0
        %2307 = vadd.xlane.f32.xlu0 %v2306
        %v2308 = vpop.xlane.xlu0 %2307
        %v2309 = vsel %vm744, %v2273, 0.0
        %2310 = vadd.xlane.f32.xlu0 %v2309
        %v2311 = vpop.xlane.xlu0 %2310
        %v2312 = vsel %vm744, %v2274, 0.0
        %2313 = vadd.xlane.f32.xlu0 %v2312
        %v2314 = vpop.xlane.xlu0 %2313
        %v2315 = vsel %vm784, %v2275, 0.0
        %2316 = vadd.xlane.f32.xlu0 %v2315
        %v2317 = vpop.xlane.xlu0 %2316
        %v2318 = vmul.f32 %v2278, %v794
        %v2319 = vmul.f32 %v2281, %v794
        %v2320 = vmul.f32 %v2284, %v794
        %v2321 = vmul.f32 %v2287, %v794
        %v2322 = vmul.f32 %v2290, %v794
        %v2323 = vmul.f32 %v2293, %v794
        %v2324 = vmul.f32 %v2296, %v794
        %v2325 = vmul.f32 %v2299, %v794
        %v2326 = vmul.f32 %v2302, %v794
        %v2327 = vmul.f32 %v2305, %v794
        %v2328 = vmul.f32 %v2308, %v794
        %v2329 = vmul.f32 %v2311, %v794
        %v2330 = vmul.f32 %v2314, %v794
        %v2331 = vmul.f32 %v2317, %v794
        %v2332 = vadd.f32 %v2318, 1e-05
        %v2333 = vadd.f32 %v2319, 1e-05
        %v2334 = vadd.f32 %v2320, 1e-05
        %v2335 = vadd.f32 %v2321, 1e-05
        %v2336 = vadd.f32 %v2322, 1e-05
        %v2337 = vadd.f32 %v2323, 1e-05
        %v2338 = vadd.f32 %v2324, 1e-05
        %v2339 = vadd.f32 %v2325, 1e-05
        %v2340 = vadd.f32 %v2326, 1e-05
        %v2341 = vadd.f32 %v2327, 1e-05
        %v2342 = vadd.f32 %v2328, 1e-05
        %v2343 = vadd.f32 %v2329, 1e-05
        %v2344 = vadd.f32 %v2330, 1e-05
        %v2345 = vadd.f32 %v2331, 1e-05
        %v2346 = vrsqrt.pop %v2332
        %v2347 = vmul.f32 %v2346, %v2332
        %v2348 = vmul.f32 %v2347, %v2346
        %v2349 = vmul.f32 0.5, %v2348
        %v2350 = vsub.f32 1.5, %v2349
        %v2351 = vmul.f32 %v2346, %v2350
        %vm2352 = vweird.f32 %v2332
        %vm2353 = vweird.f32 %v2346
        %vm2354 = vmor %vm2352, %vm2353
        %v2355 = vsel %vm2354, %v2346, %v2351
        %v2356 = vrsqrt.pop %v2333
        %v2357 = vmul.f32 %v2356, %v2333
        %v2358 = vmul.f32 %v2357, %v2356
        %v2359 = vmul.f32 0.5, %v2358
        %v2360 = vsub.f32 1.5, %v2359
        %v2361 = vmul.f32 %v2356, %v2360
        %vm2362 = vweird.f32 %v2333
        %vm2363 = vweird.f32 %v2356
        %vm2364 = vmor %vm2362, %vm2363
        %v2365 = vsel %vm2364, %v2356, %v2361
        %v2366 = vrsqrt.pop %v2334
        %v2367 = vmul.f32 %v2366, %v2334
        %v2368 = vmul.f32 %v2367, %v2366
        %v2369 = vmul.f32 0.5, %v2368
        %v2370 = vsub.f32 1.5, %v2369
        %v2371 = vmul.f32 %v2366, %v2370
        %vm2372 = vweird.f32 %v2334
        %vm2373 = vweird.f32 %v2366
        %vm2374 = vmor %vm2372, %vm2373
        %v2375 = vsel %vm2374, %v2366, %v2371
        %v2376 = vrsqrt.pop %v2335
        %v2377 = vmul.f32 %v2376, %v2335
        %v2378 = vmul.f32 %v2377, %v2376
        %v2379 = vmul.f32 0.5, %v2378
        %v2380 = vsub.f32 1.5, %v2379
        %v2381 = vmul.f32 %v2376, %v2380
        %vm2382 = vweird.f32 %v2335
        %vm2383 = vweird.f32 %v2376
        %vm2384 = vmor %vm2382, %vm2383
        %v2385 = vsel %vm2384, %v2376, %v2381
        %v2386 = vrsqrt.pop %v2336
        %v2387 = vmul.f32 %v2386, %v2336
        %v2388 = vmul.f32 %v2387, %v2386
        %v2389 = vmul.f32 0.5, %v2388
        %v2390 = vsub.f32 1.5, %v2389
        %v2391 = vmul.f32 %v2386, %v2390
        %vm2392 = vweird.f32 %v2336
        %vm2393 = vweird.f32 %v2386
        %vm2394 = vmor %vm2392, %vm2393
        %v2395 = vsel %vm2394, %v2386, %v2391
        %v2396 = vrsqrt.pop %v2337
        %v2397 = vmul.f32 %v2396, %v2337
        %v2398 = vmul.f32 %v2397, %v2396
        %v2399 = vmul.f32 0.5, %v2398
        %v2400 = vsub.f32 1.5, %v2399
        %v2401 = vmul.f32 %v2396, %v2400
        %vm2402 = vweird.f32 %v2337
        %vm2403 = vweird.f32 %v2396
        %vm2404 = vmor %vm2402, %vm2403
        %v2405 = vsel %vm2404, %v2396, %v2401
        %v2406 = vrsqrt.pop %v2338
        %v2407 = vmul.f32 %v2406, %v2338
        %v2408 = vmul.f32 %v2407, %v2406
        %v2409 = vmul.f32 0.5, %v2408
        %v2410 = vsub.f32 1.5, %v2409
        %v2411 = vmul.f32 %v2406, %v2410
        %vm2412 = vweird.f32 %v2338
        %vm2413 = vweird.f32 %v2406
        %vm2414 = vmor %vm2412, %vm2413
        %v2415 = vsel %vm2414, %v2406, %v2411
        %v2416 = vrsqrt.pop %v2339
        %v2417 = vmul.f32 %v2416, %v2339
        %v2418 = vmul.f32 %v2417, %v2416
        %v2419 = vmul.f32 0.5, %v2418
        %v2420 = vsub.f32 1.5, %v2419
        %v2421 = vmul.f32 %v2416, %v2420
        %vm2422 = vweird.f32 %v2339
        %vm2423 = vweird.f32 %v2416
        %vm2424 = vmor %vm2422, %vm2423
        %v2425 = vsel %vm2424, %v2416, %v2421
        %v2426 = vrsqrt.pop %v2340
        %v2427 = vmul.f32 %v2426, %v2340
        %v2428 = vmul.f32 %v2427, %v2426
        %v2429 = vmul.f32 0.5, %v2428
        %v2430 = vsub.f32 1.5, %v2429
        %v2431 = vmul.f32 %v2426, %v2430
        %vm2432 = vweird.f32 %v2340
        %vm2433 = vweird.f32 %v2426
        %vm2434 = vmor %vm2432, %vm2433
        %v2435 = vsel %vm2434, %v2426, %v2431
        %v2436 = vrsqrt.pop %v2341
        %v2437 = vmul.f32 %v2436, %v2341
        %v2438 = vmul.f32 %v2437, %v2436
        %v2439 = vmul.f32 0.5, %v2438
        %v2440 = vsub.f32 1.5, %v2439
        %v2441 = vmul.f32 %v2436, %v2440
        %vm2442 = vweird.f32 %v2341
        %vm2443 = vweird.f32 %v2436
        %vm2444 = vmor %vm2442, %vm2443
        %v2445 = vsel %vm2444, %v2436, %v2441
        %v2446 = vrsqrt.pop %v2342
        %v2447 = vmul.f32 %v2446, %v2342
        %v2448 = vmul.f32 %v2447, %v2446
        %v2449 = vmul.f32 0.5, %v2448
        %v2450 = vsub.f32 1.5, %v2449
        %v2451 = vmul.f32 %v2446, %v2450
        %vm2452 = vweird.f32 %v2342
        %vm2453 = vweird.f32 %v2446
        %vm2454 = vmor %vm2452, %vm2453
        %v2455 = vsel %vm2454, %v2446, %v2451
        %v2456 = vrsqrt.pop %v2343
        %v2457 = vmul.f32 %v2456, %v2343
        %v2458 = vmul.f32 %v2457, %v2456
        %v2459 = vmul.f32 0.5, %v2458
        %v2460 = vsub.f32 1.5, %v2459
        %v2461 = vmul.f32 %v2456, %v2460
        %vm2462 = vweird.f32 %v2343
        %vm2463 = vweird.f32 %v2456
        %vm2464 = vmor %vm2462, %vm2463
        %v2465 = vsel %vm2464, %v2456, %v2461
        %v2466 = vrsqrt.pop %v2344
        %v2467 = vmul.f32 %v2466, %v2344
        %v2468 = vmul.f32 %v2467, %v2466
        %v2469 = vmul.f32 0.5, %v2468
        %v2470 = vsub.f32 1.5, %v2469
        %v2471 = vmul.f32 %v2466, %v2470
        %vm2472 = vweird.f32 %v2344
        %vm2473 = vweird.f32 %v2466
        %vm2474 = vmor %vm2472, %vm2473
        %v2475 = vsel %vm2474, %v2466, %v2471
        %v2476 = vrsqrt.pop %v2345
        %v2477 = vmul.f32 %v2476, %v2345
        %v2478 = vmul.f32 %v2477, %v2476
        %v2479 = vmul.f32 0.5, %v2478
        %v2480 = vsub.f32 1.5, %v2479
        %v2481 = vmul.f32 %v2476, %v2480
        %vm2482 = vweird.f32 %v2345
        %vm2483 = vweird.f32 %v2476
        %vm2484 = vmor %vm2482, %vm2483
        %v2485 = vsel %vm2484, %v2476, %v2481
        %v2486 = vmul.f32 %v2248, %v2355
        %v2487 = vmul.f32 %v2249, %v2365
        %v2488 = vmul.f32 %v2250, %v2375
        %v2489 = vmul.f32 %v2251, %v2385
        %v2490 = vmul.f32 %v2252, %v2395
        %v2491 = vmul.f32 %v2253, %v2405
        %v2492 = vmul.f32 %v2254, %v2415
        %v2493 = vmul.f32 %v2255, %v2425
        %v2494 = vmul.f32 %v2256, %v2435
        %v2495 = vmul.f32 %v2257, %v2445
        %v2496 = vmul.f32 %v2258, %v2455
        %v2497 = vmul.f32 %v2259, %v2465
        %v2498 = vmul.f32 %v2260, %v2475
        %v2499 = vmul.f32 %v2261, %v2485
        %v2501 = vperm.slane %v2190, 0
        %v2503 = vmul.f32 %v2486, %v2501
        %v2504 = vmul.f32 %v2487, %v2501
        %v2505 = vmul.f32 %v2488, %v2501
        %v2506 = vmul.f32 %v2489, %v2501
        %v2507 = vmul.f32 %v2490, %v2501
        %v2508 = vmul.f32 %v2491, %v2501
        %v2509 = vmul.f32 %v2492, %v2501
        %v2510 = vmul.f32 %v2493, %v2501
        %v2511 = vmul.f32 %v2494, %v2501
        %v2512 = vmul.f32 %v2495, %v2501
        %v2513 = vmul.f32 %v2496, %v2501
        %v2514 = vmul.f32 %v2497, %v2501
        %v2515 = vmul.f32 %v2498, %v2501
        %v2516 = vmul.f32 %v2499, %v2501
        %v2518 = vperm.slane %v2191, 0
        %v2520 = vadd.f32 %v2503, %v2518
        %v2521 = vadd.f32 %v2504, %v2518
        %v2522 = vadd.f32 %v2505, %v2518
        %v2523 = vadd.f32 %v2506, %v2518
        %v2524 = vadd.f32 %v2507, %v2518
        %v2525 = vadd.f32 %v2508, %v2518
        %v2526 = vadd.f32 %v2509, %v2518
        %v2527 = vadd.f32 %v2510, %v2518
        %v2528 = vadd.f32 %v2511, %v2518
        %v2529 = vadd.f32 %v2512, %v2518
        %v2530 = vadd.f32 %v2513, %v2518
        %v2531 = vadd.f32 %v2514, %v2518
        %v2532 = vadd.f32 %v2515, %v2518
        %v2533 = vadd.f32 %v2516, %v2518
        %v2534 = vld [vmem:[%s17] sm:$0xff]
        %v2535 = vld [vmem:[%s17 + $0x8] sm:$0xff]
        %v2536 = vld [vmem:[%s17 + $0x10] sm:$0xff]
        %v2537 = vld [vmem:[%s17 + $0x18] sm:$0xff]
        %v2538 = vld [vmem:[%s18] sm:$0x1]
        %v2540 = vperm.slane %v2538, 0
        %v2543 = vsel %vm744, %v2520, 0
        %v2546 = vsel %vm744, %v2521, 0
        %v2549 = vsel %vm744, %v2522, 0
        %v2552 = vsel %vm744, %v2523, 0
        %v2555 = vsel %vm744, %v2524, 0
        %v2558 = vsel %vm744, %v2525, 0
        %v2561 = vsel %vm744, %v2526, 0
        %v2564 = vsel %vm744, %v2527, 0
        %v2567 = vsel %vm744, %v2528, 0
        %v2570 = vsel %vm744, %v2529, 0
        %v2573 = vsel %vm744, %v2530, 0
        %v2576 = vsel %vm744, %v2531, 0
        %v2579 = vsel %vm744, %v2532, 0
        %v2582 = vsel %vm744, %v2533, 0
        %2584 = vmatpush.msra.mxu0 0.0
        %2585 = vmatpush.msra.mxu0 0.0
        %2586 = vmatpush.msra.mxu0 0.0
        %2587 = vmatpush.msra.mxu0 0.0
        %2588 = vmatpush.msra.mxu0 0.0
        %2589 = vmatpush.msra.mxu0 0.0
        %2590 = vmatpush.msra.mxu0 0.0
        %2591 = vmatpush.msra.mxu0 0.0
        %2592 = vmatpush.msra.mxu0 0.0
        %2593 = vmatpush.msra.mxu0 0.0
        %2594 = vmatpush.msra.mxu0 0.0
        %2595 = vmatpush.msra.mxu0 0.0
        %2596 = vmatpush.msra.mxu0 %v2537
        %2597 = vmatpush.msra.mxu0 %v2536
        %2598 = vmatpush.msra.mxu0 %v2535
        %2599 = vmatpush.msra.mxu0 %v2534
        %2600 = vmatmul.f32.gmra.mxu0 %v2543
        %v2601 = vpop.f32.mrf.mxu0
        %v2602 = vadd.f32 %v2540, %v2601
        %2603 = vmatmul.f32.gmra.mxu0 %v2546
        %v2604 = vpop.f32.mrf.mxu0
        %v2605 = vadd.f32 %v2540, %v2604
        %2606 = vmatmul.f32.gmra.mxu0 %v2549
        %v2607 = vpop.f32.mrf.mxu0
        %v2608 = vadd.f32 %v2540, %v2607
        %2609 = vmatmul.f32.gmra.mxu0 %v2552
        %v2610 = vpop.f32.mrf.mxu0
        %v2611 = vadd.f32 %v2540, %v2610
        %2612 = vmatmul.f32.gmra.mxu0 %v2555
        %v2613 = vpop.f32.mrf.mxu0
        %v2614 = vadd.f32 %v2540, %v2613
        %2615 = vmatmul.f32.gmra.mxu0 %v2558
        %v2616 = vpop.f32.mrf.mxu0
        %v2617 = vadd.f32 %v2540, %v2616
        %2618 = vmatmul.f32.gmra.mxu0 %v2561
        %v2619 = vpop.f32.mrf.mxu0
        %v2620 = vadd.f32 %v2540, %v2619
        %2621 = vmatmul.f32.gmra.mxu0 %v2564
        %v2622 = vpop.f32.mrf.mxu0
        %v2623 = vadd.f32 %v2540, %v2622
        %2624 = vmatmul.f32.gmra.mxu0 %v2567
        %v2625 = vpop.f32.mrf.mxu0
        %v2626 = vadd.f32 %v2540, %v2625
        %2627 = vmatmul.f32.gmra.mxu0 %v2570
        %v2628 = vpop.f32.mrf.mxu0
        %v2629 = vadd.f32 %v2540, %v2628
        %2630 = vmatmul.f32.gmra.mxu0 %v2573
        %v2631 = vpop.f32.mrf.mxu0
        %v2632 = vadd.f32 %v2540, %v2631
        %2633 = vmatmul.f32.gmra.mxu0 %v2576
        %v2634 = vpop.f32.mrf.mxu0
        %v2635 = vadd.f32 %v2540, %v2634
        %2636 = vmatmul.f32.gmra.mxu0 %v2579
        %v2637 = vpop.f32.mrf.mxu0
        %v2638 = vadd.f32 %v2540, %v2637
        %2639 = vmatmul.f32.gmra.mxu0 %v2582
        %v2640 = vpop.f32.mrf.mxu0
        %v2641 = vadd.f32 %v2540, %v2640
        %2642 = vdwg.mxu0
        %vm2643 = vcmask 15360
        %2644 = vst.msk [vmem:[%s619] sm:$0xff] %vm2643, %v2602
        %2645 = vst.msk [vmem:[%s619 + $0x8] sm:$0xff] %vm2643, %v2605
        %2646 = vst.msk [vmem:[%s619 + $0x10] sm:$0xff] %vm2643, %v2608
        %2647 = vst.msk [vmem:[%s619 + $0x18] sm:$0xff] %vm2643, %v2611
        %2648 = vst.msk [vmem:[%s619 + $0x20] sm:$0xff] %vm2643, %v2614
        %2649 = vst.msk [vmem:[%s619 + $0x28] sm:$0xff] %vm2643, %v2617
        %2650 = vst.msk [vmem:[%s619 + $0x30] sm:$0xff] %vm2643, %v2620
        %2651 = vst.msk [vmem:[%s619 + $0x38] sm:$0xff] %vm2643, %v2623
        %2652 = vst.msk [vmem:[%s619 + $0x40] sm:$0xff] %vm2643, %v2626
        %2653 = vst.msk [vmem:[%s619 + $0x48] sm:$0xff] %vm2643, %v2629
        %2654 = vst.msk [vmem:[%s619 + $0x50] sm:$0xff] %vm2643, %v2632
        %2655 = vst.msk [vmem:[%s619 + $0x58] sm:$0xff] %vm2643, %v2635
        %2656 = vst.msk [vmem:[%s619 + $0x60] sm:$0xff] %vm2643, %v2638
        %vm2657 = vcmask 12288
        %2658 = vst.msk [vmem:[%s619 + $0x68] sm:$0x1f] %vm2657, %v2641
        %p2659 = scmp.lt.s32.totalorder %s31, 1
        %s2660 = scalar_select %p2659, %s31, 1
        %s2661 = smul.addr %s2660, 14
        %s2662 = smul.addr %s2661, 8
        %s2663 = scalar_lea.vmem %s19, %s2662
        // Predicated region
        $region101: #{mlp_forward.2} parent=95 // pred_check
          %p2664 = pneg %p453
        $region102: #{mlp_forward.2} parent=95 // pred_check_branch
          %2666 = sbr.rel (%p2664) target = $region104
        $region103: #{mlp_forward.2} parent=95 // pred_region
          _
        $region104: #{mlp_forward.2} parent=95 // pred_fallthru
          _
      $region96: #{mlp_forward.2} parent=5 // pred_fallthru
        _
      %p2667 = scmp.le.s32.totalorder 2, %s26
      // Predicated region
      $region105: #{mlp_forward.2} parent=5 // pred_check
        %p2668 = pneg %p2667
      $region106: #{mlp_forward.2} parent=5 // pred_check_branch
        %2670 = sbr.rel (%p2668) target = $region108
      $region107: #{mlp_forward.2} parent=5 // pred_region
        %s2671 = ssub.s32 %s26, 2
        // Predicated region
        $region109: #{mlp_forward.2} parent=107 // pred_check
          %p2672 = pneg %p459
        $region110: #{mlp_forward.2} parent=107 // pred_check_branch
          %2674 = sbr.rel (%p2672) target = $region112
        $region111: #{mlp_forward.2} parent=107 // pred_region
          %p2675 = scmp.lt.s32.totalorder %s32, 1
          %s2676 = scalar_select %p2675, %s32, 1
          %s2677 = smul.addr %s2676, 14
          %s2678 = smul.addr %s2677, 8
          %s2679 = scalar_lea.vmem %s19, %s2678
        $region112: #{mlp_forward.2} parent=107 // pred_fallthru
          _
      $region108: #{mlp_forward.2} parent=5 // pred_fallthru
        _
    $region6: #{mlp_forward.2} parent=1 // loop_footer
      %s30 = sadd.s32 1, %s26
    $region7: #{mlp_forward.2} parent=1 // loop_footer_branch
      %25 = sbr.rel target = $region3
    $region8: #{mlp_forward.2} parent=1 // loop_exit
      _
    %2680 = vsyncpa [#allocation3], 1
    %s2681 = scalar_lea.sflag [#allocation3], 1
    %2682 = vsyncpa %s2681, 1

// kernel: mlp_forward.3
$region0: #{mlp_forward.3}
  #allocation0 [shape = 'u32[]', space=smem, size = 0x4, offset = 0x4, fixed_abs, tag = 'smem constant byte address 0x4 - core index']
  #allocation1 [shape = 'u32[72,128]{1,0:T(1,128)}', space=vmem, size = 0x9000, scoped, tag = 'internal scratch']
  %s0 = inlined_call_operand.vmem [shape: f32[2,109,18], index: 0, kind: input, shape index: {}]
  %s1 = inlined_call_operand.vmem [shape: f32[18,32], index: 1, kind: input, shape index: {}]
  %s2 = inlined_call_operand.vmem [shape: f32[1,32], index: 2, kind: input, shape index: {}]
  %s3 = inlined_call_operand.vmem [shape: f32[1,32], index: 3, kind: input, shape index: {}, may-alias: {3,9,15}]
  %s4 = inlined_call_operand.vmem [shape: f32[1,32], index: 4, kind: input, shape index: {}, may-alias: {4,10,16}]
  %s5 = inlined_call_operand.vmem [shape: f32[109,32], index: 5, kind: input, shape index: {}]
  %s6 = inlined_call_operand.vmem [shape: f32[1,32], index: 6, kind: input, shape index: {}]
  %s7 = inlined_call_operand.vmem [shape: f32[32,109], index: 7, kind: input, shape index: {}]
  %s8 = inlined_call_operand.vmem [shape: f32[109,1], index: 8, kind: input, shape index: {}]
  %s9 = inlined_call_operand.vmem [shape: f32[1,32], index: 9, kind: input, shape index: {}, may-alias: {3,9,15}]
  %s10 = inlined_call_operand.vmem [shape: f32[1,32], index: 10, kind: input, shape index: {}, may-alias: {4,10,16}]
  %s11 = inlined_call_operand.vmem [shape: f32[32,32], index: 11, kind: input, shape index: {}]
  %s12 = inlined_call_operand.vmem [shape: f32[1,32], index: 12, kind: input, shape index: {}]
  %s13 = inlined_call_operand.vmem [shape: f32[32,32], index: 13, kind: input, shape index: {}]
  %s14 = inlined_call_operand.vmem [shape: f32[1,32], index: 14, kind: input, shape index: {}]
  %s15 = inlined_call_operand.vmem [shape: f32[1,32], index: 15, kind: input, shape index: {}, may-alias: {3,9,15}]
  %s16 = inlined_call_operand.vmem [shape: f32[1,32], index: 16, kind: input, shape index: {}, may-alias: {4,10,16}]
  %s17 = inlined_call_operand.vmem [shape: f32[32,2], index: 17, kind: input, shape index: {}]
  %s18 = inlined_call_operand.vmem [shape: f32[1,2], index: 18, kind: input, shape index: {}]
  %s19 = inlined_call_operand.vmem [shape: f32[2,109,2], index: 19, kind: output, shape index: {}]
  %s20 = sld [smem:[#allocation0]]
  $region109: #{mlp_forward.3} parent=0
    _
  %s22 = ssub.s32 1, %s20
  %s23 = scalar_select 0, %s22, %s20
  loop: start=0, step=1, limit=4
  $region2: #{mlp_forward.3} parent=0 // loop_pre_header
    _
  $region3: #{mlp_forward.3} parent=0 // loop_header
    %s25 = sphi 0, %s29
    %p26 = scmp.ge.s32.totalorder %s25, 4
    %s35 = sphi 0, %s37
    %s38 = sphi 0, %s35
    %s39 = sphi 0, %s38
    %s55 = sphi 0, %s39
    %s59 = sphi 0, %s59
    %s61 = sphi 0, %s59
    %s62 = sphi 0, %s61
    %s76 = sphi 0, %s62
    %s80 = sphi 0, %s80
    %s82 = sphi 0, %s80
    %s83 = sphi 0, %s82
    %s97 = sphi 0, %s83
    %s101 = sphi 0, %s101
    %s103 = sphi 0, %s101
    %s104 = sphi 0, %s103
    %s118 = sphi 0, %s104
    %s122 = sphi 0, %s122
    %s124 = sphi 0, %s122
    %s125 = sphi 0, %s124
    %s139 = sphi 0, %s125
    %s143 = sphi 0, %s143
    %s145 = sphi 0, %s143
    %s146 = sphi 0, %s145
    %s160 = sphi 0, %s146
    %s164 = sphi 0, %s164
    %s166 = sphi 0, %s164
    %s167 = sphi 0, %s166
    %s181 = sphi 0, %s167
    %s185 = sphi 0, %s185
    %s187 = sphi 0, %s185
    %s188 = sphi 0, %s187
    %s202 = sphi 0, %s188
    %s206 = sphi 0, %s206
    %s208 = sphi 0, %s206
    %s209 = sphi 0, %s208
    %s223 = sphi 0, %s209
    %s227 = sphi 0, %s227
    %s229 = sphi 0, %s227
    %s230 = sphi 0, %s229
    %s244 = sphi 0, %s230
    %s248 = sphi 0, %s248
    %s250 = sphi 0, %s248
    %s251 = sphi 0, %s250
    %s265 = sphi 0, %s251
    %s269 = sphi 0, %s269
    %s271 = sphi 0, %s269
    %s272 = sphi 0, %s271
    %s286 = sphi 0, %s272
    %s290 = sphi 0, %s290
    %s292 = sphi 0, %s290
    %s293 = sphi 0, %s292
    %s307 = sphi 0, %s293
    %s311 = sphi 0, %s311
    %s313 = sphi 0, %s311
    %s314 = sphi 0, %s313
    %s328 = sphi 0, %s314
    %s332 = sphi 0, %s332
    %s334 = sphi 0, %s332
    %s335 = sphi 0, %s334
    %s349 = sphi 0, %s335
    %s353 = sphi 0, %s353
    %s355 = sphi 0, %s353
    %s356 = sphi 0, %s355
    %s370 = sphi 0, %s356
    %s374 = sphi 0, %s374
    %s376 = sphi 0, %s374
    %s377 = sphi 0, %s376
    %s391 = sphi 0, %s377
    %s395 = sphi 0, %s395
    %s397 = sphi 0, %s395
    %s398 = sphi 0, %s397
    %s412 = sphi 0, %s398
    %s416 = sphi 0, %s416
    %s418 = sphi 0, %s416
    %s419 = sphi 0, %s418
    %s433 = sphi 0, %s419
    %s439 = sphi 0, %s441
    %s442 = sphi 0, %s439
    %s443 = sphi 0, %s442
    %s459 = sphi 0, %s443
  $region4: #{mlp_forward.3} parent=0 // loop_header_branch
    %28 = sbr.rel (%p26) target = $region8
  $region5: #{mlp_forward.3} parent=0 // loop_body
    %s30 = ssub.s32 %s25, 1
    %s31 = ssub.s32 %s25, 2
    %s32 = sadd.s32 %s25, 1
    %s33 = ssub.s32 %s25, %s32
    %p34 = scmp.eq.s32.totalorder %s33, 0
    %s36 = sadd.s32 %s35, 1
    %s37 = scalar_select %p34, %s35, %s36
    %p40 = pneg %p34
    %p41 = scmp.eq.s32.totalorder %s25, 1
    %p42 = por %p40, %p41
    %p43 = scmp.ne.s32.totalorder %s35, %s38
    %p44 = scmp.eq.s32.totalorder %s25, 0
    %p45 = por %p43, %p44
    %p46 = scmp.ne.s32.totalorder %s35, %s38
    %p47 = scmp.eq.s32.totalorder %s30, 1
    %p48 = por %p46, %p47
    %p49 = scmp.ne.s32.totalorder %s38, %s39
    %p50 = scmp.eq.s32.totalorder %s30, 0
    %p51 = por %p49, %p50
    %p52 = scmp.ne.s32.totalorder %s38, %s39
    %p53 = scmp.eq.s32.totalorder %s31, 1
    %p54 = por %p52, %p53
    %p56 = scmp.ne.s32.totalorder %s39, %s55
    %p57 = scmp.eq.s32.totalorder %s31, 0
    %p58 = por %p56, %p57
    %s60 = sadd.s32 %s59, 1
    %p63 = scmp.eq.s32.totalorder %s25, 1
    %p64 = scmp.ne.s32.totalorder %s59, %s61
    %p65 = scmp.eq.s32.totalorder %s25, 0
    %p66 = por %p64, %p65
    %p67 = scmp.ne.s32.totalorder %s59, %s61
    %p68 = scmp.eq.s32.totalorder %s30, 1
    %p69 = por %p67, %p68
    %p70 = scmp.ne.s32.totalorder %s61, %s62
    %p71 = scmp.eq.s32.totalorder %s30, 0
    %p72 = por %p70, %p71
    %p73 = scmp.ne.s32.totalorder %s61, %s62
    %p74 = scmp.eq.s32.totalorder %s31, 1
    %p75 = por %p73, %p74
    %p77 = scmp.ne.s32.totalorder %s62, %s76
    %p78 = scmp.eq.s32.totalorder %s31, 0
    %p79 = por %p77, %p78
    %s81 = sadd.s32 %s80, 1
    %p84 = scmp.eq.s32.totalorder %s25, 1
    %p85 = scmp.ne.s32.totalorder %s80, %s82
    %p86 = scmp.eq.s32.totalorder %s25, 0
    %p87 = por %p85, %p86
    %p88 = scmp.ne.s32.totalorder %s80, %s82
    %p89 = scmp.eq.s32.totalorder %s30, 1
    %p90 = por %p88, %p89
    %p91 = scmp.ne.s32.totalorder %s82, %s83
    %p92 = scmp.eq.s32.totalorder %s30, 0
    %p93 = por %p91, %p92
    %p94 = scmp.ne.s32.totalorder %s82, %s83
    %p95 = scmp.eq.s32.totalorder %s31, 1
    %p96 = por %p94, %p95
    %p98 = scmp.ne.s32.totalorder %s83, %s97
    %p99 = scmp.eq.s32.totalorder %s31, 0
    %p100 = por %p98, %p99
    %s102 = sadd.s32 %s101, 1
    %p105 = scmp.eq.s32.totalorder %s25, 1
    %p106 = scmp.ne.s32.totalorder %s101, %s103
    %p107 = scmp.eq.s32.totalorder %s25, 0
    %p108 = por %p106, %p107
    %p109 = scmp.ne.s32.totalorder %s101, %s103
    %p110 = scmp.eq.s32.totalorder %s30, 1
    %p111 = por %p109, %p110
    %p112 = scmp.ne.s32.totalorder %s103, %s104
    %p113 = scmp.eq.s32.totalorder %s30, 0
    %p114 = por %p112, %p113
    %p115 = scmp.ne.s32.totalorder %s103, %s104
    %p116 = scmp.eq.s32.totalorder %s31, 1
    %p117 = por %p115, %p116
    %p119 = scmp.ne.s32.totalorder %s104, %s118
    %p120 = scmp.eq.s32.totalorder %s31, 0
    %p121 = por %p119, %p120
    %s123 = sadd.s32 %s122, 1
    %p126 = scmp.eq.s32.totalorder %s25, 1
    %p127 = scmp.ne.s32.totalorder %s122, %s124
    %p128 = scmp.eq.s32.totalorder %s25, 0
    %p129 = por %p127, %p128
    %p130 = scmp.ne.s32.totalorder %s122, %s124
    %p131 = scmp.eq.s32.totalorder %s30, 1
    %p132 = por %p130, %p131
    %p133 = scmp.ne.s32.totalorder %s124, %s125
    %p134 = scmp.eq.s32.totalorder %s30, 0
    %p135 = por %p133, %p134
    %p136 = scmp.ne.s32.totalorder %s124, %s125
    %p137 = scmp.eq.s32.totalorder %s31, 1
    %p138 = por %p136, %p137
    %p140 = scmp.ne.s32.totalorder %s125, %s139
    %p141 = scmp.eq.s32.totalorder %s31, 0
    %p142 = por %p140, %p141
    %s144 = sadd.s32 %s143, 1
    %p147 = scmp.eq.s32.totalorder %s25, 1
    %p148 = scmp.ne.s32.totalorder %s143, %s145
    %p149 = scmp.eq.s32.totalorder %s25, 0
    %p150 = por %p148, %p149
    %p151 = scmp.ne.s32.totalorder %s143, %s145
    %p152 = scmp.eq.s32.totalorder %s30, 1
    %p153 = por %p151, %p152
    %p154 = scmp.ne.s32.totalorder %s145, %s146
    %p155 = scmp.eq.s32.totalorder %s30, 0
    %p156 = por %p154, %p155
    %p157 = scmp.ne.s32.totalorder %s145, %s146
    %p158 = scmp.eq.s32.totalorder %s31, 1
    %p159 = por %p157, %p158
    %p161 = scmp.ne.s32.totalorder %s146, %s160
    %p162 = scmp.eq.s32.totalorder %s31, 0
    %p163 = por %p161, %p162
    %s165 = sadd.s32 %s164, 1
    %p168 = scmp.eq.s32.totalorder %s25, 1
    %p169 = scmp.ne.s32.totalorder %s164, %s166
    %p170 = scmp.eq.s32.totalorder %s25, 0
    %p171 = por %p169, %p170
    %p172 = scmp.ne.s32.totalorder %s164, %s166
    %p173 = scmp.eq.s32.totalorder %s30, 1
    %p174 = por %p172, %p173
    %p175 = scmp.ne.s32.totalorder %s166, %s167
    %p176 = scmp.eq.s32.totalorder %s30, 0
    %p177 = por %p175, %p176
    %p178 = scmp.ne.s32.totalorder %s166, %s167
    %p179 = scmp.eq.s32.totalorder %s31, 1
    %p180 = por %p178, %p179
    %p182 = scmp.ne.s32.totalorder %s167, %s181
    %p183 = scmp.eq.s32.totalorder %s31, 0
    %p184 = por %p182, %p183
    %s186 = sadd.s32 %s185, 1
    %p189 = scmp.eq.s32.totalorder %s25, 1
    %p190 = scmp.ne.s32.totalorder %s185, %s187
    %p191 = scmp.eq.s32.totalorder %s25, 0
    %p192 = por %p190, %p191
    %p193 = scmp.ne.s32.totalorder %s185, %s187
    %p194 = scmp.eq.s32.totalorder %s30, 1
    %p195 = por %p193, %p194
    %p196 = scmp.ne.s32.totalorder %s187, %s188
    %p197 = scmp.eq.s32.totalorder %s30, 0
    %p198 = por %p196, %p197
    %p199 = scmp.ne.s32.totalorder %s187, %s188
    %p200 = scmp.eq.s32.totalorder %s31, 1
    %p201 = por %p199, %p200
    %p203 = scmp.ne.s32.totalorder %s188, %s202
    %p204 = scmp.eq.s32.totalorder %s31, 0
    %p205 = por %p203, %p204
    %s207 = sadd.s32 %s206, 1
    %p210 = scmp.eq.s32.totalorder %s25, 1
    %p211 = scmp.ne.s32.totalorder %s206, %s208
    %p212 = scmp.eq.s32.totalorder %s25, 0
    %p213 = por %p211, %p212
    %p214 = scmp.ne.s32.totalorder %s206, %s208
    %p215 = scmp.eq.s32.totalorder %s30, 1
    %p216 = por %p214, %p215
    %p217 = scmp.ne.s32.totalorder %s208, %s209
    %p218 = scmp.eq.s32.totalorder %s30, 0
    %p219 = por %p217, %p218
    %p220 = scmp.ne.s32.totalorder %s208, %s209
    %p221 = scmp.eq.s32.totalorder %s31, 1
    %p222 = por %p220, %p221
    %p224 = scmp.ne.s32.totalorder %s209, %s223
    %p225 = scmp.eq.s32.totalorder %s31, 0
    %p226 = por %p224, %p225
    %s228 = sadd.s32 %s227, 1
    %p231 = scmp.eq.s32.totalorder %s25, 1
    %p232 = scmp.ne.s32.totalorder %s227, %s229
    %p233 = scmp.eq.s32.totalorder %s25, 0
    %p234 = por %p232, %p233
    %p235 = scmp.ne.s32.totalorder %s227, %s229
    %p236 = scmp.eq.s32.totalorder %s30, 1
    %p237 = por %p235, %p236
    %p238 = scmp.ne.s32.totalorder %s229, %s230
    %p239 = scmp.eq.s32.totalorder %s30, 0
    %p240 = por %p238, %p239
    %p241 = scmp.ne.s32.totalorder %s229, %s230
    %p242 = scmp.eq.s32.totalorder %s31, 1
    %p243 = por %p241, %p242
    %p245 = scmp.ne.s32.totalorder %s230, %s244
    %p246 = scmp.eq.s32.totalorder %s31, 0
    %p247 = por %p245, %p246
    %s249 = sadd.s32 %s248, 1
    %p252 = scmp.eq.s32.totalorder %s25, 1
    %p253 = scmp.ne.s32.totalorder %s248, %s250
    %p254 = scmp.eq.s32.totalorder %s25, 0
    %p255 = por %p253, %p254
    %p256 = scmp.ne.s32.totalorder %s248, %s250
    %p257 = scmp.eq.s32.totalorder %s30, 1
    %p258 = por %p256, %p257
    %p259 = scmp.ne.s32.totalorder %s250, %s251
    %p260 = scmp.eq.s32.totalorder %s30, 0
    %p261 = por %p259, %p260
    %p262 = scmp.ne.s32.totalorder %s250, %s251
    %p263 = scmp.eq.s32.totalorder %s31, 1
    %p264 = por %p262, %p263
    %p266 = scmp.ne.s32.totalorder %s251, %s265
    %p267 = scmp.eq.s32.totalorder %s31, 0
    %p268 = por %p266, %p267
    %s270 = sadd.s32 %s269, 1
    %p273 = scmp.eq.s32.totalorder %s25, 1
    %p274 = scmp.ne.s32.totalorder %s269, %s271
    %p275 = scmp.eq.s32.totalorder %s25, 0
    %p276 = por %p274, %p275
    %p277 = scmp.ne.s32.totalorder %s269, %s271
    %p278 = scmp.eq.s32.totalorder %s30, 1
    %p279 = por %p277, %p278
    %p280 = scmp.ne.s32.totalorder %s271, %s272
    %p281 = scmp.eq.s32.totalorder %s30, 0
    %p282 = por %p280, %p281
    %p283 = scmp.ne.s32.totalorder %s271, %s272
    %p284 = scmp.eq.s32.totalorder %s31, 1
    %p285 = por %p283, %p284
    %p287 = scmp.ne.s32.totalorder %s272, %s286
    %p288 = scmp.eq.s32.totalorder %s31, 0
    %p289 = por %p287, %p288
    %s291 = sadd.s32 %s290, 1
    %p294 = scmp.eq.s32.totalorder %s25, 1
    %p295 = scmp.ne.s32.totalorder %s290, %s292
    %p296 = scmp.eq.s32.totalorder %s25, 0
    %p297 = por %p295, %p296
    %p298 = scmp.ne.s32.totalorder %s290, %s292
    %p299 = scmp.eq.s32.totalorder %s30, 1
    %p300 = por %p298, %p299
    %p301 = scmp.ne.s32.totalorder %s292, %s293
    %p302 = scmp.eq.s32.totalorder %s30, 0
    %p303 = por %p301, %p302
    %p304 = scmp.ne.s32.totalorder %s292, %s293
    %p305 = scmp.eq.s32.totalorder %s31, 1
    %p306 = por %p304, %p305
    %p308 = scmp.ne.s32.totalorder %s293, %s307
    %p309 = scmp.eq.s32.totalorder %s31, 0
    %p310 = por %p308, %p309
    %s312 = sadd.s32 %s311, 1
    %p315 = scmp.eq.s32.totalorder %s25, 1
    %p316 = scmp.ne.s32.totalorder %s311, %s313
    %p317 = scmp.eq.s32.totalorder %s25, 0
    %p318 = por %p316, %p317
    %p319 = scmp.ne.s32.totalorder %s311, %s313
    %p320 = scmp.eq.s32.totalorder %s30, 1
    %p321 = por %p319, %p320
    %p322 = scmp.ne.s32.totalorder %s313, %s314
    %p323 = scmp.eq.s32.totalorder %s30, 0
    %p324 = por %p322, %p323
    %p325 = scmp.ne.s32.totalorder %s313, %s314
    %p326 = scmp.eq.s32.totalorder %s31, 1
    %p327 = por %p325, %p326
    %p329 = scmp.ne.s32.totalorder %s314, %s328
    %p330 = scmp.eq.s32.totalorder %s31, 0
    %p331 = por %p329, %p330
    %s333 = sadd.s32 %s332, 1
    %p336 = scmp.eq.s32.totalorder %s25, 1
    %p337 = scmp.ne.s32.totalorder %s332, %s334
    %p338 = scmp.eq.s32.totalorder %s25, 0
    %p339 = por %p337, %p338
    %p340 = scmp.ne.s32.totalorder %s332, %s334
    %p341 = scmp.eq.s32.totalorder %s30, 1
    %p342 = por %p340, %p341
    %p343 = scmp.ne.s32.totalorder %s334, %s335
    %p344 = scmp.eq.s32.totalorder %s30, 0
    %p345 = por %p343, %p344
    %p346 = scmp.ne.s32.totalorder %s334, %s335
    %p347 = scmp.eq.s32.totalorder %s31, 1
    %p348 = por %p346, %p347
    %p350 = scmp.ne.s32.totalorder %s335, %s349
    %p351 = scmp.eq.s32.totalorder %s31, 0
    %p352 = por %p350, %p351
    %s354 = sadd.s32 %s353, 1
    %p357 = scmp.eq.s32.totalorder %s25, 1
    %p358 = scmp.ne.s32.totalorder %s353, %s355
    %p359 = scmp.eq.s32.totalorder %s25, 0
    %p360 = por %p358, %p359
    %p361 = scmp.ne.s32.totalorder %s353, %s355
    %p362 = scmp.eq.s32.totalorder %s30, 1
    %p363 = por %p361, %p362
    %p364 = scmp.ne.s32.totalorder %s355, %s356
    %p365 = scmp.eq.s32.totalorder %s30, 0
    %p366 = por %p364, %p365
    %p367 = scmp.ne.s32.totalorder %s355, %s356
    %p368 = scmp.eq.s32.totalorder %s31, 1
    %p369 = por %p367, %p368
    %p371 = scmp.ne.s32.totalorder %s356, %s370
    %p372 = scmp.eq.s32.totalorder %s31, 0
    %p373 = por %p371, %p372
    %s375 = sadd.s32 %s374, 1
    %p378 = scmp.eq.s32.totalorder %s25, 1
    %p379 = scmp.ne.s32.totalorder %s374, %s376
    %p380 = scmp.eq.s32.totalorder %s25, 0
    %p381 = por %p379, %p380
    %p382 = scmp.ne.s32.totalorder %s374, %s376
    %p383 = scmp.eq.s32.totalorder %s30, 1
    %p384 = por %p382, %p383
    %p385 = scmp.ne.s32.totalorder %s376, %s377
    %p386 = scmp.eq.s32.totalorder %s30, 0
    %p387 = por %p385, %p386
    %p388 = scmp.ne.s32.totalorder %s376, %s377
    %p389 = scmp.eq.s32.totalorder %s31, 1
    %p390 = por %p388, %p389
    %p392 = scmp.ne.s32.totalorder %s377, %s391
    %p393 = scmp.eq.s32.totalorder %s31, 0
    %p394 = por %p392, %p393
    %s396 = sadd.s32 %s395, 1
    %p399 = scmp.eq.s32.totalorder %s25, 1
    %p400 = scmp.ne.s32.totalorder %s395, %s397
    %p401 = scmp.eq.s32.totalorder %s25, 0
    %p402 = por %p400, %p401
    %p403 = scmp.ne.s32.totalorder %s395, %s397
    %p404 = scmp.eq.s32.totalorder %s30, 1
    %p405 = por %p403, %p404
    %p406 = scmp.ne.s32.totalorder %s397, %s398
    %p407 = scmp.eq.s32.totalorder %s30, 0
    %p408 = por %p406, %p407
    %p409 = scmp.ne.s32.totalorder %s397, %s398
    %p410 = scmp.eq.s32.totalorder %s31, 1
    %p411 = por %p409, %p410
    %p413 = scmp.ne.s32.totalorder %s398, %s412
    %p414 = scmp.eq.s32.totalorder %s31, 0
    %p415 = por %p413, %p414
    %s417 = sadd.s32 %s416, 1
    %p420 = scmp.eq.s32.totalorder %s25, 1
    %p421 = scmp.ne.s32.totalorder %s416, %s418
    %p422 = scmp.eq.s32.totalorder %s25, 0
    %p423 = por %p421, %p422
    %p424 = scmp.ne.s32.totalorder %s416, %s418
    %p425 = scmp.eq.s32.totalorder %s30, 1
    %p426 = por %p424, %p425
    %p427 = scmp.ne.s32.totalorder %s418, %s419
    %p428 = scmp.eq.s32.totalorder %s30, 0
    %p429 = por %p427, %p428
    %p430 = scmp.ne.s32.totalorder %s418, %s419
    %p431 = scmp.eq.s32.totalorder %s31, 1
    %p432 = por %p430, %p431
    %p434 = scmp.ne.s32.totalorder %s419, %s433
    %p435 = scmp.eq.s32.totalorder %s31, 0
    %p436 = por %p434, %p435
    %s437 = ssub.s32 %s25, %s32
    %p438 = scmp.eq.s32.totalorder %s437, 0
    %s440 = sadd.s32 %s439, 1
    %s441 = scalar_select %p438, %s439, %s440
    %p444 = pneg %p438
    %p445 = scmp.eq.s32.totalorder %s25, 1
    %p446 = por %p444, %p445
    %p447 = scmp.ne.s32.totalorder %s439, %s442
    %p448 = scmp.eq.s32.totalorder %s25, 0
    %p449 = por %p447, %p448
    %p450 = scmp.ne.s32.totalorder %s439, %s442
    %p451 = scmp.eq.s32.totalorder %s30, 1
    %p452 = por %p450, %p451
    %p453 = scmp.ne.s32.totalorder %s442, %s443
    %p454 = scmp.eq.s32.totalorder %s30, 0
    %p455 = por %p453, %p454
    %p456 = scmp.ne.s32.totalorder %s442, %s443
    %p457 = scmp.eq.s32.totalorder %s31, 1
    %p458 = por %p456, %p457
    %p460 = scmp.ne.s32.totalorder %s443, %s459
    %p461 = scmp.eq.s32.totalorder %s31, 0
    %p462 = por %p460, %p461
    %p463 = scmp.le.s32.totalorder 1, %s25
    %p464 = scmp.lt.s32.totalorder %s25, 3
    %p465 = pnand %p463, %p464
    %p466 = pneg %p465
    // Predicated region
    $region9: #{mlp_forward.3} parent=5 // pred_check
      _
    $region10: #{mlp_forward.3} parent=5 // pred_check_branch
      %468 = sbr.rel (%p465) target = $region12
    $region11: #{mlp_forward.3} parent=5 // pred_region
      %s469 = ssub.s32 %s25, 1
      // Predicated region
      $region13: #{mlp_forward.3} parent=11 // pred_check
        %p470 = pneg %p72
      $region14: #{mlp_forward.3} parent=11 // pred_check_branch
        %472 = sbr.rel (%p470) target = $region16
      $region15: #{mlp_forward.3} parent=11 // pred_region
        _
      $region16: #{mlp_forward.3} parent=11 // pred_fallthru
        _
      // Predicated region
      $region17: #{mlp_forward.3} parent=11 // pred_check
        %p473 = pneg %p93
      $region18: #{mlp_forward.3} parent=11 // pred_check_branch
        %475 = sbr.rel (%p473) target = $region20
      $region19: #{mlp_forward.3} parent=11 // pred_region
        _
      $region20: #{mlp_forward.3} parent=11 // pred_fallthru
        _
      // Predicated region
      $region21: #{mlp_forward.3} parent=11 // pred_check
        %p476 = pneg %p114
      $region22: #{mlp_forward.3} parent=11 // pred_check_branch
        %478 = sbr.rel (%p476) target = $region24
      $region23: #{mlp_forward.3} parent=11 // pred_region
        _
      $region24: #{mlp_forward.3} parent=11 // pred_fallthru
        _
      // Predicated region
      $region25: #{mlp_forward.3} parent=11 // pred_check
        %p479 = pneg %p135
      $region26: #{mlp_forward.3} parent=11 // pred_check_branch
        %481 = sbr.rel (%p479) target = $region28
      $region27: #{mlp_forward.3} parent=11 // pred_region
        _
      $region28: #{mlp_forward.3} parent=11 // pred_fallthru
        _
      // Predicated region
      $region29: #{mlp_forward.3} parent=11 // pred_check
        %p482 = pneg %p156
      $region30: #{mlp_forward.3} parent=11 // pred_check_branch
        %484 = sbr.rel (%p482) target = $region32
      $region31: #{mlp_forward.3} parent=11 // pred_region
        _
      $region32: #{mlp_forward.3} parent=11 // pred_fallthru
        _
      // Predicated region
      $region33: #{mlp_forward.3} parent=11 // pred_check
        %p485 = pneg %p177
      $region34: #{mlp_forward.3} parent=11 // pred_check_branch
        %487 = sbr.rel (%p485) target = $region36
      $region35: #{mlp_forward.3} parent=11 // pred_region
        _
      $region36: #{mlp_forward.3} parent=11 // pred_fallthru
        _
      // Predicated region
      $region37: #{mlp_forward.3} parent=11 // pred_check
        %p488 = pneg %p198
      $region38: #{mlp_forward.3} parent=11 // pred_check_branch
        %490 = sbr.rel (%p488) target = $region40
      $region39: #{mlp_forward.3} parent=11 // pred_region
        _
      $region40: #{mlp_forward.3} parent=11 // pred_fallthru
        _
      // Predicated region
      $region41: #{mlp_forward.3} parent=11 // pred_check
        %p491 = pneg %p219
      $region42: #{mlp_forward.3} parent=11 // pred_check_branch
        %493 = sbr.rel (%p491) target = $region44
      $region43: #{mlp_forward.3} parent=11 // pred_region
        _
      $region44: #{mlp_forward.3} parent=11 // pred_fallthru
        _
      // Predicated region
      $region45: #{mlp_forward.3} parent=11 // pred_check
        %p494 = pneg %p240
      $region46: #{mlp_forward.3} parent=11 // pred_check_branch
        %496 = sbr.rel (%p494) target = $region48
      $region47: #{mlp_forward.3} parent=11 // pred_region
        _
      $region48: #{mlp_forward.3} parent=11 // pred_fallthru
        _
      // Predicated region
      $region49: #{mlp_forward.3} parent=11 // pred_check
        %p497 = pneg %p261
      $region50: #{mlp_forward.3} parent=11 // pred_check_branch
        %499 = sbr.rel (%p497) target = $region52
      $region51: #{mlp_forward.3} parent=11 // pred_region
        _
      $region52: #{mlp_forward.3} parent=11 // pred_fallthru
        _
      // Predicated region
      $region53: #{mlp_forward.3} parent=11 // pred_check
        %p500 = pneg %p282
      $region54: #{mlp_forward.3} parent=11 // pred_check_branch
        %502 = sbr.rel (%p500) target = $region56
      $region55: #{mlp_forward.3} parent=11 // pred_region
        _
      $region56: #{mlp_forward.3} parent=11 // pred_fallthru
        _
      // Predicated region
      $region57: #{mlp_forward.3} parent=11 // pred_check
        %p503 = pneg %p303
      $region58: #{mlp_forward.3} parent=11 // pred_check_branch
        %505 = sbr.rel (%p503) target = $region60
      $region59: #{mlp_forward.3} parent=11 // pred_region
        _
      $region60: #{mlp_forward.3} parent=11 // pred_fallthru
        _
      // Predicated region
      $region61: #{mlp_forward.3} parent=11 // pred_check
        %p506 = pneg %p324
      $region62: #{mlp_forward.3} parent=11 // pred_check_branch
        %508 = sbr.rel (%p506) target = $region64
      $region63: #{mlp_forward.3} parent=11 // pred_region
        _
      $region64: #{mlp_forward.3} parent=11 // pred_fallthru
        _
      // Predicated region
      $region65: #{mlp_forward.3} parent=11 // pred_check
        %p509 = pneg %p345
      $region66: #{mlp_forward.3} parent=11 // pred_check_branch
        %511 = sbr.rel (%p509) target = $region68
      $region67: #{mlp_forward.3} parent=11 // pred_region
        _
      $region68: #{mlp_forward.3} parent=11 // pred_fallthru
        _
      // Predicated region
      $region69: #{mlp_forward.3} parent=11 // pred_check
        %p512 = pneg %p366
      $region70: #{mlp_forward.3} parent=11 // pred_check_branch
        %514 = sbr.rel (%p512) target = $region72
      $region71: #{mlp_forward.3} parent=11 // pred_region
        _
      $region72: #{mlp_forward.3} parent=11 // pred_fallthru
        _
      // Predicated region
      $region73: #{mlp_forward.3} parent=11 // pred_check
        %p515 = pneg %p387
      $region74: #{mlp_forward.3} parent=11 // pred_check_branch
        %517 = sbr.rel (%p515) target = $region76
      $region75: #{mlp_forward.3} parent=11 // pred_region
        _
      $region76: #{mlp_forward.3} parent=11 // pred_fallthru
        _
      // Predicated region
      $region77: #{mlp_forward.3} parent=11 // pred_check
        %p518 = pneg %p408
      $region78: #{mlp_forward.3} parent=11 // pred_check_branch
        %520 = sbr.rel (%p518) target = $region80
      $region79: #{mlp_forward.3} parent=11 // pred_region
        _
      $region80: #{mlp_forward.3} parent=11 // pred_fallthru
        _
      // Predicated region
      $region81: #{mlp_forward.3} parent=11 // pred_check
        %p521 = pneg %p429
      $region82: #{mlp_forward.3} parent=11 // pred_check_branch
        %523 = sbr.rel (%p521) target = $region84
      $region83: #{mlp_forward.3} parent=11 // pred_region
        _
      $region84: #{mlp_forward.3} parent=11 // pred_fallthru
        _
    $region12: #{mlp_forward.3} parent=5 // pred_fallthru
      _
    %p524 = scmp.lt.s32.totalorder %s25, 2
    // Predicated region
    $region85: #{mlp_forward.3} parent=5 // pred_check
      %p525 = pneg %p524
    $region86: #{mlp_forward.3} parent=5 // pred_check_branch
      %527 = sbr.rel (%p525) target = $region88
    $region87: #{mlp_forward.3} parent=5 // pred_region
      // Predicated region
      $region89: #{mlp_forward.3} parent=87 // pred_check
        %p528 = pneg %p45
      $region90: #{mlp_forward.3} parent=87 // pred_check_branch
        %530 = sbr.rel (%p528) target = $region92
      $region91: #{mlp_forward.3} parent=87 // pred_region
        %p531 = scmp.lt.s32.totalorder %s25, 1
        %s532 = scalar_select %p531, %s25, 1
        %s533 = smul.addr %s532, 14
        %s534 = smul.addr %s533, 8
        %s535 = scalar_lea.vmem %s0, %s534
      $region92: #{mlp_forward.3} parent=87 // pred_fallthru
        _
    $region88: #{mlp_forward.3} parent=5 // pred_fallthru
      _
    %p536 = scmp.le.s32.totalorder 1, %s25
    %p537 = scmp.lt.s32.totalorder %s25, 3
    %p538 = pnand %p536, %p537
    %p539 = pneg %p538
    // Predicated region
    $region93: #{mlp_forward.3} parent=5 // pred_check
      _
    $region94: #{mlp_forward.3} parent=5 // pred_check_branch
      %541 = sbr.rel (%p538) target = $region96
    $region95: #{mlp_forward.3} parent=5 // pred_region
      %s542 = ssub.s32 %s25, 1
      %p543 = scmp.lt.s32.totalorder %s30, 1
      %s544 = scalar_select %p543, %s30, 1
      %s545 = smul.addr %s544, 14
      %s546 = smul.addr %s545, 8
      %s547 = scalar_lea.vmem %s0, %s546
      %p548 = pneg %p51
      %p549 = pneg %p48
      %p550 = pneg %p72
      %p551 = pneg %p69
      %p552 = pneg %p93
      %p553 = pneg %p90
      %p554 = pneg %p114
      %p555 = pneg %p111
      %p556 = pneg %p135
      %p557 = pneg %p132
      %p558 = pneg %p156
      %p559 = pneg %p153
      %p560 = pneg %p177
      %p561 = pneg %p174
      %p562 = pneg %p198
      %p563 = pneg %p195
      %p564 = pneg %p219
      %p565 = pneg %p216
      %p566 = pneg %p240
      %p567 = pneg %p237
      %p568 = pneg %p261
      %p569 = pneg %p258
      %p570 = pneg %p282
      %p571 = pneg %p279
      %p572 = pneg %p303
      %p573 = pneg %p300
      %p574 = pneg %p324
      %p575 = pneg %p321
      %p576 = pneg %p345
      %p577 = pneg %p342
      %p578 = pneg %p366
      %p579 = pneg %p363
      %p580 = pneg %p387
      %p581 = pneg %p384
      %p582 = pneg %p408
      %p583 = pneg %p405
      %p584 = pneg %p429
      %p585 = pneg %p426
      %p586 = pneg %p455
      %p587 = pneg %p452
      %p588 = scmp.lt.s32.totalorder %s30, 1
      %s589 = scalar_select %p588, %s30, 1
      %s590 = smul.addr %s589, 14
      %s591 = smul.addr %s590, 8
      %s592 = scalar_lea.vmem %s19, %s591
      %p593 = scmp.lt.s32.totalorder %s30, 1
      %s594 = scalar_select %p593, %s30, 1
      %s595 = smul.addr %s594, 14
      %s596 = smul.addr %s595, 8
      %s597 = scalar_lea.vmem %s0, %s596
      %p598 = scmp.lt.s32.totalorder %s30, 1
      %s599 = scalar_select %p598, %s30, 1
      %s600 = smul.addr %s599, 14
      %s601 = smul.addr %s600, 8
      %s602 = scalar_lea.vmem %s19, %s601
      %v603 = vld [vmem:[%s597] sm:$0xff]
      %v604 = vld [vmem:[%s597 + $0x8] sm:$0xff]
      %v605 = vld [vmem:[%s597 + $0x10] sm:$0xff]
      %v606 = vld [vmem:[%s597 + $0x18] sm:$0xff]
      %v607 = vld [vmem:[%s597 + $0x20] sm:$0xff]
      %v608 = vld [vmem:[%s597 + $0x28] sm:$0xff]
      %v609 = vld [vmem:[%s597 + $0x30] sm:$0xff]
      %v610 = vld [vmem:[%s597 + $0x38] sm:$0xff]
      %v611 = vld [vmem:[%s597 + $0x40] sm:$0xff]
      %v612 = vld [vmem:[%s597 + $0x48] sm:$0xff]
      %v613 = vld [vmem:[%s597 + $0x50] sm:$0xff]
      %v614 = vld [vmem:[%s597 + $0x58] sm:$0xff]
      %v615 = vld [vmem:[%s597 + $0x60] sm:$0xff]
      %v616 = vld [vmem:[%s597 + $0x68] sm:$0x1f]
      %v617 = vld [vmem:[%s1] sm:$0xff]
      %v618 = vld [vmem:[%s1 + $0x8] sm:$0xff]
      %v619 = vld [vmem:[%s1 + $0x10] sm:$0x3]
      %v620 = vld [vmem:[%s2] sm:$0x1]
      %v622 = vperm.slane %v620, 0
      %vm624 = vcmask 146432
      %v626 = vsel %vm624, %v603, 0
      %v629 = vsel %vm624, %v604, 0
      %v632 = vsel %vm624, %v605, 0
      %v635 = vsel %vm624, %v606, 0
      %v638 = vsel %vm624, %v607, 0
      %v641 = vsel %vm624, %v608, 0
      %v644 = vsel %vm624, %v609, 0
      %v647 = vsel %vm624, %v610, 0
      %v650 = vsel %vm624, %v611, 0
      %v653 = vsel %vm624, %v612, 0
      %v656 = vsel %vm624, %v613, 0
      %v659 = vsel %vm624, %v614, 0
      %v662 = vsel %vm624, %v615, 0
      %v665 = vsel %vm624, %v616, 0
      %vm667 = vcmask 1041408
      %v669 = vsel %vm667, %v619, 0
      %671 = vmatpush.msra.mxu0 0.0
      %672 = vmatpush.msra.mxu0 0.0
      %673 = vmatpush.msra.mxu0 0.0
      %674 = vmatpush.msra.mxu0 0.0
      %675 = vmatpush.msra.mxu0 0.0
      %676 = vmatpush.msra.mxu0 0.0
      %677 = vmatpush.msra.mxu0 0.0
      %678 = vmatpush.msra.mxu0 0.0
      %679 = vmatpush.msra.mxu0 0.0
      %680 = vmatpush.msra.mxu0 0.0
      %681 = vmatpush.msra.mxu0 0.0
      %682 = vmatpush.msra.mxu0 0.0
      %683 = vmatpush.msra.mxu0 0.0
      %684 = vmatpush.msra.mxu0 %v669
      %685 = vmatpush.msra.mxu0 %v618
      %686 = vmatpush.msra.mxu0 %v617
      %687 = vmatmul.f32.gmra.mxu0 %v626
      %v688 = vpop.f32.mrf.mxu0
      %v689 = vadd.f32 %v622, %v688
      %690 = vmatmul.f32.gmra.mxu0 %v629
      %v691 = vpop.f32.mrf.mxu0
      %v692 = vadd.f32 %v622, %v691
      %693 = vmatmul.f32.gmra.mxu0 %v632
      %v694 = vpop.f32.mrf.mxu0
      %v695 = vadd.f32 %v622, %v694
      %696 = vmatmul.f32.gmra.mxu0 %v635
      %v697 = vpop.f32.mrf.mxu0
      %v698 = vadd.f32 %v622, %v697
      %699 = vmatmul.f32.gmra.mxu0 %v638
      %v700 = vpop.f32.mrf.mxu0
      %v701 = vadd.f32 %v622, %v700
      %702 = vmatmul.f32.gmra.mxu0 %v641
      %v703 = vpop.f32.mrf.mxu0
      %v704 = vadd.f32 %v622, %v703
      %705 = vmatmul.f32.gmra.mxu0 %v644
      %v706 = vpop.f32.mrf.mxu0
      %v707 = vadd.f32 %v622, %v706
      %708 = vmatmul.f32.gmra.mxu0 %v647
      %v709 = vpop.f32.mrf.mxu0
      %v710 = vadd.f32 %v622, %v709
      %711 = vmatmul.f32.gmra.mxu0 %v650
      %v712 = vpop.f32.mrf.mxu0
      %v713 = vadd.f32 %v622, %v712
      %714 = vmatmul.f32.gmra.mxu0 %v653
      %v715 = vpop.f32.mrf.mxu0
      %v716 = vadd.f32 %v622, %v715
      %717 = vmatmul.f32.gmra.mxu0 %v656
      %v718 = vpop.f32.mrf.mxu0
      %v719 = vadd.f32 %v622, %v718
      %720 = vmatmul.f32.gmra.mxu0 %v659
      %v721 = vpop.f32.mrf.mxu0
      %v722 = vadd.f32 %v622, %v721
      %723 = vmatmul.f32.gmra.mxu0 %v662
      %v724 = vpop.f32.mrf.mxu0
      %v725 = vadd.f32 %v622, %v724
      %726 = vmatmul.f32.gmra.mxu0 %v665
      %v727 = vpop.f32.mrf.mxu0
      %v728 = vadd.f32 %v622, %v727
      %729 = vdwg.mxu0
      %v730 = vld [vmem:[%s3] sm:$0x1]
      %v731 = vld [vmem:[%s4] sm:$0x1]
      %vm732 = vcmask 261120
      %v733 = vsel %vm732, %v689, 0.0
      %734 = vadd.xlane.f32.xlu0 %v733
      %v735 = vpop.xlane.xlu0 %734
      %v736 = vsel %vm732, %v692, 0.0
      %737 = vadd.xlane.f32.xlu0 %v736
      %v738 = vpop.xlane.xlu0 %737
      %v739 = vsel %vm732, %v695, 0.0
      %740 = vadd.xlane.f32.xlu0 %v739
      %v741 = vpop.xlane.xlu0 %740
      %v742 = vsel %vm732, %v698, 0.0
      %743 = vadd.xlane.f32.xlu0 %v742
      %v744 = vpop.xlane.xlu0 %743
      %v745 = vsel %vm732, %v701, 0.0
      %746 = vadd.xlane.f32.xlu0 %v745
      %v747 = vpop.xlane.xlu0 %746
      %v748 = vsel %vm732, %v704, 0.0
      %749 = vadd.xlane.f32.xlu0 %v748
      %v750 = vpop.xlane.xlu0 %749
      %v751 = vsel %vm732, %v707, 0.0
      %752 = vadd.xlane.f32.xlu0 %v751
      %v753 = vpop.xlane.xlu0 %752
      %v754 = vsel %vm732, %v710, 0.0
      %755 = vadd.xlane.f32.xlu0 %v754
      %v756 = vpop.xlane.xlu0 %755
      %v757 = vsel %vm732, %v713, 0.0
      %758 = vadd.xlane.f32.xlu0 %v757
      %v759 = vpop.xlane.xlu0 %758
      %v760 = vsel %vm732, %v716, 0.0
      %761 = vadd.xlane.f32.xlu0 %v760
      %v762 = vpop.xlane.xlu0 %761
      %v763 = vsel %vm732, %v719, 0.0
      %764 = vadd.xlane.f32.xlu0 %v763
      %v765 = vpop.xlane.xlu0 %764
      %v766 = vsel %vm732, %v722, 0.0
      %767 = vadd.xlane.f32.xlu0 %v766
      %v768 = vpop.xlane.xlu0 %767
      %v769 = vsel %vm732, %v725, 0.0
      %770 = vadd.xlane.f32.xlu0 %v769
      %v771 = vpop.xlane.xlu0 %770
      %vm772 = vcmask 258048
      %v773 = vsel %vm772, %v728, 0.0
      %774 = vadd.xlane.f32.xlu0 %v773
      %v775 = vpop.xlane.xlu0 %774
      %v776 = vrcp.pop 32.0
      %v777 = vmul.f32 32.0, %v776
      %v778 = vsub.f32 1.0, %v777
      %v779 = vmul.f32 %v776, %v778
      %v780 = vadd.f32 %v776, %v779
      %vm781 = vweird.f32 %v776
      %v782 = vsel %vm781, %v776, %v780
      %v783 = vmul.f32 %v735, %v782
      %v784 = vmul.f32 %v738, %v782
      %v785 = vmul.f32 %v741, %v782
      %v786 = vmul.f32 %v744, %v782
      %v787 = vmul.f32 %v747, %v782
      %v788 = vmul.f32 %v750, %v782
      %v789 = vmul.f32 %v753, %v782
      %v790 = vmul.f32 %v756, %v782
      %v791 = vmul.f32 %v759, %v782
      %v792 = vmul.f32 %v762, %v782
      %v793 = vmul.f32 %v765, %v782
      %v794 = vmul.f32 %v768, %v782
      %v795 = vmul.f32 %v771, %v782
      %v796 = vmul.f32 %v775, %v782
      %v797 = vsub.f32 %v689, %v783
      %v798 = vsub.f32 %v692, %v784
      %v799 = vsub.f32 %v695, %v785
      %v800 = vsub.f32 %v698, %v786
      %v801 = vsub.f32 %v701, %v787
      %v802 = vsub.f32 %v704, %v788
      %v803 = vsub.f32 %v707, %v789
      %v804 = vsub.f32 %v710, %v790
      %v805 = vsub.f32 %v713, %v791
      %v806 = vsub.f32 %v716, %v792
      %v807 = vsub.f32 %v719, %v793
      %v808 = vsub.f32 %v722, %v794
      %v809 = vsub.f32 %v725, %v795
      %v810 = vsub.f32 %v728, %v796
      %v811 = vmul.f32 %v797, %v797
      %v812 = vmul.f32 %v798, %v798
      %v813 = vmul.f32 %v799, %v799
      %v814 = vmul.f32 %v800, %v800
      %v815 = vmul.f32 %v801, %v801
      %v816 = vmul.f32 %v802, %v802
      %v817 = vmul.f32 %v803, %v803
      %v818 = vmul.f32 %v804, %v804
      %v819 = vmul.f32 %v805, %v805
      %v820 = vmul.f32 %v806, %v806
      %v821 = vmul.f32 %v807, %v807
      %v822 = vmul.f32 %v808, %v808
      %v823 = vmul.f32 %v809, %v809
      %v824 = vmul.f32 %v810, %v810
      %v825 = vsel %vm732, %v811, 0.0
      %826 = vadd.xlane.f32.xlu0 %v825
      %v827 = vpop.xlane.xlu0 %826
      %v828 = vsel %vm732, %v812, 0.0
      %829 = vadd.xlane.f32.xlu0 %v828
      %v830 = vpop.xlane.xlu0 %829
      %v831 = vsel %vm732, %v813, 0.0
      %832 = vadd.xlane.f32.xlu0 %v831
      %v833 = vpop.xlane.xlu0 %832
      %v834 = vsel %vm732, %v814, 0.0
      %835 = vadd.xlane.f32.xlu0 %v834
      %v836 = vpop.xlane.xlu0 %835
      %v837 = vsel %vm732, %v815, 0.0
      %838 = vadd.xlane.f32.xlu0 %v837
      %v839 = vpop.xlane.xlu0 %838
      %v840 = vsel %vm732, %v816, 0.0
      %841 = vadd.xlane.f32.xlu0 %v840
      %v842 = vpop.xlane.xlu0 %841
      %v843 = vsel %vm732, %v817, 0.0
      %844 = vadd.xlane.f32.xlu0 %v843
      %v845 = vpop.xlane.xlu0 %844
      %v846 = vsel %vm732, %v818, 0.0
      %847 = vadd.xlane.f32.xlu0 %v846
      %v848 = vpop.xlane.xlu0 %847
      %v849 = vsel %vm732, %v819, 0.0
      %850 = vadd.xlane.f32.xlu0 %v849
      %v851 = vpop.xlane.xlu0 %850
      %v852 = vsel %vm732, %v820, 0.0
      %853 = vadd.xlane.f32.xlu0 %v852
      %v854 = vpop.xlane.xlu0 %853
      %v855 = vsel %vm732, %v821, 0.0
      %856 = vadd.xlane.f32.xlu0 %v855
      %v857 = vpop.xlane.xlu0 %856
      %v858 = vsel %vm732, %v822, 0.0
      %859 = vadd.xlane.f32.xlu0 %v858
      %v860 = vpop.xlane.xlu0 %859
      %v861 = vsel %vm732, %v823, 0.0
      %862 = vadd.xlane.f32.xlu0 %v861
      %v863 = vpop.xlane.xlu0 %862
      %v864 = vsel %vm772, %v824, 0.0
      %865 = vadd.xlane.f32.xlu0 %v864
      %v866 = vpop.xlane.xlu0 %865
      %v867 = vmul.f32 %v827, %v782
      %v868 = vmul.f32 %v830, %v782
      %v869 = vmul.f32 %v833, %v782
      %v870 = vmul.f32 %v836, %v782
      %v871 = vmul.f32 %v839, %v782
      %v872 = vmul.f32 %v842, %v782
      %v873 = vmul.f32 %v845, %v782
      %v874 = vmul.f32 %v848, %v782
      %v875 = vmul.f32 %v851, %v782
      %v876 = vmul.f32 %v854, %v782
      %v877 = vmul.f32 %v857, %v782
      %v878 = vmul.f32 %v860, %v782
      %v879 = vmul.f32 %v863, %v782
      %v880 = vmul.f32 %v866, %v782
      %v881 = vadd.f32 %v867, 1e-05
      %v882 = vadd.f32 %v868, 1e-05
      %v883 = vadd.f32 %v869, 1e-05
      %v884 = vadd.f32 %v870, 1e-05
      %v885 = vadd.f32 %v871, 1e-05
      %v886 = vadd.f32 %v872, 1e-05
      %v887 = vadd.f32 %v873, 1e-05
      %v888 = vadd.f32 %v874, 1e-05
      %v889 = vadd.f32 %v875, 1e-05
      %v890 = vadd.f32 %v876, 1e-05
      %v891 = vadd.f32 %v877, 1e-05
      %v892 = vadd.f32 %v878, 1e-05
      %v893 = vadd.f32 %v879, 1e-05
      %v894 = vadd.f32 %v880, 1e-05
      %v895 = vrsqrt.pop %v881
      %v896 = vmul.f32 %v895, %v881
      %v897 = vmul.f32 %v896, %v895
      %v898 = vmul.f32 0.5, %v897
      %v899 = vsub.f32 1.5, %v898
      %v900 = vmul.f32 %v895, %v899
      %vm901 = vweird.f32 %v881
      %vm902 = vweird.f32 %v895
      %vm903 = vmor %vm901, %vm902
      %v904 = vsel %vm903, %v895, %v900
      %v905 = vrsqrt.pop %v882
      %v906 = vmul.f32 %v905, %v882
      %v907 = vmul.f32 %v906, %v905
      %v908 = vmul.f32 0.5, %v907
      %v909 = vsub.f32 1.5, %v908
      %v910 = vmul.f32 %v905, %v909
      %vm911 = vweird.f32 %v882
      %vm912 = vweird.f32 %v905
      %vm913 = vmor %vm911, %vm912
      %v914 = vsel %vm913, %v905, %v910
      %v915 = vrsqrt.pop %v883
      %v916 = vmul.f32 %v915, %v883
      %v917 = vmul.f32 %v916, %v915
      %v918 = vmul.f32 0.5, %v917
      %v919 = vsub.f32 1.5, %v918
      %v920 = vmul.f32 %v915, %v919
      %vm921 = vweird.f32 %v883
      %vm922 = vweird.f32 %v915
      %vm923 = vmor %vm921, %vm922
      %v924 = vsel %vm923, %v915, %v920
      %v925 = vrsqrt.pop %v884
      %v926 = vmul.f32 %v925, %v884
      %v927 = vmul.f32 %v926, %v925
      %v928 = vmul.f32 0.5, %v927
      %v929 = vsub.f32 1.5, %v928
      %v930 = vmul.f32 %v925, %v929
      %vm931 = vweird.f32 %v884
      %vm932 = vweird.f32 %v925
      %vm933 = vmor %vm931, %vm932
      %v934 = vsel %vm933, %v925, %v930
      %v935 = vrsqrt.pop %v885
      %v936 = vmul.f32 %v935, %v885
      %v937 = vmul.f32 %v936, %v935
      %v938 = vmul.f32 0.5, %v937
      %v939 = vsub.f32 1.5, %v938
      %v940 = vmul.f32 %v935, %v939
      %vm941 = vweird.f32 %v885
      %vm942 = vweird.f32 %v935
      %vm943 = vmor %vm941, %vm942
      %v944 = vsel %vm943, %v935, %v940
      %v945 = vrsqrt.pop %v886
      %v946 = vmul.f32 %v945, %v886
      %v947 = vmul.f32 %v946, %v945
      %v948 = vmul.f32 0.5, %v947
      %v949 = vsub.f32 1.5, %v948
      %v950 = vmul.f32 %v945, %v949
      %vm951 = vweird.f32 %v886
      %vm952 = vweird.f32 %v945
      %vm953 = vmor %vm951, %vm952
      %v954 = vsel %vm953, %v945, %v950
      %v955 = vrsqrt.pop %v887
      %v956 = vmul.f32 %v955, %v887
      %v957 = vmul.f32 %v956, %v955
      %v958 = vmul.f32 0.5, %v957
      %v959 = vsub.f32 1.5, %v958
      %v960 = vmul.f32 %v955, %v959
      %vm961 = vweird.f32 %v887
      %vm962 = vweird.f32 %v955
      %vm963 = vmor %vm961, %vm962
      %v964 = vsel %vm963, %v955, %v960
      %v965 = vrsqrt.pop %v888
      %v966 = vmul.f32 %v965, %v888
      %v967 = vmul.f32 %v966, %v965
      %v968 = vmul.f32 0.5, %v967
      %v969 = vsub.f32 1.5, %v968
      %v970 = vmul.f32 %v965, %v969
      %vm971 = vweird.f32 %v888
      %vm972 = vweird.f32 %v965
      %vm973 = vmor %vm971, %vm972
      %v974 = vsel %vm973, %v965, %v970
      %v975 = vrsqrt.pop %v889
      %v976 = vmul.f32 %v975, %v889
      %v977 = vmul.f32 %v976, %v975
      %v978 = vmul.f32 0.5, %v977
      %v979 = vsub.f32 1.5, %v978
      %v980 = vmul.f32 %v975, %v979
      %vm981 = vweird.f32 %v889
      %vm982 = vweird.f32 %v975
      %vm983 = vmor %vm981, %vm982
      %v984 = vsel %vm983, %v975, %v980
      %v985 = vrsqrt.pop %v890
      %v986 = vmul.f32 %v985, %v890
      %v987 = vmul.f32 %v986, %v985
      %v988 = vmul.f32 0.5, %v987
      %v989 = vsub.f32 1.5, %v988
      %v990 = vmul.f32 %v985, %v989
      %vm991 = vweird.f32 %v890
      %vm992 = vweird.f32 %v985
      %vm993 = vmor %vm991, %vm992
      %v994 = vsel %vm993, %v985, %v990
      %v995 = vrsqrt.pop %v891
      %v996 = vmul.f32 %v995, %v891
      %v997 = vmul.f32 %v996, %v995
      %v998 = vmul.f32 0.5, %v997
      %v999 = vsub.f32 1.5, %v998
      %v1000 = vmul.f32 %v995, %v999
      %vm1001 = vweird.f32 %v891
      %vm1002 = vweird.f32 %v995
      %vm1003 = vmor %vm1001, %vm1002
      %v1004 = vsel %vm1003, %v995, %v1000
      %v1005 = vrsqrt.pop %v892
      %v1006 = vmul.f32 %v1005, %v892
      %v1007 = vmul.f32 %v1006, %v1005
      %v1008 = vmul.f32 0.5, %v1007
      %v1009 = vsub.f32 1.5, %v1008
      %v1010 = vmul.f32 %v1005, %v1009
      %vm1011 = vweird.f32 %v892
      %vm1012 = vweird.f32 %v1005
      %vm1013 = vmor %vm1011, %vm1012
      %v1014 = vsel %vm1013, %v1005, %v1010
      %v1015 = vrsqrt.pop %v893
      %v1016 = vmul.f32 %v1015, %v893
      %v1017 = vmul.f32 %v1016, %v1015
      %v1018 = vmul.f32 0.5, %v1017
      %v1019 = vsub.f32 1.5, %v1018
      %v1020 = vmul.f32 %v1015, %v1019
      %vm1021 = vweird.f32 %v893
      %vm1022 = vweird.f32 %v1015
      %vm1023 = vmor %vm1021, %vm1022
      %v1024 = vsel %vm1023, %v1015, %v1020
      %v1025 = vrsqrt.pop %v894
      %v1026 = vmul.f32 %v1025, %v894
      %v1027 = vmul.f32 %v1026, %v1025
      %v1028 = vmul.f32 0.5, %v1027
      %v1029 = vsub.f32 1.5, %v1028
      %v1030 = vmul.f32 %v1025, %v1029
      %vm1031 = vweird.f32 %v894
      %vm1032 = vweird.f32 %v1025
      %vm1033 = vmor %vm1031, %vm1032
      %v1034 = vsel %vm1033, %v1025, %v1030
      %v1035 = vmul.f32 %v797, %v904
      %v1036 = vmul.f32 %v798, %v914
      %v1037 = vmul.f32 %v799, %v924
      %v1038 = vmul.f32 %v800, %v934
      %v1039 = vmul.f32 %v801, %v944
      %v1040 = vmul.f32 %v802, %v954
      %v1041 = vmul.f32 %v803, %v964
      %v1042 = vmul.f32 %v804, %v974
      %v1043 = vmul.f32 %v805, %v984
      %v1044 = vmul.f32 %v806, %v994
      %v1045 = vmul.f32 %v807, %v1004
      %v1046 = vmul.f32 %v808, %v1014
      %v1047 = vmul.f32 %v809, %v1024
      %v1048 = vmul.f32 %v810, %v1034
      %v1050 = vperm.slane %v730, 0
      %v1052 = vmul.f32 %v1035, %v1050
      %v1053 = vmul.f32 %v1036, %v1050
      %v1054 = vmul.f32 %v1037, %v1050
      %v1055 = vmul.f32 %v1038, %v1050
      %v1056 = vmul.f32 %v1039, %v1050
      %v1057 = vmul.f32 %v1040, %v1050
      %v1058 = vmul.f32 %v1041, %v1050
      %v1059 = vmul.f32 %v1042, %v1050
      %v1060 = vmul.f32 %v1043, %v1050
      %v1061 = vmul.f32 %v1044, %v1050
      %v1062 = vmul.f32 %v1045, %v1050
      %v1063 = vmul.f32 %v1046, %v1050
      %v1064 = vmul.f32 %v1047, %v1050
      %v1065 = vmul.f32 %v1048, %v1050
      %v1067 = vperm.slane %v731, 0
      %v1069 = vadd.f32 %v1052, %v1067
      %v1070 = vadd.f32 %v1053, %v1067
      %v1071 = vadd.f32 %v1054, %v1067
      %v1072 = vadd.f32 %v1055, %v1067
      %v1073 = vadd.f32 %v1056, %v1067
      %v1074 = vadd.f32 %v1057, %v1067
      %v1075 = vadd.f32 %v1058, %v1067
      %v1076 = vadd.f32 %v1059, %v1067
      %v1077 = vadd.f32 %v1060, %v1067
      %v1078 = vadd.f32 %v1061, %v1067
      %v1079 = vadd.f32 %v1062, %v1067
      %v1080 = vadd.f32 %v1063, %v1067
      %v1081 = vadd.f32 %v1064, %v1067
      %v1082 = vadd.f32 %v1065, %v1067
      %v1083 = vld [vmem:[%s5] sm:$0xff]
      %v1084 = vld [vmem:[%s5 + $0x8] sm:$0xff]
      %v1085 = vld [vmem:[%s5 + $0x10] sm:$0xff]
      %v1086 = vld [vmem:[%s5 + $0x18] sm:$0xff]
      %v1087 = vld [vmem:[%s5 + $0x20] sm:$0xff]
      %v1088 = vld [vmem:[%s5 + $0x28] sm:$0xff]
      %v1089 = vld [vmem:[%s5 + $0x30] sm:$0xff]
      %v1090 = vld [vmem:[%s5 + $0x38] sm:$0xff]
      %v1091 = vld [vmem:[%s5 + $0x40] sm:$0xff]
      %v1092 = vld [vmem:[%s5 + $0x48] sm:$0xff]
      %v1093 = vld [vmem:[%s5 + $0x50] sm:$0xff]
      %v1094 = vld [vmem:[%s5 + $0x58] sm:$0xff]
      %v1095 = vld [vmem:[%s5 + $0x60] sm:$0xff]
      %v1096 = vld [vmem:[%s5 + $0x68] sm:$0x1f]
      %v1097 = vld [vmem:[%s6] sm:$0x1]
      %v1099 = vperm.slane %v1097, 0
      %1101 = vxpose.xlu0.b32.start [1/16] %v1069, 128
      %1102 = vxpose.xlu0.b32.cont [2/16] %v1070, 128
      %1103 = vxpose.xlu0.b32.cont [3/16] %v1071, 128
      %1104 = vxpose.xlu0.b32.cont [4/16] %v1072, 128
      %1105 = vxpose.xlu0.b32.cont [5/16] %v1073, 128
      %1106 = vxpose.xlu0.b32.cont [6/16] %v1074, 128
      %1107 = vxpose.xlu0.b32.cont [7/16] %v1075, 128
      %1108 = vxpose.xlu0.b32.cont [8/16] %v1076, 128
      %1109 = vxpose.xlu0.b32.cont [9/16] %v1077, 128
      %1110 = vxpose.xlu0.b32.cont [10/16] %v1078, 128
      %1111 = vxpose.xlu0.b32.cont [11/16] %v1079, 128
      %1112 = vxpose.xlu0.b32.cont [12/16] %v1080, 128
      %1113 = vxpose.xlu0.b32.cont [13/16] %v1081, 128
      %1114 = vxpose.xlu0.b32.cont [14/16] %v1082, 128
      %1115 = vxpose.xlu0.b32.cont [15/16] 0.0, 128
      %1116 = vxpose.xlu0.b32.end [16/16] 0.0, 128
      %v1117 = vpop.trf.xlu0
      %v1118 = vpop.trf.xlu0
      %v1119 = vpop.trf.xlu0
      %v1120 = vpop.trf.xlu0
      %v1121 = vpop.trf.xlu0
      %v1122 = vpop.trf.xlu0
      %v1123 = vpop.trf.xlu0
      %v1124 = vpop.trf.xlu0
      %v1125 = vpop.trf.xlu0
      %v1126 = vpop.trf.xlu0
      %v1127 = vpop.trf.xlu0
      %v1128 = vpop.trf.xlu0
      %v1129 = vpop.trf.xlu0
      %v1130 = vpop.trf.xlu0
      %v1131 = vpop.trf.xlu0
      %v1132 = vpop.trf.xlu0
      %vm1133 = vcmask 891904
      %v1135 = vsel %vm1133, %v1117, 0
      %v1138 = vsel %vm1133, %v1118, 0
      %v1141 = vsel %vm1133, %v1119, 0
      %v1144 = vsel %vm1133, %v1120, 0
      %vm1146 = vcmask 1044480
      %v1148 = vsel %vm1146, %v1096, 0
      %1150 = vmatpush.msra.mxu0 0.0
      %1151 = vmatpush.msra.mxu0 0.0
      %1152 = vmatpush.msra.mxu0 %v1148
      %1153 = vmatpush.msra.mxu0 %v1095
      %1154 = vmatpush.msra.mxu0 %v1094
      %1155 = vmatpush.msra.mxu0 %v1093
      %1156 = vmatpush.msra.mxu0 %v1092
      %1157 = vmatpush.msra.mxu0 %v1091
      %1158 = vmatpush.msra.mxu0 %v1090
      %1159 = vmatpush.msra.mxu0 %v1089
      %1160 = vmatpush.msra.mxu0 %v1088
      %1161 = vmatpush.msra.mxu0 %v1087
      %1162 = vmatpush.msra.mxu0 %v1086
      %1163 = vmatpush.msra.mxu0 %v1085
      %1164 = vmatpush.msra.mxu0 %v1084
      %1165 = vmatpush.msra.mxu0 %v1083
      %1166 = vmatmul.f32.gmra.mxu0 %v1135
      %v1167 = vpop.f32.mrf.mxu0
      %v1168 = vadd.f32 %v1099, %v1167
      %1169 = vmatmul.f32.gmra.mxu0 %v1138
      %v1170 = vpop.f32.mrf.mxu0
      %v1171 = vadd.f32 %v1099, %v1170
      %1172 = vmatmul.f32.gmra.mxu0 %v1141
      %v1173 = vpop.f32.mrf.mxu0
      %v1174 = vadd.f32 %v1099, %v1173
      %1175 = vmatmul.f32.gmra.mxu0 %v1144
      %v1176 = vpop.f32.mrf.mxu0
      %v1177 = vadd.f32 %v1099, %v1176
      %1178 = vdwg.mxu0
      %v1179 = vmul.f32 %v1168, 0.5
      %v1180 = vmul.f32 %v1171, 0.5
      %v1181 = vmul.f32 %v1174, 0.5
      %v1182 = vmul.f32 %v1177, 0.5
      %v1183 = vmul.f32 %v1168, 0.044715
      %v1184 = vmul.f32 %v1171, 0.044715
      %v1185 = vmul.f32 %v1174, 0.044715
      %v1186 = vmul.f32 %v1177, 0.044715
      %v1187 = vmul.f32 %v1183, %v1168
      %v1188 = vmul.f32 %v1184, %v1171
      %v1189 = vmul.f32 %v1185, %v1174
      %v1190 = vmul.f32 %v1186, %v1177
      %v1191 = vmul.f32 %v1187, %v1168
      %v1192 = vmul.f32 %v1188, %v1171
      %v1193 = vmul.f32 %v1189, %v1174
      %v1194 = vmul.f32 %v1190, %v1177
      %v1195 = vadd.f32 %v1168, %v1191
      %v1196 = vadd.f32 %v1171, %v1192
      %v1197 = vadd.f32 %v1174, %v1193
      %v1198 = vadd.f32 %v1177, %v1194
      %v1199 = vmul.f32 %v1195, 0.7978846
      %v1200 = vmul.f32 %v1196, 0.7978846
      %v1201 = vmul.f32 %v1197, 0.7978846
      %v1202 = vmul.f32 %v1198, 0.7978846
      %v1203 = vtanh.pop %v1199
      %v1204 = vtanh.pop %v1200
      %v1205 = vtanh.pop %v1201
      %v1206 = vtanh.pop %v1202
      %v1207 = vadd.f32 %v1203, 1.0
      %v1208 = vadd.f32 %v1204, 1.0
      %v1209 = vadd.f32 %v1205, 1.0
      %v1210 = vadd.f32 %v1206, 1.0
      %v1211 = vmul.f32 %v1179, %v1207
      %v1212 = vmul.f32 %v1180, %v1208
      %v1213 = vmul.f32 %v1181, %v1209
      %v1214 = vmul.f32 %v1182, %v1210
      %v1215 = vld [vmem:[%s7] sm:$0xff]
      %v1216 = vld [vmem:[%s7 + $0x8] sm:$0xff]
      %v1217 = vld [vmem:[%s7 + $0x10] sm:$0xff]
      %v1218 = vld [vmem:[%s7 + $0x18] sm:$0xff]
      %1219 = vxpose.xlu0.b32.start [1/16] %v1215, 128
      %1220 = vxpose.xlu0.b32.cont [2/16] %v1216, 128
      %1221 = vxpose.xlu0.b32.cont [3/16] %v1217, 128
      %1222 = vxpose.xlu0.b32.cont [4/16] %v1218, 128
      %1223 = vxpose.xlu0.b32.cont [5/16] 0.0, 128
      %1224 = vxpose.xlu0.b32.cont [6/16] 0.0, 128
      %1225 = vxpose.xlu0.b32.cont [7/16] 0.0, 128
      %1226 = vxpose.xlu0.b32.cont [8/16] 0.0, 128
      %1227 = vxpose.xlu0.b32.cont [9/16] 0.0, 128
      %1228 = vxpose.xlu0.b32.cont [10/16] 0.0, 128
      %1229 = vxpose.xlu0.b32.cont [11/16] 0.0, 128
      %1230 = vxpose.xlu0.b32.cont [12/16] 0.0, 128
      %1231 = vxpose.xlu0.b32.cont [13/16] 0.0, 128
      %1232 = vxpose.xlu0.b32.cont [14/16] 0.0, 128
      %1233 = vxpose.xlu0.b32.cont [15/16] 0.0, 128
      %1234 = vxpose.xlu0.b32.end [16/16] 0.0, 128
      %v1235 = vpop.trf.xlu0
      %v1236 = vpop.trf.xlu0
      %v1237 = vpop.trf.xlu0
      %v1238 = vpop.trf.xlu0
      %v1239 = vpop.trf.xlu0
      %v1240 = vpop.trf.xlu0
      %v1241 = vpop.trf.xlu0
      %v1242 = vpop.trf.xlu0
      %v1243 = vpop.trf.xlu0
      %v1244 = vpop.trf.xlu0
      %v1245 = vpop.trf.xlu0
      %v1246 = vpop.trf.xlu0
      %v1247 = vpop.trf.xlu0
      %v1248 = vpop.trf.xlu0
      %v1249 = vpop.trf.xlu0
      %v1250 = vpop.trf.xlu0
      %v1252 = vsel %vm732, %v1235, 0
      %v1255 = vsel %vm732, %v1236, 0
      %v1258 = vsel %vm732, %v1237, 0
      %v1261 = vsel %vm732, %v1238, 0
      %v1264 = vsel %vm732, %v1239, 0
      %v1267 = vsel %vm732, %v1240, 0
      %v1270 = vsel %vm732, %v1241, 0
      %v1273 = vsel %vm732, %v1242, 0
      %v1276 = vsel %vm732, %v1243, 0
      %v1279 = vsel %vm732, %v1244, 0
      %v1282 = vsel %vm732, %v1245, 0
      %v1285 = vsel %vm732, %v1246, 0
      %v1288 = vsel %vm732, %v1247, 0
      %v1291 = vsel %vm732, %v1248, 0
      %v1294 = vsel %vm732, %v1211, 0
      %v1297 = vsel %vm732, %v1212, 0
      %v1300 = vsel %vm732, %v1213, 0
      %v1303 = vsel %vm732, %v1214, 0
      %1305 = vmatpush.xpose.msra.mxu0 0.0
      %1306 = vmatpush.xpose.msra.mxu0 0.0
      %1307 = vmatpush.xpose.msra.mxu0 0.0
      %1308 = vmatpush.xpose.msra.mxu0 0.0
      %1309 = vmatpush.xpose.msra.mxu0 0.0
      %1310 = vmatpush.xpose.msra.mxu0 0.0
      %1311 = vmatpush.xpose.msra.mxu0 0.0
      %1312 = vmatpush.xpose.msra.mxu0 0.0
      %1313 = vmatpush.xpose.msra.mxu0 0.0
      %1314 = vmatpush.xpose.msra.mxu0 0.0
      %1315 = vmatpush.xpose.msra.mxu0 0.0
      %1316 = vmatpush.xpose.msra.mxu0 0.0
      %1317 = vmatpush.xpose.msra.mxu0 %v1303
      %1318 = vmatpush.xpose.msra.mxu0 %v1300
      %1319 = vmatpush.xpose.msra.mxu0 %v1297
      %1320 = vmatpush.xpose.msra.mxu0 %v1294
      %1321 = vmatmul.f32.gmra.mxu0 %v1252
      %v1322 = vpop.f32.mrf.mxu0
      %v1323 = vadd.f32 0.0, %v1322
      %1324 = vmatmul.f32.gmra.mxu0 %v1255
      %v1325 = vpop.f32.mrf.mxu0
      %v1326 = vadd.f32 0.0, %v1325
      %1327 = vmatmul.f32.gmra.mxu0 %v1258
      %v1328 = vpop.f32.mrf.mxu0
      %v1329 = vadd.f32 0.0, %v1328
      %1330 = vmatmul.f32.gmra.mxu0 %v1261
      %v1331 = vpop.f32.mrf.mxu0
      %v1332 = vadd.f32 0.0, %v1331
      %1333 = vmatmul.f32.gmra.mxu0 %v1264
      %v1334 = vpop.f32.mrf.mxu0
      %v1335 = vadd.f32 0.0, %v1334
      %1336 = vmatmul.f32.gmra.mxu0 %v1267
      %v1337 = vpop.f32.mrf.mxu0
      %v1338 = vadd.f32 0.0, %v1337
      %1339 = vmatmul.f32.gmra.mxu0 %v1270
      %v1340 = vpop.f32.mrf.mxu0
      %v1341 = vadd.f32 0.0, %v1340
      %1342 = vmatmul.f32.gmra.mxu0 %v1273
      %v1343 = vpop.f32.mrf.mxu0
      %v1344 = vadd.f32 0.0, %v1343
      %1345 = vmatmul.f32.gmra.mxu0 %v1276
      %v1346 = vpop.f32.mrf.mxu0
      %v1347 = vadd.f32 0.0, %v1346
      %1348 = vmatmul.f32.gmra.mxu0 %v1279
      %v1349 = vpop.f32.mrf.mxu0
      %v1350 = vadd.f32 0.0, %v1349
      %1351 = vmatmul.f32.gmra.mxu0 %v1282
      %v1352 = vpop.f32.mrf.mxu0
      %v1353 = vadd.f32 0.0, %v1352
      %1354 = vmatmul.f32.gmra.mxu0 %v1285
      %v1355 = vpop.f32.mrf.mxu0
      %v1356 = vadd.f32 0.0, %v1355
      %1357 = vmatmul.f32.gmra.mxu0 %v1288
      %v1358 = vpop.f32.mrf.mxu0
      %v1359 = vadd.f32 0.0, %v1358
      %1360 = vmatmul.f32.gmra.mxu0 %v1291
      %v1361 = vpop.f32.mrf.mxu0
      %v1362 = vadd.f32 0.0, %v1361
      %1363 = vdwg.mxu0
      %v1364 = vadd.f32 %v689, %v1323
      %v1365 = vadd.f32 %v692, %v1326
      %v1366 = vadd.f32 %v695, %v1329
      %v1367 = vadd.f32 %v698, %v1332
      %v1368 = vadd.f32 %v701, %v1335
      %v1369 = vadd.f32 %v704, %v1338
      %v1370 = vadd.f32 %v707, %v1341
      %v1371 = vadd.f32 %v710, %v1344
      %v1372 = vadd.f32 %v713, %v1347
      %v1373 = vadd.f32 %v716, %v1350
      %v1374 = vadd.f32 %v719, %v1353
      %v1375 = vadd.f32 %v722, %v1356
      %v1376 = vadd.f32 %v725, %v1359
      %v1377 = vadd.f32 %v728, %v1362
      %v1378 = vld [vmem:[%s8] sm:$0xff]
      %v1379 = vld [vmem:[%s8 + $0x8] sm:$0xff]
      %v1380 = vld [vmem:[%s8 + $0x10] sm:$0xff]
      %v1381 = vld [vmem:[%s8 + $0x18] sm:$0xff]
      %v1382 = vld [vmem:[%s8 + $0x20] sm:$0xff]
      %v1383 = vld [vmem:[%s8 + $0x28] sm:$0xff]
      %v1384 = vld [vmem:[%s8 + $0x30] sm:$0xff]
      %v1385 = vld [vmem:[%s8 + $0x38] sm:$0xff]
      %v1386 = vld [vmem:[%s8 + $0x40] sm:$0xff]
      %v1387 = vld [vmem:[%s8 + $0x48] sm:$0xff]
      %v1388 = vld [vmem:[%s8 + $0x50] sm:$0xff]
      %v1389 = vld [vmem:[%s8 + $0x58] sm:$0xff]
      %v1390 = vld [vmem:[%s8 + $0x60] sm:$0xff]
      %v1391 = vld [vmem:[%s8 + $0x68] sm:$0x1f]
      %1393 = vset.pattern.permute.xlu0 0
      %1394 = vperm.xlu0 %1393, %v1378
      %v1395 = vpop.permute.xlu0 %1394
      %1398 = vset.pattern.permute.xlu0 0
      %1399 = vperm.xlu0 %1398, %v1379
      %v1400 = vpop.permute.xlu0 %1399
      %1403 = vset.pattern.permute.xlu0 0
      %1404 = vperm.xlu0 %1403, %v1380
      %v1405 = vpop.permute.xlu0 %1404
      %1408 = vset.pattern.permute.xlu0 0
      %1409 = vperm.xlu0 %1408, %v1381
      %v1410 = vpop.permute.xlu0 %1409
      %1413 = vset.pattern.permute.xlu0 0
      %1414 = vperm.xlu0 %1413, %v1382
      %v1415 = vpop.permute.xlu0 %1414
      %1418 = vset.pattern.permute.xlu0 0
      %1419 = vperm.xlu0 %1418, %v1383
      %v1420 = vpop.permute.xlu0 %1419
      %1423 = vset.pattern.permute.xlu0 0
      %1424 = vperm.xlu0 %1423, %v1384
      %v1425 = vpop.permute.xlu0 %1424
      %1428 = vset.pattern.permute.xlu0 0
      %1429 = vperm.xlu0 %1428, %v1385
      %v1430 = vpop.permute.xlu0 %1429
      %1433 = vset.pattern.permute.xlu0 0
      %1434 = vperm.xlu0 %1433, %v1386
      %v1435 = vpop.permute.xlu0 %1434
      %1438 = vset.pattern.permute.xlu0 0
      %1439 = vperm.xlu0 %1438, %v1387
      %v1440 = vpop.permute.xlu0 %1439
      %1443 = vset.pattern.permute.xlu0 0
      %1444 = vperm.xlu0 %1443, %v1388
      %v1445 = vpop.permute.xlu0 %1444
      %1448 = vset.pattern.permute.xlu0 0
      %1449 = vperm.xlu0 %1448, %v1389
      %v1450 = vpop.permute.xlu0 %1449
      %1453 = vset.pattern.permute.xlu0 0
      %1454 = vperm.xlu0 %1453, %v1390
      %v1455 = vpop.permute.xlu0 %1454
      %1458 = vset.pattern.permute.xlu0 0
      %1459 = vperm.xlu0 %1458, %v1391
      %v1460 = vpop.permute.xlu0 %1459
      %v1462 = vadd.f32 %v1364, %v1395
      %v1463 = vadd.f32 %v1365, %v1400
      %v1464 = vadd.f32 %v1366, %v1405
      %v1465 = vadd.f32 %v1367, %v1410
      %v1466 = vadd.f32 %v1368, %v1415
      %v1467 = vadd.f32 %v1369, %v1420
      %v1468 = vadd.f32 %v1370, %v1425
      %v1469 = vadd.f32 %v1371, %v1430
      %v1470 = vadd.f32 %v1372, %v1435
      %v1471 = vadd.f32 %v1373, %v1440
      %v1472 = vadd.f32 %v1374, %v1445
      %v1473 = vadd.f32 %v1375, %v1450
      %v1474 = vadd.f32 %v1376, %v1455
      %v1475 = vadd.f32 %v1377, %v1460
      %v1476 = vld [vmem:[%s9] sm:$0x1]
      %v1477 = vld [vmem:[%s10] sm:$0x1]
      %v1478 = vsel %vm732, %v1462, 0.0
      %1479 = vadd.xlane.f32.xlu0 %v1478
      %v1480 = vpop.xlane.xlu0 %1479
      %v1481 = vsel %vm732, %v1463, 0.0
      %1482 = vadd.xlane.f32.xlu0 %v1481
      %v1483 = vpop.xlane.xlu0 %1482
      %v1484 = vsel %vm732, %v1464, 0.0
      %1485 = vadd.xlane.f32.xlu0 %v1484
      %v1486 = vpop.xlane.xlu0 %1485
      %v1487 = vsel %vm732, %v1465, 0.0
      %1488 = vadd.xlane.f32.xlu0 %v1487
      %v1489 = vpop.xlane.xlu0 %1488
      %v1490 = vsel %vm732, %v1466, 0.0
      %1491 = vadd.xlane.f32.xlu0 %v1490
      %v1492 = vpop.xlane.xlu0 %1491
      %v1493 = vsel %vm732, %v1467, 0.0
      %1494 = vadd.xlane.f32.xlu0 %v1493
      %v1495 = vpop.xlane.xlu0 %1494
      %v1496 = vsel %vm732, %v1468, 0.0
      %1497 = vadd.xlane.f32.xlu0 %v1496
      %v1498 = vpop.xlane.xlu0 %1497
      %v1499 = vsel %vm732, %v1469, 0.0
      %1500 = vadd.xlane.f32.xlu0 %v1499
      %v1501 = vpop.xlane.xlu0 %1500
      %v1502 = vsel %vm732, %v1470, 0.0
      %1503 = vadd.xlane.f32.xlu0 %v1502
      %v1504 = vpop.xlane.xlu0 %1503
      %v1505 = vsel %vm732, %v1471, 0.0
      %1506 = vadd.xlane.f32.xlu0 %v1505
      %v1507 = vpop.xlane.xlu0 %1506
      %v1508 = vsel %vm732, %v1472, 0.0
      %1509 = vadd.xlane.f32.xlu0 %v1508
      %v1510 = vpop.xlane.xlu0 %1509
      %v1511 = vsel %vm732, %v1473, 0.0
      %1512 = vadd.xlane.f32.xlu0 %v1511
      %v1513 = vpop.xlane.xlu0 %1512
      %v1514 = vsel %vm732, %v1474, 0.0
      %1515 = vadd.xlane.f32.xlu0 %v1514
      %v1516 = vpop.xlane.xlu0 %1515
      %v1517 = vsel %vm772, %v1475, 0.0
      %1518 = vadd.xlane.f32.xlu0 %v1517
      %v1519 = vpop.xlane.xlu0 %1518
      %v1520 = vmul.f32 %v1480, %v782
      %v1521 = vmul.f32 %v1483, %v782
      %v1522 = vmul.f32 %v1486, %v782
      %v1523 = vmul.f32 %v1489, %v782
      %v1524 = vmul.f32 %v1492, %v782
      %v1525 = vmul.f32 %v1495, %v782
      %v1526 = vmul.f32 %v1498, %v782
      %v1527 = vmul.f32 %v1501, %v782
      %v1528 = vmul.f32 %v1504, %v782
      %v1529 = vmul.f32 %v1507, %v782
      %v1530 = vmul.f32 %v1510, %v782
      %v1531 = vmul.f32 %v1513, %v782
      %v1532 = vmul.f32 %v1516, %v782
      %v1533 = vmul.f32 %v1519, %v782
      %v1534 = vsub.f32 %v1462, %v1520
      %v1535 = vsub.f32 %v1463, %v1521
      %v1536 = vsub.f32 %v1464, %v1522
      %v1537 = vsub.f32 %v1465, %v1523
      %v1538 = vsub.f32 %v1466, %v1524
      %v1539 = vsub.f32 %v1467, %v1525
      %v1540 = vsub.f32 %v1468, %v1526
      %v1541 = vsub.f32 %v1469, %v1527
      %v1542 = vsub.f32 %v1470, %v1528
      %v1543 = vsub.f32 %v1471, %v1529
      %v1544 = vsub.f32 %v1472, %v1530
      %v1545 = vsub.f32 %v1473, %v1531
      %v1546 = vsub.f32 %v1474, %v1532
      %v1547 = vsub.f32 %v1475, %v1533
      %v1548 = vmul.f32 %v1534, %v1534
      %v1549 = vmul.f32 %v1535, %v1535
      %v1550 = vmul.f32 %v1536, %v1536
      %v1551 = vmul.f32 %v1537, %v1537
      %v1552 = vmul.f32 %v1538, %v1538
      %v1553 = vmul.f32 %v1539, %v1539
      %v1554 = vmul.f32 %v1540, %v1540
      %v1555 = vmul.f32 %v1541, %v1541
      %v1556 = vmul.f32 %v1542, %v1542
      %v1557 = vmul.f32 %v1543, %v1543
      %v1558 = vmul.f32 %v1544, %v1544
      %v1559 = vmul.f32 %v1545, %v1545
      %v1560 = vmul.f32 %v1546, %v1546
      %v1561 = vmul.f32 %v1547, %v1547
      %v1562 = vsel %vm732, %v1548, 0.0
      %1563 = vadd.xlane.f32.xlu0 %v1562
      %v1564 = vpop.xlane.xlu0 %1563
      %v1565 = vsel %vm732, %v1549, 0.0
      %1566 = vadd.xlane.f32.xlu0 %v1565
      %v1567 = vpop.xlane.xlu0 %1566
      %v1568 = vsel %vm732, %v1550, 0.0
      %1569 = vadd.xlane.f32.xlu0 %v1568
      %v1570 = vpop.xlane.xlu0 %1569
      %v1571 = vsel %vm732, %v1551, 0.0
      %1572 = vadd.xlane.f32.xlu0 %v1571
      %v1573 = vpop.xlane.xlu0 %1572
      %v1574 = vsel %vm732, %v1552, 0.0
      %1575 = vadd.xlane.f32.xlu0 %v1574
      %v1576 = vpop.xlane.xlu0 %1575
      %v1577 = vsel %vm732, %v1553, 0.0
      %1578 = vadd.xlane.f32.xlu0 %v1577
      %v1579 = vpop.xlane.xlu0 %1578
      %v1580 = vsel %vm732, %v1554, 0.0
      %1581 = vadd.xlane.f32.xlu0 %v1580
      %v1582 = vpop.xlane.xlu0 %1581
      %v1583 = vsel %vm732, %v1555, 0.0
      %1584 = vadd.xlane.f32.xlu0 %v1583
      %v1585 = vpop.xlane.xlu0 %1584
      %v1586 = vsel %vm732, %v1556, 0.0
      %1587 = vadd.xlane.f32.xlu0 %v1586
      %v1588 = vpop.xlane.xlu0 %1587
      %v1589 = vsel %vm732, %v1557, 0.0
      %1590 = vadd.xlane.f32.xlu0 %v1589
      %v1591 = vpop.xlane.xlu0 %1590
      %v1592 = vsel %vm732, %v1558, 0.0
      %1593 = vadd.xlane.f32.xlu0 %v1592
      %v1594 = vpop.xlane.xlu0 %1593
      %v1595 = vsel %vm732, %v1559, 0.0
      %1596 = vadd.xlane.f32.xlu0 %v1595
      %v1597 = vpop.xlane.xlu0 %1596
      %v1598 = vsel %vm732, %v1560, 0.0
      %1599 = vadd.xlane.f32.xlu0 %v1598
      %v1600 = vpop.xlane.xlu0 %1599
      %v1601 = vsel %vm772, %v1561, 0.0
      %1602 = vadd.xlane.f32.xlu0 %v1601
      %v1603 = vpop.xlane.xlu0 %1602
      %v1604 = vmul.f32 %v1564, %v782
      %v1605 = vmul.f32 %v1567, %v782
      %v1606 = vmul.f32 %v1570, %v782
      %v1607 = vmul.f32 %v1573, %v782
      %v1608 = vmul.f32 %v1576, %v782
      %v1609 = vmul.f32 %v1579, %v782
      %v1610 = vmul.f32 %v1582, %v782
      %v1611 = vmul.f32 %v1585, %v782
      %v1612 = vmul.f32 %v1588, %v782
      %v1613 = vmul.f32 %v1591, %v782
      %v1614 = vmul.f32 %v1594, %v782
      %v1615 = vmul.f32 %v1597, %v782
      %v1616 = vmul.f32 %v1600, %v782
      %v1617 = vmul.f32 %v1603, %v782
      %v1618 = vadd.f32 %v1604, 1e-05
      %v1619 = vadd.f32 %v1605, 1e-05
      %v1620 = vadd.f32 %v1606, 1e-05
      %v1621 = vadd.f32 %v1607, 1e-05
      %v1622 = vadd.f32 %v1608, 1e-05
      %v1623 = vadd.f32 %v1609, 1e-05
      %v1624 = vadd.f32 %v1610, 1e-05
      %v1625 = vadd.f32 %v1611, 1e-05
      %v1626 = vadd.f32 %v1612, 1e-05
      %v1627 = vadd.f32 %v1613, 1e-05
      %v1628 = vadd.f32 %v1614, 1e-05
      %v1629 = vadd.f32 %v1615, 1e-05
      %v1630 = vadd.f32 %v1616, 1e-05
      %v1631 = vadd.f32 %v1617, 1e-05
      %v1632 = vrsqrt.pop %v1618
      %v1633 = vmul.f32 %v1632, %v1618
      %v1634 = vmul.f32 %v1633, %v1632
      %v1635 = vmul.f32 0.5, %v1634
      %v1636 = vsub.f32 1.5, %v1635
      %v1637 = vmul.f32 %v1632, %v1636
      %vm1638 = vweird.f32 %v1618
      %vm1639 = vweird.f32 %v1632
      %vm1640 = vmor %vm1638, %vm1639
      %v1641 = vsel %vm1640, %v1632, %v1637
      %v1642 = vrsqrt.pop %v1619
      %v1643 = vmul.f32 %v1642, %v1619
      %v1644 = vmul.f32 %v1643, %v1642
      %v1645 = vmul.f32 0.5, %v1644
      %v1646 = vsub.f32 1.5, %v1645
      %v1647 = vmul.f32 %v1642, %v1646
      %vm1648 = vweird.f32 %v1619
      %vm1649 = vweird.f32 %v1642
      %vm1650 = vmor %vm1648, %vm1649
      %v1651 = vsel %vm1650, %v1642, %v1647
      %v1652 = vrsqrt.pop %v1620
      %v1653 = vmul.f32 %v1652, %v1620
      %v1654 = vmul.f32 %v1653, %v1652
      %v1655 = vmul.f32 0.5, %v1654
      %v1656 = vsub.f32 1.5, %v1655
      %v1657 = vmul.f32 %v1652, %v1656
      %vm1658 = vweird.f32 %v1620
      %vm1659 = vweird.f32 %v1652
      %vm1660 = vmor %vm1658, %vm1659
      %v1661 = vsel %vm1660, %v1652, %v1657
      %v1662 = vrsqrt.pop %v1621
      %v1663 = vmul.f32 %v1662, %v1621
      %v1664 = vmul.f32 %v1663, %v1662
      %v1665 = vmul.f32 0.5, %v1664
      %v1666 = vsub.f32 1.5, %v1665
      %v1667 = vmul.f32 %v1662, %v1666
      %vm1668 = vweird.f32 %v1621
      %vm1669 = vweird.f32 %v1662
      %vm1670 = vmor %vm1668, %vm1669
      %v1671 = vsel %vm1670, %v1662, %v1667
      %v1672 = vrsqrt.pop %v1622
      %v1673 = vmul.f32 %v1672, %v1622
      %v1674 = vmul.f32 %v1673, %v1672
      %v1675 = vmul.f32 0.5, %v1674
      %v1676 = vsub.f32 1.5, %v1675
      %v1677 = vmul.f32 %v1672, %v1676
      %vm1678 = vweird.f32 %v1622
      %vm1679 = vweird.f32 %v1672
      %vm1680 = vmor %vm1678, %vm1679
      %v1681 = vsel %vm1680, %v1672, %v1677
      %v1682 = vrsqrt.pop %v1623
      %v1683 = vmul.f32 %v1682, %v1623
      %v1684 = vmul.f32 %v1683, %v1682
      %v1685 = vmul.f32 0.5, %v1684
      %v1686 = vsub.f32 1.5, %v1685
      %v1687 = vmul.f32 %v1682, %v1686
      %vm1688 = vweird.f32 %v1623
      %vm1689 = vweird.f32 %v1682
      %vm1690 = vmor %vm1688, %vm1689
      %v1691 = vsel %vm1690, %v1682, %v1687
      %v1692 = vrsqrt.pop %v1624
      %v1693 = vmul.f32 %v1692, %v1624
      %v1694 = vmul.f32 %v1693, %v1692
      %v1695 = vmul.f32 0.5, %v1694
      %v1696 = vsub.f32 1.5, %v1695
      %v1697 = vmul.f32 %v1692, %v1696
      %vm1698 = vweird.f32 %v1624
      %vm1699 = vweird.f32 %v1692
      %vm1700 = vmor %vm1698, %vm1699
      %v1701 = vsel %vm1700, %v1692, %v1697
      %v1702 = vrsqrt.pop %v1625
      %v1703 = vmul.f32 %v1702, %v1625
      %v1704 = vmul.f32 %v1703, %v1702
      %v1705 = vmul.f32 0.5, %v1704
      %v1706 = vsub.f32 1.5, %v1705
      %v1707 = vmul.f32 %v1702, %v1706
      %vm1708 = vweird.f32 %v1625
      %vm1709 = vweird.f32 %v1702
      %vm1710 = vmor %vm1708, %vm1709
      %v1711 = vsel %vm1710, %v1702, %v1707
      %v1712 = vrsqrt.pop %v1626
      %v1713 = vmul.f32 %v1712, %v1626
      %v1714 = vmul.f32 %v1713, %v1712
      %v1715 = vmul.f32 0.5, %v1714
      %v1716 = vsub.f32 1.5, %v1715
      %v1717 = vmul.f32 %v1712, %v1716
      %vm1718 = vweird.f32 %v1626
      %vm1719 = vweird.f32 %v1712
      %vm1720 = vmor %vm1718, %vm1719
      %v1721 = vsel %vm1720, %v1712, %v1717
      %v1722 = vrsqrt.pop %v1627
      %v1723 = vmul.f32 %v1722, %v1627
      %v1724 = vmul.f32 %v1723, %v1722
      %v1725 = vmul.f32 0.5, %v1724
      %v1726 = vsub.f32 1.5, %v1725
      %v1727 = vmul.f32 %v1722, %v1726
      %vm1728 = vweird.f32 %v1627
      %vm1729 = vweird.f32 %v1722
      %vm1730 = vmor %vm1728, %vm1729
      %v1731 = vsel %vm1730, %v1722, %v1727
      %v1732 = vrsqrt.pop %v1628
      %v1733 = vmul.f32 %v1732, %v1628
      %v1734 = vmul.f32 %v1733, %v1732
      %v1735 = vmul.f32 0.5, %v1734
      %v1736 = vsub.f32 1.5, %v1735
      %v1737 = vmul.f32 %v1732, %v1736
      %vm1738 = vweird.f32 %v1628
      %vm1739 = vweird.f32 %v1732
      %vm1740 = vmor %vm1738, %vm1739
      %v1741 = vsel %vm1740, %v1732, %v1737
      %v1742 = vrsqrt.pop %v1629
      %v1743 = vmul.f32 %v1742, %v1629
      %v1744 = vmul.f32 %v1743, %v1742
      %v1745 = vmul.f32 0.5, %v1744
      %v1746 = vsub.f32 1.5, %v1745
      %v1747 = vmul.f32 %v1742, %v1746
      %vm1748 = vweird.f32 %v1629
      %vm1749 = vweird.f32 %v1742
      %vm1750 = vmor %vm1748, %vm1749
      %v1751 = vsel %vm1750, %v1742, %v1747
      %v1752 = vrsqrt.pop %v1630
      %v1753 = vmul.f32 %v1752, %v1630
      %v1754 = vmul.f32 %v1753, %v1752
      %v1755 = vmul.f32 0.5, %v1754
      %v1756 = vsub.f32 1.5, %v1755
      %v1757 = vmul.f32 %v1752, %v1756
      %vm1758 = vweird.f32 %v1630
      %vm1759 = vweird.f32 %v1752
      %vm1760 = vmor %vm1758, %vm1759
      %v1761 = vsel %vm1760, %v1752, %v1757
      %v1762 = vrsqrt.pop %v1631
      %v1763 = vmul.f32 %v1762, %v1631
      %v1764 = vmul.f32 %v1763, %v1762
      %v1765 = vmul.f32 0.5, %v1764
      %v1766 = vsub.f32 1.5, %v1765
      %v1767 = vmul.f32 %v1762, %v1766
      %vm1768 = vweird.f32 %v1631
      %vm1769 = vweird.f32 %v1762
      %vm1770 = vmor %vm1768, %vm1769
      %v1771 = vsel %vm1770, %v1762, %v1767
      %v1772 = vmul.f32 %v1534, %v1641
      %v1773 = vmul.f32 %v1535, %v1651
      %v1774 = vmul.f32 %v1536, %v1661
      %v1775 = vmul.f32 %v1537, %v1671
      %v1776 = vmul.f32 %v1538, %v1681
      %v1777 = vmul.f32 %v1539, %v1691
      %v1778 = vmul.f32 %v1540, %v1701
      %v1779 = vmul.f32 %v1541, %v1711
      %v1780 = vmul.f32 %v1542, %v1721
      %v1781 = vmul.f32 %v1543, %v1731
      %v1782 = vmul.f32 %v1544, %v1741
      %v1783 = vmul.f32 %v1545, %v1751
      %v1784 = vmul.f32 %v1546, %v1761
      %v1785 = vmul.f32 %v1547, %v1771
      %v1787 = vperm.slane %v1476, 0
      %v1789 = vmul.f32 %v1772, %v1787
      %v1790 = vmul.f32 %v1773, %v1787
      %v1791 = vmul.f32 %v1774, %v1787
      %v1792 = vmul.f32 %v1775, %v1787
      %v1793 = vmul.f32 %v1776, %v1787
      %v1794 = vmul.f32 %v1777, %v1787
      %v1795 = vmul.f32 %v1778, %v1787
      %v1796 = vmul.f32 %v1779, %v1787
      %v1797 = vmul.f32 %v1780, %v1787
      %v1798 = vmul.f32 %v1781, %v1787
      %v1799 = vmul.f32 %v1782, %v1787
      %v1800 = vmul.f32 %v1783, %v1787
      %v1801 = vmul.f32 %v1784, %v1787
      %v1802 = vmul.f32 %v1785, %v1787
      %v1804 = vperm.slane %v1477, 0
      %v1806 = vadd.f32 %v1789, %v1804
      %v1807 = vadd.f32 %v1790, %v1804
      %v1808 = vadd.f32 %v1791, %v1804
      %v1809 = vadd.f32 %v1792, %v1804
      %v1810 = vadd.f32 %v1793, %v1804
      %v1811 = vadd.f32 %v1794, %v1804
      %v1812 = vadd.f32 %v1795, %v1804
      %v1813 = vadd.f32 %v1796, %v1804
      %v1814 = vadd.f32 %v1797, %v1804
      %v1815 = vadd.f32 %v1798, %v1804
      %v1816 = vadd.f32 %v1799, %v1804
      %v1817 = vadd.f32 %v1800, %v1804
      %v1818 = vadd.f32 %v1801, %v1804
      %v1819 = vadd.f32 %v1802, %v1804
      %v1820 = vld [vmem:[%s11] sm:$0xff]
      %v1821 = vld [vmem:[%s11 + $0x8] sm:$0xff]
      %v1822 = vld [vmem:[%s11 + $0x10] sm:$0xff]
      %v1823 = vld [vmem:[%s11 + $0x18] sm:$0xff]
      %v1824 = vld [vmem:[%s12] sm:$0x1]
      %v1826 = vperm.slane %v1824, 0
      %v1829 = vsel %vm732, %v1806, 0
      %v1832 = vsel %vm732, %v1807, 0
      %v1835 = vsel %vm732, %v1808, 0
      %v1838 = vsel %vm732, %v1809, 0
      %v1841 = vsel %vm732, %v1810, 0
      %v1844 = vsel %vm732, %v1811, 0
      %v1847 = vsel %vm732, %v1812, 0
      %v1850 = vsel %vm732, %v1813, 0
      %v1853 = vsel %vm732, %v1814, 0
      %v1856 = vsel %vm732, %v1815, 0
      %v1859 = vsel %vm732, %v1816, 0
      %v1862 = vsel %vm732, %v1817, 0
      %v1865 = vsel %vm732, %v1818, 0
      %v1868 = vsel %vm732, %v1819, 0
      %1870 = vmatpush.msra.mxu0 0.0
      %1871 = vmatpush.msra.mxu0 0.0
      %1872 = vmatpush.msra.mxu0 0.0
      %1873 = vmatpush.msra.mxu0 0.0
      %1874 = vmatpush.msra.mxu0 0.0
      %1875 = vmatpush.msra.mxu0 0.0
      %1876 = vmatpush.msra.mxu0 0.0
      %1877 = vmatpush.msra.mxu0 0.0
      %1878 = vmatpush.msra.mxu0 0.0
      %1879 = vmatpush.msra.mxu0 0.0
      %1880 = vmatpush.msra.mxu0 0.0
      %1881 = vmatpush.msra.mxu0 0.0
      %1882 = vmatpush.msra.mxu0 %v1823
      %1883 = vmatpush.msra.mxu0 %v1822
      %1884 = vmatpush.msra.mxu0 %v1821
      %1885 = vmatpush.msra.mxu0 %v1820
      %1886 = vmatmul.f32.gmra.mxu0 %v1829
      %v1887 = vpop.f32.mrf.mxu0
      %v1888 = vadd.f32 %v1826, %v1887
      %1889 = vmatmul.f32.gmra.mxu0 %v1832
      %v1890 = vpop.f32.mrf.mxu0
      %v1891 = vadd.f32 %v1826, %v1890
      %1892 = vmatmul.f32.gmra.mxu0 %v1835
      %v1893 = vpop.f32.mrf.mxu0
      %v1894 = vadd.f32 %v1826, %v1893
      %1895 = vmatmul.f32.gmra.mxu0 %v1838
      %v1896 = vpop.f32.mrf.mxu0
      %v1897 = vadd.f32 %v1826, %v1896
      %1898 = vmatmul.f32.gmra.mxu0 %v1841
      %v1899 = vpop.f32.mrf.mxu0
      %v1900 = vadd.f32 %v1826, %v1899
      %1901 = vmatmul.f32.gmra.mxu0 %v1844
      %v1902 = vpop.f32.mrf.mxu0
      %v1903 = vadd.f32 %v1826, %v1902
      %1904 = vmatmul.f32.gmra.mxu0 %v1847
      %v1905 = vpop.f32.mrf.mxu0
      %v1906 = vadd.f32 %v1826, %v1905
      %1907 = vmatmul.f32.gmra.mxu0 %v1850
      %v1908 = vpop.f32.mrf.mxu0
      %v1909 = vadd.f32 %v1826, %v1908
      %1910 = vmatmul.f32.gmra.mxu0 %v1853
      %v1911 = vpop.f32.mrf.mxu0
      %v1912 = vadd.f32 %v1826, %v1911
      %1913 = vmatmul.f32.gmra.mxu0 %v1856
      %v1914 = vpop.f32.mrf.mxu0
      %v1915 = vadd.f32 %v1826, %v1914
      %1916 = vmatmul.f32.gmra.mxu0 %v1859
      %v1917 = vpop.f32.mrf.mxu0
      %v1918 = vadd.f32 %v1826, %v1917
      %1919 = vmatmul.f32.gmra.mxu0 %v1862
      %v1920 = vpop.f32.mrf.mxu0
      %v1921 = vadd.f32 %v1826, %v1920
      %1922 = vmatmul.f32.gmra.mxu0 %v1865
      %v1923 = vpop.f32.mrf.mxu0
      %v1924 = vadd.f32 %v1826, %v1923
      %1925 = vmatmul.f32.gmra.mxu0 %v1868
      %v1926 = vpop.f32.mrf.mxu0
      %v1927 = vadd.f32 %v1826, %v1926
      %1928 = vdwg.mxu0
      %v1929 = vmul.f32 %v1888, 0.5
      %v1930 = vmul.f32 %v1891, 0.5
      %v1931 = vmul.f32 %v1894, 0.5
      %v1932 = vmul.f32 %v1897, 0.5
      %v1933 = vmul.f32 %v1900, 0.5
      %v1934 = vmul.f32 %v1903, 0.5
      %v1935 = vmul.f32 %v1906, 0.5
      %v1936 = vmul.f32 %v1909, 0.5
      %v1937 = vmul.f32 %v1912, 0.5
      %v1938 = vmul.f32 %v1915, 0.5
      %v1939 = vmul.f32 %v1918, 0.5
      %v1940 = vmul.f32 %v1921, 0.5
      %v1941 = vmul.f32 %v1924, 0.5
      %v1942 = vmul.f32 %v1927, 0.5
      %v1943 = vmul.f32 %v1888, 0.044715
      %v1944 = vmul.f32 %v1891, 0.044715
      %v1945 = vmul.f32 %v1894, 0.044715
      %v1946 = vmul.f32 %v1897, 0.044715
      %v1947 = vmul.f32 %v1900, 0.044715
      %v1948 = vmul.f32 %v1903, 0.044715
      %v1949 = vmul.f32 %v1906, 0.044715
      %v1950 = vmul.f32 %v1909, 0.044715
      %v1951 = vmul.f32 %v1912, 0.044715
      %v1952 = vmul.f32 %v1915, 0.044715
      %v1953 = vmul.f32 %v1918, 0.044715
      %v1954 = vmul.f32 %v1921, 0.044715
      %v1955 = vmul.f32 %v1924, 0.044715
      %v1956 = vmul.f32 %v1927, 0.044715
      %v1957 = vmul.f32 %v1943, %v1888
      %v1958 = vmul.f32 %v1944, %v1891
      %v1959 = vmul.f32 %v1945, %v1894
      %v1960 = vmul.f32 %v1946, %v1897
      %v1961 = vmul.f32 %v1947, %v1900
      %v1962 = vmul.f32 %v1948, %v1903
      %v1963 = vmul.f32 %v1949, %v1906
      %v1964 = vmul.f32 %v1950, %v1909
      %v1965 = vmul.f32 %v1951, %v1912
      %v1966 = vmul.f32 %v1952, %v1915
      %v1967 = vmul.f32 %v1953, %v1918
      %v1968 = vmul.f32 %v1954, %v1921
      %v1969 = vmul.f32 %v1955, %v1924
      %v1970 = vmul.f32 %v1956, %v1927
      %v1971 = vmul.f32 %v1957, %v1888
      %v1972 = vmul.f32 %v1958, %v1891
      %v1973 = vmul.f32 %v1959, %v1894
      %v1974 = vmul.f32 %v1960, %v1897
      %v1975 = vmul.f32 %v1961, %v1900
      %v1976 = vmul.f32 %v1962, %v1903
      %v1977 = vmul.f32 %v1963, %v1906
      %v1978 = vmul.f32 %v1964, %v1909
      %v1979 = vmul.f32 %v1965, %v1912
      %v1980 = vmul.f32 %v1966, %v1915
      %v1981 = vmul.f32 %v1967, %v1918
      %v1982 = vmul.f32 %v1968, %v1921
      %v1983 = vmul.f32 %v1969, %v1924
      %v1984 = vmul.f32 %v1970, %v1927
      %v1985 = vadd.f32 %v1888, %v1971
      %v1986 = vadd.f32 %v1891, %v1972
      %v1987 = vadd.f32 %v1894, %v1973
      %v1988 = vadd.f32 %v1897, %v1974
      %v1989 = vadd.f32 %v1900, %v1975
      %v1990 = vadd.f32 %v1903, %v1976
      %v1991 = vadd.f32 %v1906, %v1977
      %v1992 = vadd.f32 %v1909, %v1978
      %v1993 = vadd.f32 %v1912, %v1979
      %v1994 = vadd.f32 %v1915, %v1980
      %v1995 = vadd.f32 %v1918, %v1981
      %v1996 = vadd.f32 %v1921, %v1982
      %v1997 = vadd.f32 %v1924, %v1983
      %v1998 = vadd.f32 %v1927, %v1984
      %v1999 = vmul.f32 %v1985, 0.7978846
      %v2000 = vmul.f32 %v1986, 0.7978846
      %v2001 = vmul.f32 %v1987, 0.7978846
      %v2002 = vmul.f32 %v1988, 0.7978846
      %v2003 = vmul.f32 %v1989, 0.7978846
      %v2004 = vmul.f32 %v1990, 0.7978846
      %v2005 = vmul.f32 %v1991, 0.7978846
      %v2006 = vmul.f32 %v1992, 0.7978846
      %v2007 = vmul.f32 %v1993, 0.7978846
      %v2008 = vmul.f32 %v1994, 0.7978846
      %v2009 = vmul.f32 %v1995, 0.7978846
      %v2010 = vmul.f32 %v1996, 0.7978846
      %v2011 = vmul.f32 %v1997, 0.7978846
      %v2012 = vmul.f32 %v1998, 0.7978846
      %v2013 = vtanh.pop %v1999
      %v2014 = vtanh.pop %v2000
      %v2015 = vtanh.pop %v2001
      %v2016 = vtanh.pop %v2002
      %v2017 = vtanh.pop %v2003
      %v2018 = vtanh.pop %v2004
      %v2019 = vtanh.pop %v2005
      %v2020 = vtanh.pop %v2006
      %v2021 = vtanh.pop %v2007
      %v2022 = vtanh.pop %v2008
      %v2023 = vtanh.pop %v2009
      %v2024 = vtanh.pop %v2010
      %v2025 = vtanh.pop %v2011
      %v2026 = vtanh.pop %v2012
      %v2027 = vadd.f32 %v2013, 1.0
      %v2028 = vadd.f32 %v2014, 1.0
      %v2029 = vadd.f32 %v2015, 1.0
      %v2030 = vadd.f32 %v2016, 1.0
      %v2031 = vadd.f32 %v2017, 1.0
      %v2032 = vadd.f32 %v2018, 1.0
      %v2033 = vadd.f32 %v2019, 1.0
      %v2034 = vadd.f32 %v2020, 1.0
      %v2035 = vadd.f32 %v2021, 1.0
      %v2036 = vadd.f32 %v2022, 1.0
      %v2037 = vadd.f32 %v2023, 1.0
      %v2038 = vadd.f32 %v2024, 1.0
      %v2039 = vadd.f32 %v2025, 1.0
      %v2040 = vadd.f32 %v2026, 1.0
      %v2041 = vmul.f32 %v1929, %v2027
      %v2042 = vmul.f32 %v1930, %v2028
      %v2043 = vmul.f32 %v1931, %v2029
      %v2044 = vmul.f32 %v1932, %v2030
      %v2045 = vmul.f32 %v1933, %v2031
      %v2046 = vmul.f32 %v1934, %v2032
      %v2047 = vmul.f32 %v1935, %v2033
      %v2048 = vmul.f32 %v1936, %v2034
      %v2049 = vmul.f32 %v1937, %v2035
      %v2050 = vmul.f32 %v1938, %v2036
      %v2051 = vmul.f32 %v1939, %v2037
      %v2052 = vmul.f32 %v1940, %v2038
      %v2053 = vmul.f32 %v1941, %v2039
      %v2054 = vmul.f32 %v1942, %v2040
      %v2055 = vld [vmem:[%s13] sm:$0xff]
      %v2056 = vld [vmem:[%s13 + $0x8] sm:$0xff]
      %v2057 = vld [vmem:[%s13 + $0x10] sm:$0xff]
      %v2058 = vld [vmem:[%s13 + $0x18] sm:$0xff]
      %v2059 = vld [vmem:[%s14] sm:$0x1]
      %v2061 = vperm.slane %v2059, 0
      %v2064 = vsel %vm732, %v2041, 0
      %v2067 = vsel %vm732, %v2042, 0
      %v2070 = vsel %vm732, %v2043, 0
      %v2073 = vsel %vm732, %v2044, 0
      %v2076 = vsel %vm732, %v2045, 0
      %v2079 = vsel %vm732, %v2046, 0
      %v2082 = vsel %vm732, %v2047, 0
      %v2085 = vsel %vm732, %v2048, 0
      %v2088 = vsel %vm732, %v2049, 0
      %v2091 = vsel %vm732, %v2050, 0
      %v2094 = vsel %vm732, %v2051, 0
      %v2097 = vsel %vm732, %v2052, 0
      %v2100 = vsel %vm732, %v2053, 0
      %v2103 = vsel %vm732, %v2054, 0
      %2105 = vmatpush.msra.mxu0 0.0
      %2106 = vmatpush.msra.mxu0 0.0
      %2107 = vmatpush.msra.mxu0 0.0
      %2108 = vmatpush.msra.mxu0 0.0
      %2109 = vmatpush.msra.mxu0 0.0
      %2110 = vmatpush.msra.mxu0 0.0
      %2111 = vmatpush.msra.mxu0 0.0
      %2112 = vmatpush.msra.mxu0 0.0
      %2113 = vmatpush.msra.mxu0 0.0
      %2114 = vmatpush.msra.mxu0 0.0
      %2115 = vmatpush.msra.mxu0 0.0
      %2116 = vmatpush.msra.mxu0 0.0
      %2117 = vmatpush.msra.mxu0 %v2058
      %2118 = vmatpush.msra.mxu0 %v2057
      %2119 = vmatpush.msra.mxu0 %v2056
      %2120 = vmatpush.msra.mxu0 %v2055
      %2121 = vmatmul.f32.gmra.mxu0 %v2064
      %v2122 = vpop.f32.mrf.mxu0
      %v2123 = vadd.f32 %v2061, %v2122
      %2124 = vmatmul.f32.gmra.mxu0 %v2067
      %v2125 = vpop.f32.mrf.mxu0
      %v2126 = vadd.f32 %v2061, %v2125
      %2127 = vmatmul.f32.gmra.mxu0 %v2070
      %v2128 = vpop.f32.mrf.mxu0
      %v2129 = vadd.f32 %v2061, %v2128
      %2130 = vmatmul.f32.gmra.mxu0 %v2073
      %v2131 = vpop.f32.mrf.mxu0
      %v2132 = vadd.f32 %v2061, %v2131
      %2133 = vmatmul.f32.gmra.mxu0 %v2076
      %v2134 = vpop.f32.mrf.mxu0
      %v2135 = vadd.f32 %v2061, %v2134
      %2136 = vmatmul.f32.gmra.mxu0 %v2079
      %v2137 = vpop.f32.mrf.mxu0
      %v2138 = vadd.f32 %v2061, %v2137
      %2139 = vmatmul.f32.gmra.mxu0 %v2082
      %v2140 = vpop.f32.mrf.mxu0
      %v2141 = vadd.f32 %v2061, %v2140
      %2142 = vmatmul.f32.gmra.mxu0 %v2085
      %v2143 = vpop.f32.mrf.mxu0
      %v2144 = vadd.f32 %v2061, %v2143
      %2145 = vmatmul.f32.gmra.mxu0 %v2088
      %v2146 = vpop.f32.mrf.mxu0
      %v2147 = vadd.f32 %v2061, %v2146
      %2148 = vmatmul.f32.gmra.mxu0 %v2091
      %v2149 = vpop.f32.mrf.mxu0
      %v2150 = vadd.f32 %v2061, %v2149
      %2151 = vmatmul.f32.gmra.mxu0 %v2094
      %v2152 = vpop.f32.mrf.mxu0
      %v2153 = vadd.f32 %v2061, %v2152
      %2154 = vmatmul.f32.gmra.mxu0 %v2097
      %v2155 = vpop.f32.mrf.mxu0
      %v2156 = vadd.f32 %v2061, %v2155
      %2157 = vmatmul.f32.gmra.mxu0 %v2100
      %v2158 = vpop.f32.mrf.mxu0
      %v2159 = vadd.f32 %v2061, %v2158
      %2160 = vmatmul.f32.gmra.mxu0 %v2103
      %v2161 = vpop.f32.mrf.mxu0
      %v2162 = vadd.f32 %v2061, %v2161
      %2163 = vdwg.mxu0
      %v2164 = vadd.f32 %v1462, %v2123
      %v2165 = vadd.f32 %v1463, %v2126
      %v2166 = vadd.f32 %v1464, %v2129
      %v2167 = vadd.f32 %v1465, %v2132
      %v2168 = vadd.f32 %v1466, %v2135
      %v2169 = vadd.f32 %v1467, %v2138
      %v2170 = vadd.f32 %v1468, %v2141
      %v2171 = vadd.f32 %v1469, %v2144
      %v2172 = vadd.f32 %v1470, %v2147
      %v2173 = vadd.f32 %v1471, %v2150
      %v2174 = vadd.f32 %v1472, %v2153
      %v2175 = vadd.f32 %v1473, %v2156
      %v2176 = vadd.f32 %v1474, %v2159
      %v2177 = vadd.f32 %v1475, %v2162
      %v2178 = vld [vmem:[%s15] sm:$0x1]
      %v2179 = vld [vmem:[%s16] sm:$0x1]
      %v2180 = vsel %vm732, %v2164, 0.0
      %2181 = vadd.xlane.f32.xlu0 %v2180
      %v2182 = vpop.xlane.xlu0 %2181
      %v2183 = vsel %vm732, %v2165, 0.0
      %2184 = vadd.xlane.f32.xlu0 %v2183
      %v2185 = vpop.xlane.xlu0 %2184
      %v2186 = vsel %vm732, %v2166, 0.0
      %2187 = vadd.xlane.f32.xlu0 %v2186
      %v2188 = vpop.xlane.xlu0 %2187
      %v2189 = vsel %vm732, %v2167, 0.0
      %2190 = vadd.xlane.f32.xlu0 %v2189
      %v2191 = vpop.xlane.xlu0 %2190
      %v2192 = vsel %vm732, %v2168, 0.0
      %2193 = vadd.xlane.f32.xlu0 %v2192
      %v2194 = vpop.xlane.xlu0 %2193
      %v2195 = vsel %vm732, %v2169, 0.0
      %2196 = vadd.xlane.f32.xlu0 %v2195
      %v2197 = vpop.xlane.xlu0 %2196
      %v2198 = vsel %vm732, %v2170, 0.0
      %2199 = vadd.xlane.f32.xlu0 %v2198
      %v2200 = vpop.xlane.xlu0 %2199
      %v2201 = vsel %vm732, %v2171, 0.0
      %2202 = vadd.xlane.f32.xlu0 %v2201
      %v2203 = vpop.xlane.xlu0 %2202
      %v2204 = vsel %vm732, %v2172, 0.0
      %2205 = vadd.xlane.f32.xlu0 %v2204
      %v2206 = vpop.xlane.xlu0 %2205
      %v2207 = vsel %vm732, %v2173, 0.0
      %2208 = vadd.xlane.f32.xlu0 %v2207
      %v2209 = vpop.xlane.xlu0 %2208
      %v2210 = vsel %vm732, %v2174, 0.0
      %2211 = vadd.xlane.f32.xlu0 %v2210
      %v2212 = vpop.xlane.xlu0 %2211
      %v2213 = vsel %vm732, %v2175, 0.0
      %2214 = vadd.xlane.f32.xlu0 %v2213
      %v2215 = vpop.xlane.xlu0 %2214
      %v2216 = vsel %vm732, %v2176, 0.0
      %2217 = vadd.xlane.f32.xlu0 %v2216
      %v2218 = vpop.xlane.xlu0 %2217
      %v2219 = vsel %vm772, %v2177, 0.0
      %2220 = vadd.xlane.f32.xlu0 %v2219
      %v2221 = vpop.xlane.xlu0 %2220
      %v2222 = vmul.f32 %v2182, %v782
      %v2223 = vmul.f32 %v2185, %v782
      %v2224 = vmul.f32 %v2188, %v782
      %v2225 = vmul.f32 %v2191, %v782
      %v2226 = vmul.f32 %v2194, %v782
      %v2227 = vmul.f32 %v2197, %v782
      %v2228 = vmul.f32 %v2200, %v782
      %v2229 = vmul.f32 %v2203, %v782
      %v2230 = vmul.f32 %v2206, %v782
      %v2231 = vmul.f32 %v2209, %v782
      %v2232 = vmul.f32 %v2212, %v782
      %v2233 = vmul.f32 %v2215, %v782
      %v2234 = vmul.f32 %v2218, %v782
      %v2235 = vmul.f32 %v2221, %v782
      %v2236 = vsub.f32 %v2164, %v2222
      %v2237 = vsub.f32 %v2165, %v2223
      %v2238 = vsub.f32 %v2166, %v2224
      %v2239 = vsub.f32 %v2167, %v2225
      %v2240 = vsub.f32 %v2168, %v2226
      %v2241 = vsub.f32 %v2169, %v2227
      %v2242 = vsub.f32 %v2170, %v2228
      %v2243 = vsub.f32 %v2171, %v2229
      %v2244 = vsub.f32 %v2172, %v2230
      %v2245 = vsub.f32 %v2173, %v2231
      %v2246 = vsub.f32 %v2174, %v2232
      %v2247 = vsub.f32 %v2175, %v2233
      %v2248 = vsub.f32 %v2176, %v2234
      %v2249 = vsub.f32 %v2177, %v2235
      %v2250 = vmul.f32 %v2236, %v2236
      %v2251 = vmul.f32 %v2237, %v2237
      %v2252 = vmul.f32 %v2238, %v2238
      %v2253 = vmul.f32 %v2239, %v2239
      %v2254 = vmul.f32 %v2240, %v2240
      %v2255 = vmul.f32 %v2241, %v2241
      %v2256 = vmul.f32 %v2242, %v2242
      %v2257 = vmul.f32 %v2243, %v2243
      %v2258 = vmul.f32 %v2244, %v2244
      %v2259 = vmul.f32 %v2245, %v2245
      %v2260 = vmul.f32 %v2246, %v2246
      %v2261 = vmul.f32 %v2247, %v2247
      %v2262 = vmul.f32 %v2248, %v2248
      %v2263 = vmul.f32 %v2249, %v2249
      %v2264 = vsel %vm732, %v2250, 0.0
      %2265 = vadd.xlane.f32.xlu0 %v2264
      %v2266 = vpop.xlane.xlu0 %2265
      %v2267 = vsel %vm732, %v2251, 0.0
      %2268 = vadd.xlane.f32.xlu0 %v2267
      %v2269 = vpop.xlane.xlu0 %2268
      %v2270 = vsel %vm732, %v2252, 0.0
      %2271 = vadd.xlane.f32.xlu0 %v2270
      %v2272 = vpop.xlane.xlu0 %2271
      %v2273 = vsel %vm732, %v2253, 0.0
      %2274 = vadd.xlane.f32.xlu0 %v2273
      %v2275 = vpop.xlane.xlu0 %2274
      %v2276 = vsel %vm732, %v2254, 0.0
      %2277 = vadd.xlane.f32.xlu0 %v2276
      %v2278 = vpop.xlane.xlu0 %2277
      %v2279 = vsel %vm732, %v2255, 0.0
      %2280 = vadd.xlane.f32.xlu0 %v2279
      %v2281 = vpop.xlane.xlu0 %2280
      %v2282 = vsel %vm732, %v2256, 0.0
      %2283 = vadd.xlane.f32.xlu0 %v2282
      %v2284 = vpop.xlane.xlu0 %2283
      %v2285 = vsel %vm732, %v2257, 0.0
      %2286 = vadd.xlane.f32.xlu0 %v2285
      %v2287 = vpop.xlane.xlu0 %2286
      %v2288 = vsel %vm732, %v2258, 0.0
      %2289 = vadd.xlane.f32.xlu0 %v2288
      %v2290 = vpop.xlane.xlu0 %2289
      %v2291 = vsel %vm732, %v2259, 0.0
      %2292 = vadd.xlane.f32.xlu0 %v2291
      %v2293 = vpop.xlane.xlu0 %2292
      %v2294 = vsel %vm732, %v2260, 0.0
      %2295 = vadd.xlane.f32.xlu0 %v2294
      %v2296 = vpop.xlane.xlu0 %2295
      %v2297 = vsel %vm732, %v2261, 0.0
      %2298 = vadd.xlane.f32.xlu0 %v2297
      %v2299 = vpop.xlane.xlu0 %2298
      %v2300 = vsel %vm732, %v2262, 0.0
      %2301 = vadd.xlane.f32.xlu0 %v2300
      %v2302 = vpop.xlane.xlu0 %2301
      %v2303 = vsel %vm772, %v2263, 0.0
      %2304 = vadd.xlane.f32.xlu0 %v2303
      %v2305 = vpop.xlane.xlu0 %2304
      %v2306 = vmul.f32 %v2266, %v782
      %v2307 = vmul.f32 %v2269, %v782
      %v2308 = vmul.f32 %v2272, %v782
      %v2309 = vmul.f32 %v2275, %v782
      %v2310 = vmul.f32 %v2278, %v782
      %v2311 = vmul.f32 %v2281, %v782
      %v2312 = vmul.f32 %v2284, %v782
      %v2313 = vmul.f32 %v2287, %v782
      %v2314 = vmul.f32 %v2290, %v782
      %v2315 = vmul.f32 %v2293, %v782
      %v2316 = vmul.f32 %v2296, %v782
      %v2317 = vmul.f32 %v2299, %v782
      %v2318 = vmul.f32 %v2302, %v782
      %v2319 = vmul.f32 %v2305, %v782
      %v2320 = vadd.f32 %v2306, 1e-05
      %v2321 = vadd.f32 %v2307, 1e-05
      %v2322 = vadd.f32 %v2308, 1e-05
      %v2323 = vadd.f32 %v2309, 1e-05
      %v2324 = vadd.f32 %v2310, 1e-05
      %v2325 = vadd.f32 %v2311, 1e-05
      %v2326 = vadd.f32 %v2312, 1e-05
      %v2327 = vadd.f32 %v2313, 1e-05
      %v2328 = vadd.f32 %v2314, 1e-05
      %v2329 = vadd.f32 %v2315, 1e-05
      %v2330 = vadd.f32 %v2316, 1e-05
      %v2331 = vadd.f32 %v2317, 1e-05
      %v2332 = vadd.f32 %v2318, 1e-05
      %v2333 = vadd.f32 %v2319, 1e-05
      %v2334 = vrsqrt.pop %v2320
      %v2335 = vmul.f32 %v2334, %v2320
      %v2336 = vmul.f32 %v2335, %v2334
      %v2337 = vmul.f32 0.5, %v2336
      %v2338 = vsub.f32 1.5, %v2337
      %v2339 = vmul.f32 %v2334, %v2338
      %vm2340 = vweird.f32 %v2320
      %vm2341 = vweird.f32 %v2334
      %vm2342 = vmor %vm2340, %vm2341
      %v2343 = vsel %vm2342, %v2334, %v2339
      %v2344 = vrsqrt.pop %v2321
      %v2345 = vmul.f32 %v2344, %v2321
      %v2346 = vmul.f32 %v2345, %v2344
      %v2347 = vmul.f32 0.5, %v2346
      %v2348 = vsub.f32 1.5, %v2347
      %v2349 = vmul.f32 %v2344, %v2348
      %vm2350 = vweird.f32 %v2321
      %vm2351 = vweird.f32 %v2344
      %vm2352 = vmor %vm2350, %vm2351
      %v2353 = vsel %vm2352, %v2344, %v2349
      %v2354 = vrsqrt.pop %v2322
      %v2355 = vmul.f32 %v2354, %v2322
      %v2356 = vmul.f32 %v2355, %v2354
      %v2357 = vmul.f32 0.5, %v2356
      %v2358 = vsub.f32 1.5, %v2357
      %v2359 = vmul.f32 %v2354, %v2358
      %vm2360 = vweird.f32 %v2322
      %vm2361 = vweird.f32 %v2354
      %vm2362 = vmor %vm2360, %vm2361
      %v2363 = vsel %vm2362, %v2354, %v2359
      %v2364 = vrsqrt.pop %v2323
      %v2365 = vmul.f32 %v2364, %v2323
      %v2366 = vmul.f32 %v2365, %v2364
      %v2367 = vmul.f32 0.5, %v2366
      %v2368 = vsub.f32 1.5, %v2367
      %v2369 = vmul.f32 %v2364, %v2368
      %vm2370 = vweird.f32 %v2323
      %vm2371 = vweird.f32 %v2364
      %vm2372 = vmor %vm2370, %vm2371
      %v2373 = vsel %vm2372, %v2364, %v2369
      %v2374 = vrsqrt.pop %v2324
      %v2375 = vmul.f32 %v2374, %v2324
      %v2376 = vmul.f32 %v2375, %v2374
      %v2377 = vmul.f32 0.5, %v2376
      %v2378 = vsub.f32 1.5, %v2377
      %v2379 = vmul.f32 %v2374, %v2378
      %vm2380 = vweird.f32 %v2324
      %vm2381 = vweird.f32 %v2374
      %vm2382 = vmor %vm2380, %vm2381
      %v2383 = vsel %vm2382, %v2374, %v2379
      %v2384 = vrsqrt.pop %v2325
      %v2385 = vmul.f32 %v2384, %v2325
      %v2386 = vmul.f32 %v2385, %v2384
      %v2387 = vmul.f32 0.5, %v2386
      %v2388 = vsub.f32 1.5, %v2387
      %v2389 = vmul.f32 %v2384, %v2388
      %vm2390 = vweird.f32 %v2325
      %vm2391 = vweird.f32 %v2384
      %vm2392 = vmor %vm2390, %vm2391
      %v2393 = vsel %vm2392, %v2384, %v2389
      %v2394 = vrsqrt.pop %v2326
      %v2395 = vmul.f32 %v2394, %v2326
      %v2396 = vmul.f32 %v2395, %v2394
      %v2397 = vmul.f32 0.5, %v2396
      %v2398 = vsub.f32 1.5, %v2397
      %v2399 = vmul.f32 %v2394, %v2398
      %vm2400 = vweird.f32 %v2326
      %vm2401 = vweird.f32 %v2394
      %vm2402 = vmor %vm2400, %vm2401
      %v2403 = vsel %vm2402, %v2394, %v2399
      %v2404 = vrsqrt.pop %v2327
      %v2405 = vmul.f32 %v2404, %v2327
      %v2406 = vmul.f32 %v2405, %v2404
      %v2407 = vmul.f32 0.5, %v2406
      %v2408 = vsub.f32 1.5, %v2407
      %v2409 = vmul.f32 %v2404, %v2408
      %vm2410 = vweird.f32 %v2327
      %vm2411 = vweird.f32 %v2404
      %vm2412 = vmor %vm2410, %vm2411
      %v2413 = vsel %vm2412, %v2404, %v2409
      %v2414 = vrsqrt.pop %v2328
      %v2415 = vmul.f32 %v2414, %v2328
      %v2416 = vmul.f32 %v2415, %v2414
      %v2417 = vmul.f32 0.5, %v2416
      %v2418 = vsub.f32 1.5, %v2417
      %v2419 = vmul.f32 %v2414, %v2418
      %vm2420 = vweird.f32 %v2328
      %vm2421 = vweird.f32 %v2414
      %vm2422 = vmor %vm2420, %vm2421
      %v2423 = vsel %vm2422, %v2414, %v2419
      %v2424 = vrsqrt.pop %v2329
      %v2425 = vmul.f32 %v2424, %v2329
      %v2426 = vmul.f32 %v2425, %v2424
      %v2427 = vmul.f32 0.5, %v2426
      %v2428 = vsub.f32 1.5, %v2427
      %v2429 = vmul.f32 %v2424, %v2428
      %vm2430 = vweird.f32 %v2329
      %vm2431 = vweird.f32 %v2424
      %vm2432 = vmor %vm2430, %vm2431
      %v2433 = vsel %vm2432, %v2424, %v2429
      %v2434 = vrsqrt.pop %v2330
      %v2435 = vmul.f32 %v2434, %v2330
      %v2436 = vmul.f32 %v2435, %v2434
      %v2437 = vmul.f32 0.5, %v2436
      %v2438 = vsub.f32 1.5, %v2437
      %v2439 = vmul.f32 %v2434, %v2438
      %vm2440 = vweird.f32 %v2330
      %vm2441 = vweird.f32 %v2434
      %vm2442 = vmor %vm2440, %vm2441
      %v2443 = vsel %vm2442, %v2434, %v2439
      %v2444 = vrsqrt.pop %v2331
      %v2445 = vmul.f32 %v2444, %v2331
      %v2446 = vmul.f32 %v2445, %v2444
      %v2447 = vmul.f32 0.5, %v2446
      %v2448 = vsub.f32 1.5, %v2447
      %v2449 = vmul.f32 %v2444, %v2448
      %vm2450 = vweird.f32 %v2331
      %vm2451 = vweird.f32 %v2444
      %vm2452 = vmor %vm2450, %vm2451
      %v2453 = vsel %vm2452, %v2444, %v2449
      %v2454 = vrsqrt.pop %v2332
      %v2455 = vmul.f32 %v2454, %v2332
      %v2456 = vmul.f32 %v2455, %v2454
      %v2457 = vmul.f32 0.5, %v2456
      %v2458 = vsub.f32 1.5, %v2457
      %v2459 = vmul.f32 %v2454, %v2458
      %vm2460 = vweird.f32 %v2332
      %vm2461 = vweird.f32 %v2454
      %vm2462 = vmor %vm2460, %vm2461
      %v2463 = vsel %vm2462, %v2454, %v2459
      %v2464 = vrsqrt.pop %v2333
      %v2465 = vmul.f32 %v2464, %v2333
      %v2466 = vmul.f32 %v2465, %v2464
      %v2467 = vmul.f32 0.5, %v2466
      %v2468 = vsub.f32 1.5, %v2467
      %v2469 = vmul.f32 %v2464, %v2468
      %vm2470 = vweird.f32 %v2333
      %vm2471 = vweird.f32 %v2464
      %vm2472 = vmor %vm2470, %vm2471
      %v2473 = vsel %vm2472, %v2464, %v2469
      %v2474 = vmul.f32 %v2236, %v2343
      %v2475 = vmul.f32 %v2237, %v2353
      %v2476 = vmul.f32 %v2238, %v2363
      %v2477 = vmul.f32 %v2239, %v2373
      %v2478 = vmul.f32 %v2240, %v2383
      %v2479 = vmul.f32 %v2241, %v2393
      %v2480 = vmul.f32 %v2242, %v2403
      %v2481 = vmul.f32 %v2243, %v2413
      %v2482 = vmul.f32 %v2244, %v2423
      %v2483 = vmul.f32 %v2245, %v2433
      %v2484 = vmul.f32 %v2246, %v2443
      %v2485 = vmul.f32 %v2247, %v2453
      %v2486 = vmul.f32 %v2248, %v2463
      %v2487 = vmul.f32 %v2249, %v2473
      %v2489 = vperm.slane %v2178, 0
      %v2491 = vmul.f32 %v2474, %v2489
      %v2492 = vmul.f32 %v2475, %v2489
      %v2493 = vmul.f32 %v2476, %v2489
      %v2494 = vmul.f32 %v2477, %v2489
      %v2495 = vmul.f32 %v2478, %v2489
      %v2496 = vmul.f32 %v2479, %v2489
      %v2497 = vmul.f32 %v2480, %v2489
      %v2498 = vmul.f32 %v2481, %v2489
      %v2499 = vmul.f32 %v2482, %v2489
      %v2500 = vmul.f32 %v2483, %v2489
      %v2501 = vmul.f32 %v2484, %v2489
      %v2502 = vmul.f32 %v2485, %v2489
      %v2503 = vmul.f32 %v2486, %v2489
      %v2504 = vmul.f32 %v2487, %v2489
      %v2506 = vperm.slane %v2179, 0
      %v2508 = vadd.f32 %v2491, %v2506
      %v2509 = vadd.f32 %v2492, %v2506
      %v2510 = vadd.f32 %v2493, %v2506
      %v2511 = vadd.f32 %v2494, %v2506
      %v2512 = vadd.f32 %v2495, %v2506
      %v2513 = vadd.f32 %v2496, %v2506
      %v2514 = vadd.f32 %v2497, %v2506
      %v2515 = vadd.f32 %v2498, %v2506
      %v2516 = vadd.f32 %v2499, %v2506
      %v2517 = vadd.f32 %v2500, %v2506
      %v2518 = vadd.f32 %v2501, %v2506
      %v2519 = vadd.f32 %v2502, %v2506
      %v2520 = vadd.f32 %v2503, %v2506
      %v2521 = vadd.f32 %v2504, %v2506
      %v2522 = vld [vmem:[%s17] sm:$0xff]
      %v2523 = vld [vmem:[%s17 + $0x8] sm:$0xff]
      %v2524 = vld [vmem:[%s17 + $0x10] sm:$0xff]
      %v2525 = vld [vmem:[%s17 + $0x18] sm:$0xff]
      %v2526 = vld [vmem:[%s18] sm:$0x1]
      %v2528 = vperm.slane %v2526, 0
      %v2531 = vsel %vm732, %v2508, 0
      %v2534 = vsel %vm732, %v2509, 0
      %v2537 = vsel %vm732, %v2510, 0
      %v2540 = vsel %vm732, %v2511, 0
      %v2543 = vsel %vm732, %v2512, 0
      %v2546 = vsel %vm732, %v2513, 0
      %v2549 = vsel %vm732, %v2514, 0
      %v2552 = vsel %vm732, %v2515, 0
      %v2555 = vsel %vm732, %v2516, 0
      %v2558 = vsel %vm732, %v2517, 0
      %v2561 = vsel %vm732, %v2518, 0
      %v2564 = vsel %vm732, %v2519, 0
      %v2567 = vsel %vm732, %v2520, 0
      %v2570 = vsel %vm732, %v2521, 0
      %2572 = vmatpush.msra.mxu0 0.0
      %2573 = vmatpush.msra.mxu0 0.0
      %2574 = vmatpush.msra.mxu0 0.0
      %2575 = vmatpush.msra.mxu0 0.0
      %2576 = vmatpush.msra.mxu0 0.0
      %2577 = vmatpush.msra.mxu0 0.0
      %2578 = vmatpush.msra.mxu0 0.0
      %2579 = vmatpush.msra.mxu0 0.0
      %2580 = vmatpush.msra.mxu0 0.0
      %2581 = vmatpush.msra.mxu0 0.0
      %2582 = vmatpush.msra.mxu0 0.0
      %2583 = vmatpush.msra.mxu0 0.0
      %2584 = vmatpush.msra.mxu0 %v2525
      %2585 = vmatpush.msra.mxu0 %v2524
      %2586 = vmatpush.msra.mxu0 %v2523
      %2587 = vmatpush.msra.mxu0 %v2522
      %2588 = vmatmul.f32.gmra.mxu0 %v2531
      %v2589 = vpop.f32.mrf.mxu0
      %v2590 = vadd.f32 %v2528, %v2589
      %2591 = vmatmul.f32.gmra.mxu0 %v2534
      %v2592 = vpop.f32.mrf.mxu0
      %v2593 = vadd.f32 %v2528, %v2592
      %2594 = vmatmul.f32.gmra.mxu0 %v2537
      %v2595 = vpop.f32.mrf.mxu0
      %v2596 = vadd.f32 %v2528, %v2595
      %2597 = vmatmul.f32.gmra.mxu0 %v2540
      %v2598 = vpop.f32.mrf.mxu0
      %v2599 = vadd.f32 %v2528, %v2598
      %2600 = vmatmul.f32.gmra.mxu0 %v2543
      %v2601 = vpop.f32.mrf.mxu0
      %v2602 = vadd.f32 %v2528, %v2601
      %2603 = vmatmul.f32.gmra.mxu0 %v2546
      %v2604 = vpop.f32.mrf.mxu0
      %v2605 = vadd.f32 %v2528, %v2604
      %2606 = vmatmul.f32.gmra.mxu0 %v2549
      %v2607 = vpop.f32.mrf.mxu0
      %v2608 = vadd.f32 %v2528, %v2607
      %2609 = vmatmul.f32.gmra.mxu0 %v2552
      %v2610 = vpop.f32.mrf.mxu0
      %v2611 = vadd.f32 %v2528, %v2610
      %2612 = vmatmul.f32.gmra.mxu0 %v2555
      %v2613 = vpop.f32.mrf.mxu0
      %v2614 = vadd.f32 %v2528, %v2613
      %2615 = vmatmul.f32.gmra.mxu0 %v2558
      %v2616 = vpop.f32.mrf.mxu0
      %v2617 = vadd.f32 %v2528, %v2616
      %2618 = vmatmul.f32.gmra.mxu0 %v2561
      %v2619 = vpop.f32.mrf.mxu0
      %v2620 = vadd.f32 %v2528, %v2619
      %2621 = vmatmul.f32.gmra.mxu0 %v2564
      %v2622 = vpop.f32.mrf.mxu0
      %v2623 = vadd.f32 %v2528, %v2622
      %2624 = vmatmul.f32.gmra.mxu0 %v2567
      %v2625 = vpop.f32.mrf.mxu0
      %v2626 = vadd.f32 %v2528, %v2625
      %2627 = vmatmul.f32.gmra.mxu0 %v2570
      %v2628 = vpop.f32.mrf.mxu0
      %v2629 = vadd.f32 %v2528, %v2628
      %2630 = vdwg.mxu0
      %vm2631 = vcmask 15360
      %2632 = vst.msk [vmem:[%s602] sm:$0xff] %vm2631, %v2590
      %2633 = vst.msk [vmem:[%s602 + $0x8] sm:$0xff] %vm2631, %v2593
      %2634 = vst.msk [vmem:[%s602 + $0x10] sm:$0xff] %vm2631, %v2596
      %2635 = vst.msk [vmem:[%s602 + $0x18] sm:$0xff] %vm2631, %v2599
      %2636 = vst.msk [vmem:[%s602 + $0x20] sm:$0xff] %vm2631, %v2602
      %2637 = vst.msk [vmem:[%s602 + $0x28] sm:$0xff] %vm2631, %v2605
      %2638 = vst.msk [vmem:[%s602 + $0x30] sm:$0xff] %vm2631, %v2608
      %2639 = vst.msk [vmem:[%s602 + $0x38] sm:$0xff] %vm2631, %v2611
      %2640 = vst.msk [vmem:[%s602 + $0x40] sm:$0xff] %vm2631, %v2614
      %2641 = vst.msk [vmem:[%s602 + $0x48] sm:$0xff] %vm2631, %v2617
      %2642 = vst.msk [vmem:[%s602 + $0x50] sm:$0xff] %vm2631, %v2620
      %2643 = vst.msk [vmem:[%s602 + $0x58] sm:$0xff] %vm2631, %v2623
      %2644 = vst.msk [vmem:[%s602 + $0x60] sm:$0xff] %vm2631, %v2626
      %vm2645 = vcmask 12288
      %2646 = vst.msk [vmem:[%s602 + $0x68] sm:$0x1f] %vm2645, %v2629
      %p2647 = scmp.lt.s32.totalorder %s30, 1
      %s2648 = scalar_select %p2647, %s30, 1
      %s2649 = smul.addr %s2648, 14
      %s2650 = smul.addr %s2649, 8
      %s2651 = scalar_lea.vmem %s19, %s2650
      // Predicated region
      $region97: #{mlp_forward.3} parent=95 // pred_check
        %p2652 = pneg %p452
      $region98: #{mlp_forward.3} parent=95 // pred_check_branch
        %2654 = sbr.rel (%p2652) target = $region100
      $region99: #{mlp_forward.3} parent=95 // pred_region
        _
      $region100: #{mlp_forward.3} parent=95 // pred_fallthru
        _
    $region96: #{mlp_forward.3} parent=5 // pred_fallthru
      _
    %p2655 = scmp.le.s32.totalorder 2, %s25
    // Predicated region
    $region101: #{mlp_forward.3} parent=5 // pred_check
      %p2656 = pneg %p2655
    $region102: #{mlp_forward.3} parent=5 // pred_check_branch
      %2658 = sbr.rel (%p2656) target = $region104
    $region103: #{mlp_forward.3} parent=5 // pred_region
      %s2659 = ssub.s32 %s25, 2
      // Predicated region
      $region105: #{mlp_forward.3} parent=103 // pred_check
        %p2660 = pneg %p458
      $region106: #{mlp_forward.3} parent=103 // pred_check_branch
        %2662 = sbr.rel (%p2660) target = $region108
      $region107: #{mlp_forward.3} parent=103 // pred_region
        %p2663 = scmp.lt.s32.totalorder %s31, 1
        %s2664 = scalar_select %p2663, %s31, 1
        %s2665 = smul.addr %s2664, 14
        %s2666 = smul.addr %s2665, 8
        %s2667 = scalar_lea.vmem %s19, %s2666
      $region108: #{mlp_forward.3} parent=103 // pred_fallthru
        _
    $region104: #{mlp_forward.3} parent=5 // pred_fallthru
      _
  $region6: #{mlp_forward.3} parent=0 // loop_footer
    %s29 = sadd.s32 1, %s25
  $region7: #{mlp_forward.3} parent=0 // loop_footer_branch
    %24 = sbr.rel target = $region3
  $region8: #{mlp_forward.3} parent=0 // loop_exit
    _

</llo_original>
